<compile_context>
chip_gen: v7x
topology: tpu7x:2x2x1
jax: 0.10.0
libtpu: 0.0.40
codegen_flags: <defaults>
</compile_context>

<pallas_src>
import functools

import jax
import jax.numpy as jnp
from jax import lax
from jax.experimental import pallas as pl
from jax.experimental.pallas import tpu as pltpu

OCP = 128   # lane-padded conv output channels (20 -> 128, 50 -> 128)
HP = 512    # lane-padded fc1 hidden width    (500 -> 512)
NOP = 128   # lane-padded logits width        (21 -> 128)


# ---------------------------------------------------------------------------
# Pallas kernels
# ---------------------------------------------------------------------------
def conv_pool_kernel(p_ref, w_ref, bias_ref, o_ref, m_ref, *, pw):
    """Fused conv-as-matmul + bias + 2x2 max-pool for one (batch, out-row-pair).

    p_ref   : [1, 2, OW, CKK]  bf16  patches for conv output rows (2*ph, 2*ph+1)
    w_ref   : [CKK, OCP]       bf16  weights, rows ordered (c, ky, kx), cols 0-padded
    bias_ref: [1, OCP]         f32   bias (0-padded)
    o_ref   : [1, 1, PW, OCP]  bf16  pooled output row ph (lane-dense, 128 wide)
    m_ref   : [OW, OCP]        f32   VMEM scratch (row-pair max before column pool)
    """
    w = w_ref[...]
    top = jnp.dot(p_ref[0, 0, :, :], w, preferred_element_type=jnp.float32)
    bot = jnp.dot(p_ref[0, 1, :, :], w, preferred_element_type=jnp.float32)
    m_ref[...] = jnp.maximum(top, bot)                        # pool over the 2 rows
    pooled = jnp.maximum(m_ref[pl.ds(0, pw, stride=2), :],    # pool even/odd columns
                         m_ref[pl.ds(1, pw, stride=2), :])
    # bias is constant over the pooling window -> add after the max (fewer adds)
    o_ref[0, 0] = (pooled + bias_ref[...]).astype(o_ref.dtype)


def fc_fused_kernel(x_ref, w1_ref, b1_ref, w2_ref, b2_ref, o_ref):
    """fc1 + ReLU + out fused; the hidden activation never leaves VMEM."""
    h = jnp.dot(x_ref[...], w1_ref[...], preferred_element_type=jnp.float32) + b1_ref[...]
    h = jnp.maximum(h, 0.0).astype(w2_ref.dtype)
    o_ref[...] = (jnp.dot(h, w2_ref[...], preferred_element_type=jnp.float32)
                  + b2_ref[...])


# ---------------------------------------------------------------------------
# Wrappers
# ---------------------------------------------------------------------------
def conv_pool(patches, w, bias):
    """patches: [B, OH, OW, CKK] bf16 -> pooled conv output [B, OH/2, OW/2, OCP] bf16."""
    B, OH, OW, CKK = patches.shape
    assert OH % 2 == 0 and OW % 2 == 0
    ocp = w.shape[1]
    PH, PW = OH // 2, OW // 2
    return pl.pallas_call(
        functools.partial(conv_pool_kernel, pw=PW),
        out_shape=jax.ShapeDtypeStruct((B, PH, PW, ocp), jnp.bfloat16),
        grid_spec=pltpu.PrefetchScalarGridSpec(
            num_scalar_prefetch=0,
            grid=(B, PH),
            in_specs=[
                pl.BlockSpec((1, 2, OW, CKK), lambda b, ph: (b, ph, 0, 0)),
                pl.BlockSpec((CKK, ocp), lambda b, ph: (0, 0)),
                pl.BlockSpec((1, ocp), lambda b, ph: (0, 0)),
            ],
            out_specs=pl.BlockSpec((1, 1, PW, ocp), lambda b, ph: (b, ph, 0, 0)),
            scratch_shapes=[pltpu.VMEM((OW, ocp), jnp.float32)],
        ),
        compiler_params=pltpu.CompilerParams(
            dimension_semantics=("parallel", "parallel")),
    )(patches, w, bias)


def fc_fused(x, w1, b1, w2, b2):
    """x: [B, 3200] bf16 -> padded logits [B, 128] f32 (everything VMEM-resident)."""
    B = x.shape[0]
    vmem = pl.BlockSpec(memory_space=pltpu.MemorySpace.VMEM)
    return pl.pallas_call(
        fc_fused_kernel,
        out_shape=jax.ShapeDtypeStruct((B, w2.shape[1]), jnp.float32),
        in_specs=[vmem] * 5,
        out_specs=vmem,
    )(x, w1, b1, w2, b2)


# ---------------------------------------------------------------------------
# Parameters (PyTorch layout) + one-time prep into kernel-friendly layout
# ---------------------------------------------------------------------------
def init_params(key):
    ks = jax.random.split(key, 8)
    scale = 0.05
    return {
        "conv1_w": scale * jax.random.normal(ks[0], (20, 1, 5, 5), jnp.float32),
        "conv1_b": scale * jax.random.normal(ks[1], (20,), jnp.float32),
        "conv2_w": scale * jax.random.normal(ks[2], (50, 20, 5, 5), jnp.float32),
        "conv2_b": scale * jax.random.normal(ks[3], (50,), jnp.float32),
        "fc1_w": scale * jax.random.normal(ks[4], (500, 1250), jnp.float32),
        "fc1_b": scale * jax.random.normal(ks[5], (500,), jnp.float32),
        "out_w": scale * jax.random.normal(ks[6], (21, 500), jnp.float32),
        "out_b": scale * jax.random.normal(ks[7], (21,), jnp.float32),
    }


def prepare_params(params):
    """One-time: transpose / permute / zero-pad weights into the kernel layout."""
    K = 5

    # conv1: [20,1,5,5] -> [25, 128]   (rows ordered (c, ky, kx) = patch order)
    w1c = params["conv1_w"].reshape(20, 1 * K * K).T
    w1c = jnp.zeros((w1c.shape[0], OCP), jnp.float32).at[:, :20].set(w1c)
    b1c = jnp.zeros((1, OCP), jnp.float32).at[0, :20].set(params["conv1_b"])

    # conv2: [50,20,5,5] -> [500, 128]
    w2c = params["conv2_w"].reshape(50, 20 * K * K).T
    w2c = jnp.zeros((w2c.shape[0], OCP), jnp.float32).at[:, :50].set(w2c)
    b2c = jnp.zeros((1, OCP), jnp.float32).at[0, :50].set(params["conv2_b"])

    # fc1: PyTorch flatten order is (c, h, w); ours is (h, w, c_padded_to_128).
    w1f = params["fc1_w"].reshape(500, 50, 5, 5)          # [out, c, h, w]
    w1f = jnp.transpose(w1f, (2, 3, 1, 0))                # [h, w, c, out]
    w1f = jnp.zeros((5, 5, OCP, HP), jnp.float32).at[:, :, :50, :500].set(w1f)
    w1f = w1f.reshape(5 * 5 * OCP, HP)                    # [3200, 512]
    b1f = jnp.zeros((1, HP), jnp.float32).at[0, :500].set(params["fc1_b"])

    # out: [21, 500] -> [512, 128]
    w2f = jnp.zeros((HP, NOP), jnp.float32).at[:500, :21].set(params["out_w"].T)
    b2f = jnp.zeros((1, NOP), jnp.float32).at[0, :21].set(params["out_b"])

    return {
        "w1c": w1c.astype(jnp.bfloat16), "b1c": b1c,
        "w2c": w2c.astype(jnp.bfloat16), "b2c": b2c,
        "w1f": w1f.astype(jnp.bfloat16), "b1f": b1f,
        "w2f": w2f.astype(jnp.bfloat16), "b2f": b2f,
    }


# ---------------------------------------------------------------------------
# Forward pass
# ---------------------------------------------------------------------------
@jax.jit
def net_forward(x_nchw, prep):
    B = x_nchw.shape[0]
    x = jnp.transpose(x_nchw, (0, 2, 3, 1)).astype(jnp.bfloat16)       # [B,32,32,1]

    # conv1 + pool  (patches: one fused XLA gather; feature order = (c, ky, kx))
    p1 = lax.conv_general_dilated_patches(
        x, (5, 5), (1, 1), "VALID",
        dimension_numbers=("NHWC", "HWIO", "NHWC"))                    # [B,28,28,25]
    y1 = conv_pool(p1, prep["w1c"], prep["b1c"])                       # [B,14,14,128]

    # conv2 + pool (drop the zero-padded channels before patch extraction)
    p2 = lax.conv_general_dilated_patches(
        y1[..., :20], (5, 5), (1, 1), "VALID",
        dimension_numbers=("NHWC", "HWIO", "NHWC"))                    # [B,10,10,500]
    y2 = conv_pool(p2, prep["w2c"], prep["b2c"])                       # [B,5,5,128]

    # fc1 + ReLU + out, fused (flatten order (h,w,c) matched by prep["w1f"])
    h = y2.reshape(B, 5 * 5 * OCP)                                     # [B, 3200]
    logits = fc_fused(h, prep["w1f"], prep["b1f"], prep["w2f"], prep["b2f"])
    return logits[:, :21]


# ---------------------------------------------------------------------------
# Pure-JAX f32 reference (PyTorch semantics) for validation
# ---------------------------------------------------------------------------
def net_reference(x, params):
    dn = ("NCHW", "OIHW", "NCHW")
    y = lax.conv_general_dilated(x, params["conv1_w"], (1, 1), "VALID",
                                 dimension_numbers=dn)
    y = y + params["conv1_b"].reshape(1, -1, 1, 1)
    y = lax.reduce_window(y, -jnp.inf, lax.max, (1, 1, 2, 2), (1, 1, 2, 2), "VALID")
    y = lax.conv_general_dilated(y, params["conv2_w"], (1, 1), "VALID",
                                 dimension_numbers=dn)
    y = y + params["conv2_b"].reshape(1, -1, 1, 1)
    y = lax.reduce_window(y, -jnp.inf, lax.max, (1, 1, 2, 2), (1, 1, 2, 2), "VALID")
    y = y.reshape(y.shape[0], -1)                                      # (c, h, w) flatten
    y = jnp.maximum(y @ params["fc1_w"].T + params["fc1_b"], 0.0)
    return y @ params["out_w"].T + params["out_b"]


if __name__ == "__main__":
    key = jax.random.PRNGKey(0)
    k_x, k_p = jax.random.split(key)
    # Input spatial size 32 is what yields the module's 50*5*5 = 1250 flatten.
    x = jax.random.normal(k_x, (2, 1, 32, 32), jnp.float32)
    params = init_params(k_p)
    prep = prepare_params(params)

    out = jax.block_until_ready(net_forward(x, prep))
    assert out.shape == (2, 21), out.shape
    assert bool(jnp.all(jnp.isfinite(out)))

    ref = net_reference(x, params)
    max_err = float(jnp.max(jnp.abs(out - ref)))
    # bf16 MXU inputs with f32 accumulation -> relaxed tolerance vs f32 reference.
    assert max_err < 1e-1, f"mismatch vs reference: max abs err = {max_err}"
    print("KERNEL_OK")
</pallas_src>

<mosaic_0001>
module attributes {stable_mosaic.version = 11 : i64} {
  func.func @conv_pool_kernel(%arg0: i32, %arg1: i32, %arg2: memref<1x2x28x25xbf16, #tpu.memory_space<vmem>>, %arg3: memref<25x128xbf16, #tpu.memory_space<vmem>>, %arg4: memref<1x128xf32, #tpu.memory_space<vmem>>, %arg5: memref<1x1x14x128xbf16, #tpu.memory_space<vmem>>, %arg6: memref<28x128xf32, #tpu.memory_space<vmem>>) attributes {dimension_semantics = [#tpu.dimension_semantics<parallel>, #tpu.dimension_semantics<parallel>], iteration_bounds = array<i64: 2, 14>, scalar_prefetch = 0 : i64, scratch_operands = 1 : i64, tpu.core_type = #tpu.core_type<tc>, window_params = [{transform_indices = @transform_0, window_bounds = array<i64: 1, 2, 28, 25>}, {pipeline_mode = #tpu.pipeline_mode<synchronous>, transform_indices = @transform_1, window_bounds = array<i64: 25, 128>}, {pipeline_mode = #tpu.pipeline_mode<synchronous>, transform_indices = @transform_2, window_bounds = array<i64: 1, 128>}, {transform_indices = @transform_3, window_bounds = array<i64: 1, 1, 14, 128>}]} {
    %c0 = arith.constant 0 : index
    %c0_0 = arith.constant 0 : index
    %0 = vector.load %arg3[%c0, %c0_0] : memref<25x128xbf16, #tpu.memory_space<vmem>>, vector<25x128xbf16>
    %c0_1 = arith.constant 0 : index
    %c0_2 = arith.constant 0 : index
    %c0_3 = arith.constant 0 : index
    %c0_4 = arith.constant 0 : index
    %1 = vector.load %arg2[%c0_1, %c0_2, %c0_3, %c0_4] : memref<1x2x28x25xbf16, #tpu.memory_space<vmem>>, vector<1x1x28x25xbf16>
    %2 = vector.shape_cast %1 : vector<1x1x28x25xbf16> to vector<28x25xbf16>
    %cst = arith.constant dense<0.000000e+00> : vector<28x128xf32>
    %3 = tpu.matmul %2, %0, %cst {dimension_numbers = #tpu.dot_dimension_numbers<[1], [0], [0], [1], [0, 0, 1, 1], [], []>} : vector<28x25xbf16>, vector<25x128xbf16>, vector<28x128xf32> -> vector<28x128xf32>
    %c0_5 = arith.constant 0 : index
    %c1 = arith.constant 1 : index
    %c0_6 = arith.constant 0 : index
    %c0_7 = arith.constant 0 : index
    %4 = vector.load %arg2[%c0_5, %c1, %c0_6, %c0_7] : memref<1x2x28x25xbf16, #tpu.memory_space<vmem>>, vector<1x1x28x25xbf16>
    %5 = vector.shape_cast %4 : vector<1x1x28x25xbf16> to vector<28x25xbf16>
    %cst_8 = arith.constant dense<0.000000e+00> : vector<28x128xf32>
    %6 = tpu.matmul %5, %0, %cst_8 {dimension_numbers = #tpu.dot_dimension_numbers<[1], [0], [0], [1], [0, 0, 1, 1], [], []>} : vector<28x25xbf16>, vector<25x128xbf16>, vector<28x128xf32> -> vector<28x128xf32>
    %7 = arith.maximumf %3, %6 : vector<28x128xf32>
    %c0_9 = arith.constant 0 : index
    %c0_10 = arith.constant 0 : index
    %8 = vector.load %arg6[%c0_9, %c0_10] : memref<28x128xf32, #tpu.memory_space<vmem>>, vector<28x128xf32>
    tpu.vector_store %arg6[%c0_9, %c0_10], %7 {strides = array<i32>} : memref<28x128xf32, #tpu.memory_space<vmem>>, vector<28x128xf32>,
    %c0_11 = arith.constant 0 : index
    %c0_12 = arith.constant 0 : index
    %9 = tpu.strided_load %arg6[%c0_11, %c0_12] {strides = array<i32: 2, 1>} : memref<28x128xf32, #tpu.memory_space<vmem>>, vector<14x128xf32>
    %c1_13 = arith.constant 1 : index
    %c0_14 = arith.constant 0 : index
    %10 = tpu.strided_load %arg6[%c1_13, %c0_14] {strides = array<i32: 2, 1>} : memref<28x128xf32, #tpu.memory_space<vmem>>, vector<14x128xf32>
    %11 = arith.maximumf %9, %10 : vector<14x128xf32>
    %c0_15 = arith.constant 0 : index
    %c0_16 = arith.constant 0 : index
    %12 = vector.load %arg4[%c0_15, %c0_16] : memref<1x128xf32, #tpu.memory_space<vmem>>, vector<1x128xf32>
    %13 = vector.broadcast %12 : vector<1x128xf32> to vector<14x128xf32>
    %14 = arith.addf %11, %13 : vector<14x128xf32>
    %15 = arith.truncf %14 : vector<14x128xf32> to vector<14x128xbf16>
    %c0_17 = arith.constant 0 : index
    %c0_18 = arith.constant 0 : index
    %c0_19 = arith.constant 0 : index
    %c0_20 = arith.constant 0 : index
    %16 = vector.load %arg5[%c0_17, %c0_18, %c0_19, %c0_20] : memref<1x1x14x128xbf16, #tpu.memory_space<vmem>>, vector<1x1x14x128xbf16>
    %17 = vector.shape_cast %16 : vector<1x1x14x128xbf16> to vector<14x128xbf16>
    %18 = vector.shape_cast %15 : vector<14x128xbf16> to vector<1x1x14x128xbf16>
    tpu.vector_store %arg5[%c0_17, %c0_18, %c0_19, %c0_20], %18 {strides = array<i32>} : memref<1x1x14x128xbf16, #tpu.memory_space<vmem>>, vector<1x1x14x128xbf16>,
    return
  }
  func.func @transform_0(%arg0: i32, %arg1: i32) -> (i32, i32, i32, i32) {
    %c0_i32 = arith.constant 0 : i32
    %c0_i32_0 = arith.constant 0 : i32
    %c0_i32_1 = arith.constant 0 : i32
    return %arg0, %arg1, %c0_i32, %c0_i32_0 : i32, i32, i32, i32
  }
  func.func @transform_1(%arg0: i32, %arg1: i32) -> (i32, i32) {
    %c0_i32 = arith.constant 0 : i32
    %c0_i32_0 = arith.constant 0 : i32
    %c0_i32_1 = arith.constant 0 : i32
    return %c0_i32, %c0_i32_0 : i32, i32
  }
  func.func @transform_2(%arg0: i32, %arg1: i32) -> (i32, i32) {
    %c0_i32 = arith.constant 0 : i32
    %c0_i32_0 = arith.constant 0 : i32
    %c0_i32_1 = arith.constant 0 : i32
    return %c0_i32, %c0_i32_0 : i32, i32
  }
  func.func @transform_3(%arg0: i32, %arg1: i32) -> (i32, i32, i32, i32) {
    %c0_i32 = arith.constant 0 : i32
    %c0_i32_0 = arith.constant 0 : i32
    %c0_i32_1 = arith.constant 0 : i32
    return %arg0, %arg1, %c0_i32, %c0_i32_0 : i32, i32, i32, i32
  }
}

module attributes {stable_mosaic.version = 11 : i64} {
  func.func @conv_pool_kernel(%arg0: i32, %arg1: i32, %arg2: memref<1x2x10x500xbf16, #tpu.memory_space<vmem>>, %arg3: memref<500x128xbf16, #tpu.memory_space<vmem>>, %arg4: memref<1x128xf32, #tpu.memory_space<vmem>>, %arg5: memref<1x1x5x128xbf16, #tpu.memory_space<vmem>>, %arg6: memref<10x128xf32, #tpu.memory_space<vmem>>) attributes {dimension_semantics = [#tpu.dimension_semantics<parallel>, #tpu.dimension_semantics<parallel>], iteration_bounds = array<i64: 2, 5>, scalar_prefetch = 0 : i64, scratch_operands = 1 : i64, tpu.core_type = #tpu.core_type<tc>, window_params = [{transform_indices = @transform_0, window_bounds = array<i64: 1, 2, 10, 500>}, {pipeline_mode = #tpu.pipeline_mode<synchronous>, transform_indices = @transform_1, window_bounds = array<i64: 500, 128>}, {pipeline_mode = #tpu.pipeline_mode<synchronous>, transform_indices = @transform_2, window_bounds = array<i64: 1, 128>}, {transform_indices = @transform_3, window_bounds = array<i64: 1, 1, 5, 128>}]} {
    %c0 = arith.constant 0 : index
    %c0_0 = arith.constant 0 : index
    %0 = vector.load %arg3[%c0, %c0_0] : memref<500x128xbf16, #tpu.memory_space<vmem>>, vector<500x128xbf16>
    %c0_1 = arith.constant 0 : index
    %c0_2 = arith.constant 0 : index
    %c0_3 = arith.constant 0 : index
    %c0_4 = arith.constant 0 : index
    %1 = vector.load %arg2[%c0_1, %c0_2, %c0_3, %c0_4] : memref<1x2x10x500xbf16, #tpu.memory_space<vmem>>, vector<1x1x10x500xbf16>
    %2 = vector.shape_cast %1 : vector<1x1x10x500xbf16> to vector<10x500xbf16>
    %cst = arith.constant dense<0.000000e+00> : vector<10x128xf32>
    %3 = tpu.matmul %2, %0, %cst {dimension_numbers = #tpu.dot_dimension_numbers<[1], [0], [0], [1], [0, 0, 1, 1], [], []>} : vector<10x500xbf16>, vector<500x128xbf16>, vector<10x128xf32> -> vector<10x128xf32>
    %c0_5 = arith.constant 0 : index
    %c1 = arith.constant 1 : index
    %c0_6 = arith.constant 0 : index
    %c0_7 = arith.constant 0 : index
    %4 = vector.load %arg2[%c0_5, %c1, %c0_6, %c0_7] : memref<1x2x10x500xbf16, #tpu.memory_space<vmem>>, vector<1x1x10x500xbf16>
    %5 = vector.shape_cast %4 : vector<1x1x10x500xbf16> to vector<10x500xbf16>
    %cst_8 = arith.constant dense<0.000000e+00> : vector<10x128xf32>
    %6 = tpu.matmul %5, %0, %cst_8 {dimension_numbers = #tpu.dot_dimension_numbers<[1], [0], [0], [1], [0, 0, 1, 1], [], []>} : vector<10x500xbf16>, vector<500x128xbf16>, vector<10x128xf32> -> vector<10x128xf32>
    %7 = arith.maximumf %3, %6 : vector<10x128xf32>
    %c0_9 = arith.constant 0 : index
    %c0_10 = arith.constant 0 : index
    %8 = vector.load %arg6[%c0_9, %c0_10] : memref<10x128xf32, #tpu.memory_space<vmem>>, vector<10x128xf32>
    tpu.vector_store %arg6[%c0_9, %c0_10], %7 {strides = array<i32>} : memref<10x128xf32, #tpu.memory_space<vmem>>, vector<10x128xf32>,
    %c0_11 = arith.constant 0 : index
    %c0_12 = arith.constant 0 : index
    %9 = tpu.strided_load %arg6[%c0_11, %c0_12] {strides = array<i32: 2, 1>} : memref<10x128xf32, #tpu.memory_space<vmem>>, vector<5x128xf32>
    %c1_13 = arith.constant 1 : index
    %c0_14 = arith.constant 0 : index
    %10 = tpu.strided_load %arg6[%c1_13, %c0_14] {strides = array<i32: 2, 1>} : memref<10x128xf32, #tpu.memory_space<vmem>>, vector<5x128xf32>
    %11 = arith.maximumf %9, %10 : vector<5x128xf32>
    %c0_15 = arith.constant 0 : index
    %c0_16 = arith.constant 0 : index
    %12 = vector.load %arg4[%c0_15, %c0_16] : memref<1x128xf32, #tpu.memory_space<vmem>>, vector<1x128xf32>
    %13 = vector.broadcast %12 : vector<1x128xf32> to vector<5x128xf32>
    %14 = arith.addf %11, %13 : vector<5x128xf32>
    %15 = arith.truncf %14 : vector<5x128xf32> to vector<5x128xbf16>
    %c0_17 = arith.constant 0 : index
    %c0_18 = arith.constant 0 : index
    %c0_19 = arith.constant 0 : index
    %c0_20 = arith.constant 0 : index
    %16 = vector.load %arg5[%c0_17, %c0_18, %c0_19, %c0_20] : memref<1x1x5x128xbf16, #tpu.memory_space<vmem>>, vector<1x1x5x128xbf16>
    %17 = vector.shape_cast %16 : vector<1x1x5x128xbf16> to vector<5x128xbf16>
    %18 = vector.shape_cast %15 : vector<5x128xbf16> to vector<1x1x5x128xbf16>
    tpu.vector_store %arg5[%c0_17, %c0_18, %c0_19, %c0_20], %18 {strides = array<i32>} : memref<1x1x5x128xbf16, #tpu.memory_space<vmem>>, vector<1x1x5x128xbf16>,
    return
  }
  func.func @transform_0(%arg0: i32, %arg1: i32) -> (i32, i32, i32, i32) {
    %c0_i32 = arith.constant 0 : i32
    %c0_i32_0 = arith.constant 0 : i32
    %c0_i32_1 = arith.constant 0 : i32
    return %arg0, %arg1, %c0_i32, %c0_i32_0 : i32, i32, i32, i32
  }
  func.func @transform_1(%arg0: i32, %arg1: i32) -> (i32, i32) {
    %c0_i32 = arith.constant 0 : i32
    %c0_i32_0 = arith.constant 0 : i32
    %c0_i32_1 = arith.constant 0 : i32
    return %c0_i32, %c0_i32_0 : i32, i32
  }
  func.func @transform_2(%arg0: i32, %arg1: i32) -> (i32, i32) {
    %c0_i32 = arith.constant 0 : i32
    %c0_i32_0 = arith.constant 0 : i32
    %c0_i32_1 = arith.constant 0 : i32
    return %c0_i32, %c0_i32_0 : i32, i32
  }
  func.func @transform_3(%arg0: i32, %arg1: i32) -> (i32, i32, i32, i32) {
    %c0_i32 = arith.constant 0 : i32
    %c0_i32_0 = arith.constant 0 : i32
    %c0_i32_1 = arith.constant 0 : i32
    return %arg0, %arg1, %c0_i32, %c0_i32_0 : i32, i32, i32, i32
  }
}

module attributes {stable_mosaic.version = 11 : i64} {
  func.func @fc_fused_kernel(%arg0: memref<2x3200xbf16, #tpu.memory_space<vmem>>, %arg1: memref<3200x512xbf16, #tpu.memory_space<vmem>>, %arg2: memref<1x512xf32, #tpu.memory_space<vmem>>, %arg3: memref<512x128xbf16, #tpu.memory_space<vmem>>, %arg4: memref<1x128xf32, #tpu.memory_space<vmem>>, %arg5: memref<2x128xf32, #tpu.memory_space<vmem>>) attributes {dimension_semantics = [], scalar_prefetch = 0 : i64, scratch_operands = 0 : i64, tpu.core_type = #tpu.core_type<tc>} {
    %c0 = arith.constant 0 : index
    %c0_0 = arith.constant 0 : index
    %0 = vector.load %arg0[%c0, %c0_0] : memref<2x3200xbf16, #tpu.memory_space<vmem>>, vector<2x3200xbf16>
    %c0_1 = arith.constant 0 : index
    %c0_2 = arith.constant 0 : index
    %1 = vector.load %arg1[%c0_1, %c0_2] : memref<3200x512xbf16, #tpu.memory_space<vmem>>, vector<3200x512xbf16>
    %cst = arith.constant dense<0.000000e+00> : vector<2x512xf32>
    %2 = tpu.matmul %0, %1, %cst {dimension_numbers = #tpu.dot_dimension_numbers<[1], [0], [0], [1], [0, 0, 1, 1], [], []>} : vector<2x3200xbf16>, vector<3200x512xbf16>, vector<2x512xf32> -> vector<2x512xf32>
    %c0_3 = arith.constant 0 : index
    %c0_4 = arith.constant 0 : index
    %3 = vector.load %arg2[%c0_3, %c0_4] : memref<1x512xf32, #tpu.memory_space<vmem>>, vector<1x512xf32>
    %4 = vector.broadcast %3 : vector<1x512xf32> to vector<2x512xf32>
    %5 = arith.addf %2, %4 : vector<2x512xf32>
    %cst_5 = arith.constant 0.000000e+00 : f32
    %6 = vector.broadcast %cst_5 : f32 to vector<2x512xf32>
    %7 = arith.maximumf %5, %6 : vector<2x512xf32>
    %8 = arith.truncf %7 : vector<2x512xf32> to vector<2x512xbf16>
    %c0_6 = arith.constant 0 : index
    %c0_7 = arith.constant 0 : index
    %9 = vector.load %arg3[%c0_6, %c0_7] : memref<512x128xbf16, #tpu.memory_space<vmem>>, vector<512x128xbf16>
    %cst_8 = arith.constant dense<0.000000e+00> : vector<2x128xf32>
    %10 = tpu.matmul %8, %9, %cst_8 {dimension_numbers = #tpu.dot_dimension_numbers<[1], [0], [0], [1], [0, 0, 1, 1], [], []>} : vector<2x512xbf16>, vector<512x128xbf16>, vector<2x128xf32> -> vector<2x128xf32>
    %c0_9 = arith.constant 0 : index
    %c0_10 = arith.constant 0 : index
    %11 = vector.load %arg4[%c0_9, %c0_10] : memref<1x128xf32, #tpu.memory_space<vmem>>, vector<1x128xf32>
    %12 = vector.broadcast %11 : vector<1x128xf32> to vector<2x128xf32>
    %13 = arith.addf %10, %12 : vector<2x128xf32>
    %c0_11 = arith.constant 0 : index
    %c0_12 = arith.constant 0 : index
    %14 = vector.load %arg5[%c0_11, %c0_12] : memref<2x128xf32, #tpu.memory_space<vmem>>, vector<2x128xf32>
    tpu.vector_store %arg5[%c0_11, %c0_12], %13 {strides = array<i32>} : memref<2x128xf32, #tpu.memory_space<vmem>>, vector<2x128xf32>,
    return
  }
}

</mosaic_0001>

<llo_original>
// kernel: net_forward.3
$region0: #{net_forward.3}
  #allocation0 [shape = 'u32[]', space=smem, size = 0x4, offset = 0x4, fixed_abs, tag = 'smem constant byte address 0x4 - core index']
  #allocation1 [shape = 'u32[144,128]{1,0:T(1,128)}', space=vmem, size = 0x12000, scoped, tag = 'internal scratch']
  #allocation2 [shape = 'f32[28,128]{1,0:T(8,128)}', space=vmem, size = 0x4000, scoped, tag = 'scratch operand']
  %s0 = inlined_call_operand.vmem [shape: bf16[2,28,28,25], index: 0, kind: input, shape index: {}]
  %s1 = inlined_call_operand.vmem [shape: bf16[25,128], index: 1, kind: input, shape index: {}]
  %s2 = inlined_call_operand.vmem [shape: f32[1,128], index: 2, kind: input, shape index: {}]
  %s3 = inlined_call_operand.vmem [shape: bf16[2,14,14,128], index: 3, kind: output, shape index: {}]
  %s4 = sld [smem:[#allocation0]]
  $region45: #{net_forward.3} parent=0
    _
  %s6 = ssub.s32 1, %s4
  %s7 = scalar_select 0, %s6, %s4
  loop: start=0, step=1, limit=30
  $region2: #{net_forward.3} parent=0 // loop_pre_header
    _
  $region3: #{net_forward.3} parent=0 // loop_header
    %s9 = sphi 0, %s13
    %p10 = scmp.ge.s32.totalorder %s9, 30
    %s16 = sphi 0, %s28
    %s17 = sphi 0, %s24
    %s18 = sphi 0, %s16
    %s19 = sphi 0, %s17
    %s20 = sphi 0, %s18
    %s21 = sphi 0, %s19
    %s33 = sphi 0, %s35
    %s36 = sphi 0, %s33
    %s37 = sphi 0, %s36
    %s53 = sphi 0, %s37
    %s57 = sphi 0, %s57
    %s59 = sphi 0, %s57
    %s60 = sphi 0, %s59
    %s74 = sphi 0, %s60
    %s78 = sphi 0, %s78
    %s80 = sphi 0, %s78
    %s81 = sphi 0, %s80
    %s95 = sphi 0, %s81
    %s103 = sphi 0, %s105
    %s106 = sphi 0, %s103
    %s107 = sphi 0, %s106
    %s123 = sphi 0, %s107
  $region4: #{net_forward.3} parent=0 // loop_header_branch
    %12 = sbr.rel (%p10) target = $region8
  $region5: #{net_forward.3} parent=0 // loop_body
    %s14 = ssub.s32 %s9, 1
    %s15 = ssub.s32 %s9, 2
    %s22 = sadd.s32 1, %s17
    %p23 = scmp.ge.s32.totalorder %s22, 14
    %s24 = scalar_select %p23, 0, %s22
    %s25 = sadd.s32 1, %s16
    %s26 = scalar_select %p23, %s25, %s16
    %p27 = scmp.ge.s32.totalorder %s26, 2
    %s28 = scalar_select %p27, 0, %s26
    %s29 = ssub.s32 %s16, %s28
    %s30 = ssub.s32 %s17, %s24
    %s31 = sor.u32 %s29, %s30
    %p32 = scmp.eq.s32.totalorder %s31, 0
    %s34 = sadd.s32 %s33, 1
    %s35 = scalar_select %p32, %s33, %s34
    %p38 = pneg %p32
    %p39 = scmp.eq.s32.totalorder %s9, 27
    %p40 = por %p38, %p39
    %p41 = scmp.ne.s32.totalorder %s33, %s36
    %p42 = scmp.eq.s32.totalorder %s9, 0
    %p43 = por %p41, %p42
    %p44 = scmp.ne.s32.totalorder %s33, %s36
    %p45 = scmp.eq.s32.totalorder %s14, 27
    %p46 = por %p44, %p45
    %p47 = scmp.ne.s32.totalorder %s36, %s37
    %p48 = scmp.eq.s32.totalorder %s14, 0
    %p49 = por %p47, %p48
    %p50 = scmp.ne.s32.totalorder %s36, %s37
    %p51 = scmp.eq.s32.totalorder %s15, 27
    %p52 = por %p50, %p51
    %p54 = scmp.ne.s32.totalorder %s37, %s53
    %p55 = scmp.eq.s32.totalorder %s15, 0
    %p56 = por %p54, %p55
    %s58 = sadd.s32 %s57, 1
    %p61 = scmp.eq.s32.totalorder %s9, 27
    %p62 = scmp.ne.s32.totalorder %s57, %s59
    %p63 = scmp.eq.s32.totalorder %s9, 0
    %p64 = por %p62, %p63
    %p65 = scmp.ne.s32.totalorder %s57, %s59
    %p66 = scmp.eq.s32.totalorder %s14, 27
    %p67 = por %p65, %p66
    %p68 = scmp.ne.s32.totalorder %s59, %s60
    %p69 = scmp.eq.s32.totalorder %s14, 0
    %p70 = por %p68, %p69
    %p71 = scmp.ne.s32.totalorder %s59, %s60
    %p72 = scmp.eq.s32.totalorder %s15, 27
    %p73 = por %p71, %p72
    %p75 = scmp.ne.s32.totalorder %s60, %s74
    %p76 = scmp.eq.s32.totalorder %s15, 0
    %p77 = por %p75, %p76
    %s79 = sadd.s32 %s78, 1
    %p82 = scmp.eq.s32.totalorder %s9, 27
    %p83 = scmp.ne.s32.totalorder %s78, %s80
    %p84 = scmp.eq.s32.totalorder %s9, 0
    %p85 = por %p83, %p84
    %p86 = scmp.ne.s32.totalorder %s78, %s80
    %p87 = scmp.eq.s32.totalorder %s14, 27
    %p88 = por %p86, %p87
    %p89 = scmp.ne.s32.totalorder %s80, %s81
    %p90 = scmp.eq.s32.totalorder %s14, 0
    %p91 = por %p89, %p90
    %p92 = scmp.ne.s32.totalorder %s80, %s81
    %p93 = scmp.eq.s32.totalorder %s15, 27
    %p94 = por %p92, %p93
    %p96 = scmp.ne.s32.totalorder %s81, %s95
    %p97 = scmp.eq.s32.totalorder %s15, 0
    %p98 = por %p96, %p97
    %s99 = ssub.s32 %s16, %s28
    %s100 = ssub.s32 %s17, %s24
    %s101 = sor.u32 %s99, %s100
    %p102 = scmp.eq.s32.totalorder %s101, 0
    %s104 = sadd.s32 %s103, 1
    %s105 = scalar_select %p102, %s103, %s104
    %p108 = pneg %p102
    %p109 = scmp.eq.s32.totalorder %s9, 27
    %p110 = por %p108, %p109
    %p111 = scmp.ne.s32.totalorder %s103, %s106
    %p112 = scmp.eq.s32.totalorder %s9, 0
    %p113 = por %p111, %p112
    %p114 = scmp.ne.s32.totalorder %s103, %s106
    %p115 = scmp.eq.s32.totalorder %s14, 27
    %p116 = por %p114, %p115
    %p117 = scmp.ne.s32.totalorder %s106, %s107
    %p118 = scmp.eq.s32.totalorder %s14, 0
    %p119 = por %p117, %p118
    %p120 = scmp.ne.s32.totalorder %s106, %s107
    %p121 = scmp.eq.s32.totalorder %s15, 27
    %p122 = por %p120, %p121
    %p124 = scmp.ne.s32.totalorder %s107, %s123
    %p125 = scmp.eq.s32.totalorder %s15, 0
    %p126 = por %p124, %p125
    %p127 = scmp.le.s32.totalorder 1, %s9
    %p128 = scmp.lt.s32.totalorder %s9, 29
    %p129 = pnand %p127, %p128
    %p130 = pneg %p129
    // Predicated region
    $region9: #{net_forward.3} parent=5 // pred_check
      _
    $region10: #{net_forward.3} parent=5 // pred_check_branch
      %132 = sbr.rel (%p129) target = $region12
    $region11: #{net_forward.3} parent=5 // pred_region
      %s133 = ssub.s32 %s9, 1
      // Predicated region
      $region13: #{net_forward.3} parent=11 // pred_check
        %p134 = pneg %p70
      $region14: #{net_forward.3} parent=11 // pred_check_branch
        %136 = sbr.rel (%p134) target = $region16
      $region15: #{net_forward.3} parent=11 // pred_region
        _
      $region16: #{net_forward.3} parent=11 // pred_fallthru
        _
      // Predicated region
      $region17: #{net_forward.3} parent=11 // pred_check
        %p137 = pneg %p91
      $region18: #{net_forward.3} parent=11 // pred_check_branch
        %139 = sbr.rel (%p137) target = $region20
      $region19: #{net_forward.3} parent=11 // pred_region
        _
      $region20: #{net_forward.3} parent=11 // pred_fallthru
        _
    $region12: #{net_forward.3} parent=5 // pred_fallthru
      _
    %p140 = scmp.lt.s32.totalorder %s9, 28
    // Predicated region
    $region21: #{net_forward.3} parent=5 // pred_check
      %p141 = pneg %p140
    $region22: #{net_forward.3} parent=5 // pred_check_branch
      %143 = sbr.rel (%p141) target = $region24
    $region23: #{net_forward.3} parent=5 // pred_region
      // Predicated region
      $region25: #{net_forward.3} parent=23 // pred_check
        %p144 = pneg %p43
      $region26: #{net_forward.3} parent=23 // pred_check_branch
        %146 = sbr.rel (%p144) target = $region28
      $region27: #{net_forward.3} parent=23 // pred_region
        %s147 = smul.u32 2, %s17
        %p148 = scmp.lt.s32.totalorder %s16, 1
        %s149 = scalar_select %p148, %s16, 1
        %p150 = scmp.lt.s32.totalorder %s147, 27
        %s151 = scalar_select %p150, %s147, 27
        %s152 = smul.addr %s151, 4
        %s153 = smul.addr %s149, 112
        %s154 = sadd.s32 %s152, %s153
        %s155 = smul.addr %s154, 4
        %s156 = scalar_lea.vmem %s0, %s155
        %s157 = smul.u32 2, %s17
      $region28: #{net_forward.3} parent=23 // pred_fallthru
        _
    $region24: #{net_forward.3} parent=5 // pred_fallthru
      _
    %p158 = scmp.le.s32.totalorder 1, %s9
    %p159 = scmp.lt.s32.totalorder %s9, 29
    %p160 = pnand %p158, %p159
    %p161 = pneg %p160
    // Predicated region
    $region29: #{net_forward.3} parent=5 // pred_check
      _
    $region30: #{net_forward.3} parent=5 // pred_check_branch
      %163 = sbr.rel (%p160) target = $region32
    $region31: #{net_forward.3} parent=5 // pred_region
      %s164 = ssub.s32 %s9, 1
      %s165 = smul.u32 2, %s19
      %p166 = scmp.lt.s32.totalorder %s18, 1
      %s167 = scalar_select %p166, %s18, 1
      %p168 = scmp.lt.s32.totalorder %s165, 27
      %s169 = scalar_select %p168, %s165, 27
      %s170 = smul.addr %s169, 4
      %s171 = smul.addr %s167, 112
      %s172 = sadd.s32 %s170, %s171
      %s173 = smul.addr %s172, 4
      %s174 = scalar_lea.vmem %s0, %s173
      %p175 = pneg %p49
      %p176 = pneg %p46
      %p177 = pneg %p70
      %p178 = pneg %p67
      %p179 = pneg %p91
      %p180 = pneg %p88
      %p181 = pneg %p119
      %p182 = pneg %p116
      %p183 = scmp.lt.s32.totalorder %s18, 1
      %s184 = scalar_select %p183, %s18, 1
      %p185 = scmp.lt.s32.totalorder %s19, 13
      %s186 = scalar_select %p185, %s19, 13
      %s187 = smul.addr %s186, 2
      %s188 = smul.addr %s184, 28
      %s189 = sadd.s32 %s187, %s188
      %s190 = smul.addr %s189, 4
      %s191 = scalar_lea.vmem %s3, %s190
      %s192 = smul.u32 2, %s19
      %p193 = scmp.lt.s32.totalorder %s18, 1
      %s194 = scalar_select %p193, %s18, 1
      %p195 = scmp.lt.s32.totalorder %s192, 27
      %s196 = scalar_select %p195, %s192, 27
      %s197 = smul.addr %s196, 4
      %s198 = smul.addr %s194, 112
      %s199 = sadd.s32 %s197, %s198
      %s200 = smul.addr %s199, 4
      %s201 = scalar_lea.vmem %s0, %s200
      %s202 = smul.u32 2, %s19
      %p203 = scmp.lt.s32.totalorder %s18, 1
      %s204 = scalar_select %p203, %s18, 1
      %p205 = scmp.lt.s32.totalorder %s19, 13
      %s206 = scalar_select %p205, %s19, 13
      %s207 = smul.addr %s206, 2
      %s208 = smul.addr %s204, 28
      %s209 = sadd.s32 %s207, %s208
      %s210 = smul.addr %s209, 4
      %s211 = scalar_lea.vmem %s3, %s210
      %v213 = vld [vmem:[%s1] sm:$0xf]
      %v214 = vld [vmem:[%s1 + $0x4] sm:$0xf]
      %v215 = vld [vmem:[%s1 + $0x8] sm:$0xf]
      %v216 = vld [vmem:[%s1 + $0xc] sm:$0x1]
      %v217 = vld [vmem:[%s201] sm:$0xf]
      %v218 = vld [vmem:[%s201 + $0x4] sm:$0xf]
      %v219 = vld [vmem:[%s201 + $0x8] sm:$0xf]
      %v220 = vld [vmem:[%s201 + $0xc] sm:$0x3]
      %v225 = vunpack.c.l.b16 %v217
      %v226 = vunpack.c.l.b16 %v218
      %v227 = vunpack.c.l.b16 %v219
      %v228 = vunpack.c.l.b16 %v220
      %v229 = vpack.c.b16 %v226, %v225
      %v230 = vpack.c.b16 %v228, %v227
      %v235 = vunpack.c.l.b16 %v213
      %v236 = vunpack.c.l.b16 %v214
      %v237 = vunpack.c.l.b16 %v215
      %v238 = vunpack.c.l.b16 %v216
      %v239 = vpack.c.b16 %v236, %v235
      %v240 = vpack.c.b16 %v238, %v237
      %vm242 = vcmask 203776
      %v244 = vsel %vm242, %v229, 0
      %v247 = vsel %vm242, %v230, 0
      %vm249 = vcmask 1043456
      %vm250 = vcmask 1044480
      %v251 = vsel %vm249, 4294967295, 65535
      %v252 = vsel %vm250, %v251, 0
      %v254 = vand.u32 %v240, %v252
      %256 = vmatprep.subr.bf16.mxu0 0
      %257 = vmatpush1.bf16.msra.mxu0 %v239
      %258 = vmatprep.subr.bf16.mxu0 0
      %259 = vmatpush1.bf16.msra.mxu0 %v254
      %260 = vmatprep.subr.bf16.mxu0 0
      %261 = vmatpush1.bf16.msra.mxu0 0
      %262 = vmatprep.subr.bf16.mxu0 0
      %263 = vmatpush1.bf16.msra.mxu0 0
      %264 = vmatprep.subr.bf16.mxu0 0
      %265 = vmatpush1.bf16.msra.mxu0 0
      %266 = vmatprep.subr.bf16.mxu0 0
      %267 = vmatpush1.bf16.msra.mxu0 0
      %268 = vmatprep.subr.bf16.mxu0 0
      %269 = vmatpush1.bf16.msra.mxu0 0
      %270 = vmatprep.subr.bf16.mxu0 0
      %271 = vmatpush1.bf16.msra.mxu0 0
      %272 = vmatprep.subr.bf16.mxu0 0
      %273 = vmatpush1.bf16.msra.mxu0 0
      %274 = vmatprep.subr.bf16.mxu0 0
      %275 = vmatpush1.bf16.msra.mxu0 0
      %276 = vmatprep.subr.bf16.mxu0 0
      %277 = vmatpush1.bf16.msra.mxu0 0
      %278 = vmatprep.subr.bf16.mxu0 0
      %279 = vmatpush1.bf16.msra.mxu0 0
      %280 = vmatprep.subr.bf16.mxu0 0
      %281 = vmatpush1.bf16.msra.mxu0 0
      %282 = vmatprep.subr.bf16.mxu0 0
      %283 = vmatpush1.bf16.msra.mxu0 0
      %284 = vmatprep.subr.bf16.mxu0 0
      %285 = vmatpush1.bf16.msra.mxu0 0
      %286 = vmatprep.subr.bf16.mxu0 0
      %287 = vmatpush1.bf16.msra.mxu0 0
      %288 = vmatprep.mubr.bf16.mxu0 0
      %289 = vmatmul.mubr.bf16.gmra.mrb[0].mxu0 %v244
      %v290 = vpop.f32.mrb[0].mxu0
      %v291 = vadd.f32 0.0, %v290
      %v292 = vpop.f32.mrb[0].mxu0
      %v293 = vpop.f32.mrb[0].mxu0
      %v294 = vadd.f32 0.0, %v293
      %v295 = vpop.f32.mrb[0].mxu0
      %296 = vmatprep.mubr.bf16.mxu0 0
      %297 = vmatmul.mubr.bf16.gmra.mrb[0].mxu0 %v247
      %v298 = vpop.f32.mrb[0].mxu0
      %v299 = vadd.f32 0.0, %v298
      %v300 = vpop.f32.mrb[0].mxu0
      %v301 = vpop.f32.mrb[0].mxu0
      %v302 = vadd.f32 0.0, %v301
      %v303 = vpop.f32.mrb[0].mxu0
      %304 = vdwg.mxu0
      %s305 = scalar_lea.vmem %s201, 16
      %v306 = vld [vmem:[%s305] sm:$0xf]
      %v307 = vld [vmem:[%s305 + $0x4] sm:$0xf]
      %v308 = vld [vmem:[%s305 + $0x8] sm:$0xf]
      %v309 = vld [vmem:[%s305 + $0xc] sm:$0x3]
      %v314 = vunpack.c.l.b16 %v306
      %v315 = vunpack.c.l.b16 %v307
      %v316 = vunpack.c.l.b16 %v308
      %v317 = vunpack.c.l.b16 %v309
      %v318 = vpack.c.b16 %v315, %v314
      %v319 = vpack.c.b16 %v317, %v316
      %v321 = vsel %vm242, %v318, 0
      %v324 = vsel %vm242, %v319, 0
      %326 = vmatprep.subr.bf16.mxu0 0
      %327 = vmatpush1.bf16.msra.mxu0 %v239
      %328 = vmatprep.subr.bf16.mxu0 0
      %329 = vmatpush1.bf16.msra.mxu0 %v254
      %330 = vmatprep.subr.bf16.mxu0 0
      %331 = vmatpush1.bf16.msra.mxu0 0
      %332 = vmatprep.subr.bf16.mxu0 0
      %333 = vmatpush1.bf16.msra.mxu0 0
      %334 = vmatprep.subr.bf16.mxu0 0
      %335 = vmatpush1.bf16.msra.mxu0 0
      %336 = vmatprep.subr.bf16.mxu0 0
      %337 = vmatpush1.bf16.msra.mxu0 0
      %338 = vmatprep.subr.bf16.mxu0 0
      %339 = vmatpush1.bf16.msra.mxu0 0
      %340 = vmatprep.subr.bf16.mxu0 0
      %341 = vmatpush1.bf16.msra.mxu0 0
      %342 = vmatprep.subr.bf16.mxu0 0
      %343 = vmatpush1.bf16.msra.mxu0 0
      %344 = vmatprep.subr.bf16.mxu0 0
      %345 = vmatpush1.bf16.msra.mxu0 0
      %346 = vmatprep.subr.bf16.mxu0 0
      %347 = vmatpush1.bf16.msra.mxu0 0
      %348 = vmatprep.subr.bf16.mxu0 0
      %349 = vmatpush1.bf16.msra.mxu0 0
      %350 = vmatprep.subr.bf16.mxu0 0
      %351 = vmatpush1.bf16.msra.mxu0 0
      %352 = vmatprep.subr.bf16.mxu0 0
      %353 = vmatpush1.bf16.msra.mxu0 0
      %354 = vmatprep.subr.bf16.mxu0 0
      %355 = vmatpush1.bf16.msra.mxu0 0
      %356 = vmatprep.subr.bf16.mxu0 0
      %357 = vmatpush1.bf16.msra.mxu0 0
      %358 = vmatprep.mubr.bf16.mxu0 0
      %359 = vmatmul.mubr.bf16.gmra.mrb[0].mxu0 %v321
      %v360 = vpop.f32.mrb[0].mxu0
      %v361 = vadd.f32 0.0, %v360
      %v362 = vpop.f32.mrb[0].mxu0
      %v363 = vpop.f32.mrb[0].mxu0
      %v364 = vadd.f32 0.0, %v363
      %v365 = vpop.f32.mrb[0].mxu0
      %366 = vmatprep.mubr.bf16.mxu0 0
      %367 = vmatmul.mubr.bf16.gmra.mrb[0].mxu0 %v324
      %v368 = vpop.f32.mrb[0].mxu0
      %v369 = vadd.f32 0.0, %v368
      %v370 = vpop.f32.mrb[0].mxu0
      %v371 = vpop.f32.mrb[0].mxu0
      %v372 = vadd.f32 0.0, %v371
      %v373 = vpop.f32.mrb[0].mxu0
      %374 = vdwg.mxu0
      %v375 = vmax.f32 %v291, %v361
      %v376 = vmax.f32 %v294, %v364
      %v377 = vmax.f32 %v299, %v369
      %v378 = vmax.f32 %v302, %v372
      %379 = vst [vmem:[#allocation2] sm:$0xff] %v375
      %380 = vst [vmem:[#allocation2 + $0x8] sm:$0xff] %v376
      %381 = vst [vmem:[#allocation2 + $0x10] sm:$0xff] %v377
      %382 = vst [vmem:[#allocation2 + $0x18] sm:$0xf] %v378
      %v383 = vld [vmem:[#allocation2] ss:$2 sm:$0xff]
      %s384 = scalar_lea.vmem [#allocation2], 16
      %v385 = vld [vmem:[%s384] ss:$2 sm:$0x3f]
      %s386 = scalar_lea.vmem [#allocation2], 1
      %v387 = vld [vmem:[%s386] ss:$2 sm:$0xff]
      %s388 = scalar_lea.vmem [#allocation2], 17
      %v389 = vld [vmem:[%s388] ss:$2 sm:$0x3f]
      %v390 = vmax.f32 %v383, %v387
      %v391 = vmax.f32 %v385, %v389
      %v392 = vld [vmem:[%s2] sm:$0x1]
      %v394 = vlaneseq
      %v395 = vshrl.u32 %v394, 7
      %v396 = vsub.s32 0, %v395
      %v397 = vrot.slane %v392, %v396
      %v399 = vadd.f32 %v390, %v397
      %v400 = vadd.f32 %v391, %v397
      %v401 = vpack.c.bf16 %v400, %v399
      %v403 = vunpack.c.l.b16 %v401
      %v404 = vunpack.c.h.b16 %v401
      %v405 = vpack.c.b16 %v403, %v403
      %v406 = vpack.c.b16 %v404, %v404
      %409 = vst [vmem:[%s211] sm:$0xf] %v405
      %410 = vst [vmem:[%s211 + $0x4] sm:$0x7] %v406
      %p411 = scmp.lt.s32.totalorder %s18, 1
      %s412 = scalar_select %p411, %s18, 1
      %p413 = scmp.lt.s32.totalorder %s19, 13
      %s414 = scalar_select %p413, %s19, 13
      %s415 = smul.addr %s414, 2
      %s416 = smul.addr %s412, 28
      %s417 = sadd.s32 %s415, %s416
      %s418 = smul.addr %s417, 4
      %s419 = scalar_lea.vmem %s3, %s418
      // Predicated region
      $region33: #{net_forward.3} parent=31 // pred_check
        %p420 = pneg %p116
      $region34: #{net_forward.3} parent=31 // pred_check_branch
        %422 = sbr.rel (%p420) target = $region36
      $region35: #{net_forward.3} parent=31 // pred_region
        _
      $region36: #{net_forward.3} parent=31 // pred_fallthru
        _
    $region32: #{net_forward.3} parent=5 // pred_fallthru
      _
    %p423 = scmp.le.s32.totalorder 2, %s9
    // Predicated region
    $region37: #{net_forward.3} parent=5 // pred_check
      %p424 = pneg %p423
    $region38: #{net_forward.3} parent=5 // pred_check_branch
      %426 = sbr.rel (%p424) target = $region40
    $region39: #{net_forward.3} parent=5 // pred_region
      %s427 = ssub.s32 %s9, 2
      // Predicated region
      $region41: #{net_forward.3} parent=39 // pred_check
        %p428 = pneg %p122
      $region42: #{net_forward.3} parent=39 // pred_check_branch
        %430 = sbr.rel (%p428) target = $region44
      $region43: #{net_forward.3} parent=39 // pred_region
        %p431 = scmp.lt.s32.totalorder %s20, 1
        %s432 = scalar_select %p431, %s20, 1
        %p433 = scmp.lt.s32.totalorder %s21, 13
        %s434 = scalar_select %p433, %s21, 13
        %s435 = smul.addr %s434, 2
        %s436 = smul.addr %s432, 28
        %s437 = sadd.s32 %s435, %s436
        %s438 = smul.addr %s437, 4
        %s439 = scalar_lea.vmem %s3, %s438
      $region44: #{net_forward.3} parent=39 // pred_fallthru
        _
    $region40: #{net_forward.3} parent=5 // pred_fallthru
      _
  $region6: #{net_forward.3} parent=0 // loop_footer
    %s13 = sadd.s32 1, %s9
  $region7: #{net_forward.3} parent=0 // loop_footer_branch
    %8 = sbr.rel target = $region3
  $region8: #{net_forward.3} parent=0 // loop_exit
    _

// kernel: net_forward.4
$region0: #{net_forward.4}
  #allocation0 [shape = 'u32[]', space=smem, size = 0x4, offset = 0x4, fixed_abs, tag = 'smem constant byte address 0x4 - core index']
  #allocation1 [shape = 'u32[144,128]{1,0:T(1,128)}', space=vmem, size = 0x12000, scoped, tag = 'internal scratch']
  #allocation2 [shape = 'f32[10,128]{1,0:T(8,128)}', space=vmem, size = 0x2000, scoped, tag = 'scratch operand']
  %s0 = inlined_call_operand.vmem [shape: bf16[2,10,10,500], index: 0, kind: input, shape index: {}]
  %s1 = inlined_call_operand.vmem [shape: bf16[500,128], index: 1, kind: input, shape index: {}]
  %s2 = inlined_call_operand.vmem [shape: f32[1,128], index: 2, kind: input, shape index: {}]
  %s3 = inlined_call_operand.vmem [shape: bf16[2,5,5,128], index: 3, kind: output, shape index: {}]
  %s4 = sld [smem:[#allocation0]]
  $region45: #{net_forward.4} parent=0
    _
  %s6 = ssub.s32 1, %s4
  %s7 = scalar_select 0, %s6, %s4
  loop: start=0, step=1, limit=12
  $region2: #{net_forward.4} parent=0 // loop_pre_header
    _
  $region3: #{net_forward.4} parent=0 // loop_header
    %s9 = sphi 0, %s13
    %p10 = scmp.ge.s32.totalorder %s9, 12
    %s16 = sphi 0, %s28
    %s17 = sphi 0, %s24
    %s18 = sphi 0, %s16
    %s19 = sphi 0, %s17
    %s20 = sphi 0, %s18
    %s21 = sphi 0, %s19
    %s33 = sphi 0, %s35
    %s36 = sphi 0, %s33
    %s37 = sphi 0, %s36
    %s53 = sphi 0, %s37
    %s57 = sphi 0, %s57
    %s59 = sphi 0, %s57
    %s60 = sphi 0, %s59
    %s74 = sphi 0, %s60
    %s78 = sphi 0, %s78
    %s80 = sphi 0, %s78
    %s81 = sphi 0, %s80
    %s95 = sphi 0, %s81
    %s103 = sphi 0, %s105
    %s106 = sphi 0, %s103
    %s107 = sphi 0, %s106
    %s123 = sphi 0, %s107
  $region4: #{net_forward.4} parent=0 // loop_header_branch
    %12 = sbr.rel (%p10) target = $region8
  $region5: #{net_forward.4} parent=0 // loop_body
    %s14 = ssub.s32 %s9, 1
    %s15 = ssub.s32 %s9, 2
    %s22 = sadd.s32 1, %s17
    %p23 = scmp.ge.s32.totalorder %s22, 5
    %s24 = scalar_select %p23, 0, %s22
    %s25 = sadd.s32 1, %s16
    %s26 = scalar_select %p23, %s25, %s16
    %p27 = scmp.ge.s32.totalorder %s26, 2
    %s28 = scalar_select %p27, 0, %s26
    %s29 = ssub.s32 %s16, %s28
    %s30 = ssub.s32 %s17, %s24
    %s31 = sor.u32 %s29, %s30
    %p32 = scmp.eq.s32.totalorder %s31, 0
    %s34 = sadd.s32 %s33, 1
    %s35 = scalar_select %p32, %s33, %s34
    %p38 = pneg %p32
    %p39 = scmp.eq.s32.totalorder %s9, 9
    %p40 = por %p38, %p39
    %p41 = scmp.ne.s32.totalorder %s33, %s36
    %p42 = scmp.eq.s32.totalorder %s9, 0
    %p43 = por %p41, %p42
    %p44 = scmp.ne.s32.totalorder %s33, %s36
    %p45 = scmp.eq.s32.totalorder %s14, 9
    %p46 = por %p44, %p45
    %p47 = scmp.ne.s32.totalorder %s36, %s37
    %p48 = scmp.eq.s32.totalorder %s14, 0
    %p49 = por %p47, %p48
    %p50 = scmp.ne.s32.totalorder %s36, %s37
    %p51 = scmp.eq.s32.totalorder %s15, 9
    %p52 = por %p50, %p51
    %p54 = scmp.ne.s32.totalorder %s37, %s53
    %p55 = scmp.eq.s32.totalorder %s15, 0
    %p56 = por %p54, %p55
    %s58 = sadd.s32 %s57, 1
    %p61 = scmp.eq.s32.totalorder %s9, 9
    %p62 = scmp.ne.s32.totalorder %s57, %s59
    %p63 = scmp.eq.s32.totalorder %s9, 0
    %p64 = por %p62, %p63
    %p65 = scmp.ne.s32.totalorder %s57, %s59
    %p66 = scmp.eq.s32.totalorder %s14, 9
    %p67 = por %p65, %p66
    %p68 = scmp.ne.s32.totalorder %s59, %s60
    %p69 = scmp.eq.s32.totalorder %s14, 0
    %p70 = por %p68, %p69
    %p71 = scmp.ne.s32.totalorder %s59, %s60
    %p72 = scmp.eq.s32.totalorder %s15, 9
    %p73 = por %p71, %p72
    %p75 = scmp.ne.s32.totalorder %s60, %s74
    %p76 = scmp.eq.s32.totalorder %s15, 0
    %p77 = por %p75, %p76
    %s79 = sadd.s32 %s78, 1
    %p82 = scmp.eq.s32.totalorder %s9, 9
    %p83 = scmp.ne.s32.totalorder %s78, %s80
    %p84 = scmp.eq.s32.totalorder %s9, 0
    %p85 = por %p83, %p84
    %p86 = scmp.ne.s32.totalorder %s78, %s80
    %p87 = scmp.eq.s32.totalorder %s14, 9
    %p88 = por %p86, %p87
    %p89 = scmp.ne.s32.totalorder %s80, %s81
    %p90 = scmp.eq.s32.totalorder %s14, 0
    %p91 = por %p89, %p90
    %p92 = scmp.ne.s32.totalorder %s80, %s81
    %p93 = scmp.eq.s32.totalorder %s15, 9
    %p94 = por %p92, %p93
    %p96 = scmp.ne.s32.totalorder %s81, %s95
    %p97 = scmp.eq.s32.totalorder %s15, 0
    %p98 = por %p96, %p97
    %s99 = ssub.s32 %s16, %s28
    %s100 = ssub.s32 %s17, %s24
    %s101 = sor.u32 %s99, %s100
    %p102 = scmp.eq.s32.totalorder %s101, 0
    %s104 = sadd.s32 %s103, 1
    %s105 = scalar_select %p102, %s103, %s104
    %p108 = pneg %p102
    %p109 = scmp.eq.s32.totalorder %s9, 9
    %p110 = por %p108, %p109
    %p111 = scmp.ne.s32.totalorder %s103, %s106
    %p112 = scmp.eq.s32.totalorder %s9, 0
    %p113 = por %p111, %p112
    %p114 = scmp.ne.s32.totalorder %s103, %s106
    %p115 = scmp.eq.s32.totalorder %s14, 9
    %p116 = por %p114, %p115
    %p117 = scmp.ne.s32.totalorder %s106, %s107
    %p118 = scmp.eq.s32.totalorder %s14, 0
    %p119 = por %p117, %p118
    %p120 = scmp.ne.s32.totalorder %s106, %s107
    %p121 = scmp.eq.s32.totalorder %s15, 9
    %p122 = por %p120, %p121
    %p124 = scmp.ne.s32.totalorder %s107, %s123
    %p125 = scmp.eq.s32.totalorder %s15, 0
    %p126 = por %p124, %p125
    %p127 = scmp.le.s32.totalorder 1, %s9
    %p128 = scmp.lt.s32.totalorder %s9, 11
    %p129 = pnand %p127, %p128
    %p130 = pneg %p129
    // Predicated region
    $region9: #{net_forward.4} parent=5 // pred_check
      _
    $region10: #{net_forward.4} parent=5 // pred_check_branch
      %132 = sbr.rel (%p129) target = $region12
    $region11: #{net_forward.4} parent=5 // pred_region
      %s133 = ssub.s32 %s9, 1
      // Predicated region
      $region13: #{net_forward.4} parent=11 // pred_check
        %p134 = pneg %p70
      $region14: #{net_forward.4} parent=11 // pred_check_branch
        %136 = sbr.rel (%p134) target = $region16
      $region15: #{net_forward.4} parent=11 // pred_region
        _
      $region16: #{net_forward.4} parent=11 // pred_fallthru
        _
      // Predicated region
      $region17: #{net_forward.4} parent=11 // pred_check
        %p137 = pneg %p91
      $region18: #{net_forward.4} parent=11 // pred_check_branch
        %139 = sbr.rel (%p137) target = $region20
      $region19: #{net_forward.4} parent=11 // pred_region
        _
      $region20: #{net_forward.4} parent=11 // pred_fallthru
        _
    $region12: #{net_forward.4} parent=5 // pred_fallthru
      _
    %p140 = scmp.lt.s32.totalorder %s9, 10
    // Predicated region
    $region21: #{net_forward.4} parent=5 // pred_check
      %p141 = pneg %p140
    $region22: #{net_forward.4} parent=5 // pred_check_branch
      %143 = sbr.rel (%p141) target = $region24
    $region23: #{net_forward.4} parent=5 // pred_region
      // Predicated region
      $region25: #{net_forward.4} parent=23 // pred_check
        %p144 = pneg %p43
      $region26: #{net_forward.4} parent=23 // pred_check_branch
        %146 = sbr.rel (%p144) target = $region28
      $region27: #{net_forward.4} parent=23 // pred_region
        %s147 = smul.u32 2, %s17
        %p148 = scmp.lt.s32.totalorder %s16, 1
        %s149 = scalar_select %p148, %s16, 1
        %p150 = scmp.lt.s32.totalorder %s147, 9
        %s151 = scalar_select %p150, %s147, 9
        %s152 = smul.addr %s151, 8
        %s153 = smul.addr %s149, 80
        %s154 = sadd.s32 %s152, %s153
        %s155 = smul.addr %s154, 4
        %s156 = scalar_lea.vmem %s0, %s155
        %s157 = smul.u32 2, %s17
      $region28: #{net_forward.4} parent=23 // pred_fallthru
        _
    $region24: #{net_forward.4} parent=5 // pred_fallthru
      _
    %p158 = scmp.le.s32.totalorder 1, %s9
    %p159 = scmp.lt.s32.totalorder %s9, 11
    %p160 = pnand %p158, %p159
    %p161 = pneg %p160
    // Predicated region
    $region29: #{net_forward.4} parent=5 // pred_check
      _
    $region30: #{net_forward.4} parent=5 // pred_check_branch
      %163 = sbr.rel (%p160) target = $region32
    $region31: #{net_forward.4} parent=5 // pred_region
      %s164 = ssub.s32 %s9, 1
      %s165 = smul.u32 2, %s19
      %p166 = scmp.lt.s32.totalorder %s18, 1
      %s167 = scalar_select %p166, %s18, 1
      %p168 = scmp.lt.s32.totalorder %s165, 9
      %s169 = scalar_select %p168, %s165, 9
      %s170 = smul.addr %s169, 8
      %s171 = smul.addr %s167, 80
      %s172 = sadd.s32 %s170, %s171
      %s173 = smul.addr %s172, 4
      %s174 = scalar_lea.vmem %s0, %s173
      %p175 = pneg %p49
      %p176 = pneg %p46
      %p177 = pneg %p70
      %p178 = pneg %p67
      %p179 = pneg %p91
      %p180 = pneg %p88
      %p181 = pneg %p119
      %p182 = pneg %p116
      %p183 = scmp.lt.s32.totalorder %s18, 1
      %s184 = scalar_select %p183, %s18, 1
      %p185 = scmp.lt.s32.totalorder %s19, 4
      %s186 = scalar_select %p185, %s19, 4
      %s187 = smul.addr %s184, 5
      %s188 = sadd.s32 %s186, %s187
      %s189 = smul.addr %s188, 4
      %s190 = scalar_lea.vmem %s3, %s189
      %s191 = smul.u32 2, %s19
      %p192 = scmp.lt.s32.totalorder %s18, 1
      %s193 = scalar_select %p192, %s18, 1
      %p194 = scmp.lt.s32.totalorder %s191, 9
      %s195 = scalar_select %p194, %s191, 9
      %s196 = smul.addr %s195, 8
      %s197 = smul.addr %s193, 80
      %s198 = sadd.s32 %s196, %s197
      %s199 = smul.addr %s198, 4
      %s200 = scalar_lea.vmem %s0, %s199
      %s201 = smul.u32 2, %s19
      %p202 = scmp.lt.s32.totalorder %s18, 1
      %s203 = scalar_select %p202, %s18, 1
      %p204 = scmp.lt.s32.totalorder %s19, 4
      %s205 = scalar_select %p204, %s19, 4
      %s206 = smul.addr %s203, 5
      %s207 = sadd.s32 %s205, %s206
      %s208 = smul.addr %s207, 4
      %s209 = scalar_lea.vmem %s3, %s208
      %v211 = vld [vmem:[%s1] sm:$0xf]
      %v212 = vld [vmem:[%s1 + $0x4] sm:$0xf]
      %v213 = vld [vmem:[%s1 + $0x8] sm:$0xf]
      %v214 = vld [vmem:[%s1 + $0xc] sm:$0xf]
      %v215 = vld [vmem:[%s1 + $0x10] sm:$0xf]
      %v216 = vld [vmem:[%s1 + $0x14] sm:$0xf]
      %v217 = vld [vmem:[%s1 + $0x18] sm:$0xf]
      %v218 = vld [vmem:[%s1 + $0x1c] sm:$0xf]
      %v219 = vld [vmem:[%s1 + $0x20] sm:$0xf]
      %v220 = vld [vmem:[%s1 + $0x24] sm:$0xf]
      %v221 = vld [vmem:[%s1 + $0x28] sm:$0xf]
      %v222 = vld [vmem:[%s1 + $0x2c] sm:$0xf]
      %v223 = vld [vmem:[%s1 + $0x30] sm:$0xf]
      %v224 = vld [vmem:[%s1 + $0x34] sm:$0xf]
      %v225 = vld [vmem:[%s1 + $0x38] sm:$0xf]
      %v226 = vld [vmem:[%s1 + $0x3c] sm:$0xf]
      %v227 = vld [vmem:[%s1 + $0x40] sm:$0xf]
      %v228 = vld [vmem:[%s1 + $0x44] sm:$0xf]
      %v229 = vld [vmem:[%s1 + $0x48] sm:$0xf]
      %v230 = vld [vmem:[%s1 + $0x4c] sm:$0xf]
      %v231 = vld [vmem:[%s1 + $0x50] sm:$0xf]
      %v232 = vld [vmem:[%s1 + $0x54] sm:$0xf]
      %v233 = vld [vmem:[%s1 + $0x58] sm:$0xf]
      %v234 = vld [vmem:[%s1 + $0x5c] sm:$0xf]
      %v235 = vld [vmem:[%s1 + $0x60] sm:$0xf]
      %v236 = vld [vmem:[%s1 + $0x64] sm:$0xf]
      %v237 = vld [vmem:[%s1 + $0x68] sm:$0xf]
      %v238 = vld [vmem:[%s1 + $0x6c] sm:$0xf]
      %v239 = vld [vmem:[%s1 + $0x70] sm:$0xf]
      %v240 = vld [vmem:[%s1 + $0x74] sm:$0xf]
      %v241 = vld [vmem:[%s1 + $0x78] sm:$0xf]
      %v242 = vld [vmem:[%s1 + $0x7c] sm:$0xf]
      %v243 = vld [vmem:[%s1 + $0x80] sm:$0xf]
      %v244 = vld [vmem:[%s1 + $0x84] sm:$0xf]
      %v245 = vld [vmem:[%s1 + $0x88] sm:$0xf]
      %v246 = vld [vmem:[%s1 + $0x8c] sm:$0xf]
      %v247 = vld [vmem:[%s1 + $0x90] sm:$0xf]
      %v248 = vld [vmem:[%s1 + $0x94] sm:$0xf]
      %v249 = vld [vmem:[%s1 + $0x98] sm:$0xf]
      %v250 = vld [vmem:[%s1 + $0x9c] sm:$0xf]
      %v251 = vld [vmem:[%s1 + $0xa0] sm:$0xf]
      %v252 = vld [vmem:[%s1 + $0xa4] sm:$0xf]
      %v253 = vld [vmem:[%s1 + $0xa8] sm:$0xf]
      %v254 = vld [vmem:[%s1 + $0xac] sm:$0xf]
      %v255 = vld [vmem:[%s1 + $0xb0] sm:$0xf]
      %v256 = vld [vmem:[%s1 + $0xb4] sm:$0xf]
      %v257 = vld [vmem:[%s1 + $0xb8] sm:$0xf]
      %v258 = vld [vmem:[%s1 + $0xbc] sm:$0xf]
      %v259 = vld [vmem:[%s1 + $0xc0] sm:$0xf]
      %v260 = vld [vmem:[%s1 + $0xc4] sm:$0xf]
      %v261 = vld [vmem:[%s1 + $0xc8] sm:$0xf]
      %v262 = vld [vmem:[%s1 + $0xcc] sm:$0xf]
      %v263 = vld [vmem:[%s1 + $0xd0] sm:$0xf]
      %v264 = vld [vmem:[%s1 + $0xd4] sm:$0xf]
      %v265 = vld [vmem:[%s1 + $0xd8] sm:$0xf]
      %v266 = vld [vmem:[%s1 + $0xdc] sm:$0xf]
      %v267 = vld [vmem:[%s1 + $0xe0] sm:$0xf]
      %v268 = vld [vmem:[%s1 + $0xe4] sm:$0xf]
      %v269 = vld [vmem:[%s1 + $0xe8] sm:$0xf]
      %v270 = vld [vmem:[%s1 + $0xec] sm:$0xf]
      %v271 = vld [vmem:[%s1 + $0xf0] sm:$0xf]
      %v272 = vld [vmem:[%s1 + $0xf4] sm:$0xf]
      %v273 = vld [vmem:[%s1 + $0xf8] sm:$0x3]
      %v274 = vld [vmem:[%s200] sm:$0xff]
      %v275 = vld [vmem:[%s200 + $0x8] sm:$0xff]
      %v276 = vld [vmem:[%s200 + $0x10] sm:$0x11]
      %v277 = vld [vmem:[%s200 + $0x18] sm:$0x11]
      %v282 = vunpack.c.l.b16 %v274
      %v283 = vunpack.c.h.b16 %v274
      %v284 = vunpack.c.l.b16 %v275
      %v285 = vunpack.c.h.b16 %v275
      %v286 = vunpack.c.l.b16 %v276
      %v287 = vunpack.c.h.b16 %v276
      %v288 = vunpack.c.l.b16 %v277
      %v289 = vunpack.c.h.b16 %v277
      %v290 = vpack.c.b16 %v286, %v282
      %v291 = vpack.c.b16 %v287, %v283
      %v292 = vpack.c.b16 %v288, %v284
      %v293 = vpack.c.b16 %v289, %v285
      %v360 = vunpack.c.l.b16 %v211
      %v361 = vunpack.c.l.b16 %v212
      %v362 = vunpack.c.l.b16 %v213
      %v363 = vunpack.c.l.b16 %v214
      %v364 = vunpack.c.l.b16 %v215
      %v365 = vunpack.c.l.b16 %v216
      %v366 = vunpack.c.l.b16 %v217
      %v367 = vunpack.c.l.b16 %v218
      %v368 = vunpack.c.l.b16 %v219
      %v369 = vunpack.c.l.b16 %v220
      %v370 = vunpack.c.l.b16 %v221
      %v371 = vunpack.c.l.b16 %v222
      %v372 = vunpack.c.l.b16 %v223
      %v373 = vunpack.c.l.b16 %v224
      %v374 = vunpack.c.l.b16 %v225
      %v375 = vunpack.c.l.b16 %v226
      %v376 = vunpack.c.l.b16 %v227
      %v377 = vunpack.c.l.b16 %v228
      %v378 = vunpack.c.l.b16 %v229
      %v379 = vunpack.c.l.b16 %v230
      %v380 = vunpack.c.l.b16 %v231
      %v381 = vunpack.c.l.b16 %v232
      %v382 = vunpack.c.l.b16 %v233
      %v383 = vunpack.c.l.b16 %v234
      %v384 = vunpack.c.l.b16 %v235
      %v385 = vunpack.c.l.b16 %v236
      %v386 = vunpack.c.l.b16 %v237
      %v387 = vunpack.c.l.b16 %v238
      %v388 = vunpack.c.l.b16 %v239
      %v389 = vunpack.c.l.b16 %v240
      %v390 = vunpack.c.l.b16 %v241
      %v391 = vunpack.c.l.b16 %v242
      %v392 = vunpack.c.l.b16 %v243
      %v393 = vunpack.c.l.b16 %v244
      %v394 = vunpack.c.l.b16 %v245
      %v395 = vunpack.c.l.b16 %v246
      %v396 = vunpack.c.l.b16 %v247
      %v397 = vunpack.c.l.b16 %v248
      %v398 = vunpack.c.l.b16 %v249
      %v399 = vunpack.c.l.b16 %v250
      %v400 = vunpack.c.l.b16 %v251
      %v401 = vunpack.c.l.b16 %v252
      %v402 = vunpack.c.l.b16 %v253
      %v403 = vunpack.c.l.b16 %v254
      %v404 = vunpack.c.l.b16 %v255
      %v405 = vunpack.c.l.b16 %v256
      %v406 = vunpack.c.l.b16 %v257
      %v407 = vunpack.c.l.b16 %v258
      %v408 = vunpack.c.l.b16 %v259
      %v409 = vunpack.c.l.b16 %v260
      %v410 = vunpack.c.l.b16 %v261
      %v411 = vunpack.c.l.b16 %v262
      %v412 = vunpack.c.l.b16 %v263
      %v413 = vunpack.c.l.b16 %v264
      %v414 = vunpack.c.l.b16 %v265
      %v415 = vunpack.c.l.b16 %v266
      %v416 = vunpack.c.l.b16 %v267
      %v417 = vunpack.c.l.b16 %v268
      %v418 = vunpack.c.l.b16 %v269
      %v419 = vunpack.c.l.b16 %v270
      %v420 = vunpack.c.l.b16 %v271
      %v421 = vunpack.c.l.b16 %v272
      %v422 = vunpack.c.l.b16 %v273
      %v423 = vpack.c.b16 %v361, %v360
      %v424 = vpack.c.b16 %v363, %v362
      %v425 = vpack.c.b16 %v365, %v364
      %v426 = vpack.c.b16 %v367, %v366
      %v427 = vpack.c.b16 %v369, %v368
      %v428 = vpack.c.b16 %v371, %v370
      %v429 = vpack.c.b16 %v373, %v372
      %v430 = vpack.c.b16 %v375, %v374
      %v431 = vpack.c.b16 %v377, %v376
      %v432 = vpack.c.b16 %v379, %v378
      %v433 = vpack.c.b16 %v381, %v380
      %v434 = vpack.c.b16 %v383, %v382
      %v435 = vpack.c.b16 %v385, %v384
      %v436 = vpack.c.b16 %v387, %v386
      %v437 = vpack.c.b16 %v389, %v388
      %v438 = vpack.c.b16 %v391, %v390
      %v439 = vpack.c.b16 %v393, %v392
      %v440 = vpack.c.b16 %v395, %v394
      %v441 = vpack.c.b16 %v397, %v396
      %v442 = vpack.c.b16 %v399, %v398
      %v443 = vpack.c.b16 %v401, %v400
      %v444 = vpack.c.b16 %v403, %v402
      %v445 = vpack.c.b16 %v405, %v404
      %v446 = vpack.c.b16 %v407, %v406
      %v447 = vpack.c.b16 %v409, %v408
      %v448 = vpack.c.b16 %v411, %v410
      %v449 = vpack.c.b16 %v413, %v412
      %v450 = vpack.c.b16 %v415, %v414
      %v451 = vpack.c.b16 %v417, %v416
      %v452 = vpack.c.b16 %v419, %v418
      %v453 = vpack.c.b16 %v421, %v420
      %v454 = vpack.c.b16 %v422, %v422
      %vm486 = vcmask 949248
      %v488 = vsel %vm486, %v293, 0
      %vm490 = vcmask 1041408
      %v492 = vsel %vm490, %v454, 0
      %494 = vmatprep.subr.bf16.mxu0 0
      %495 = vmatpush1.bf16.msra.mxu0 %v423
      %496 = vmatprep.subr.bf16.mxu0 0
      %497 = vmatpush1.bf16.msra.mxu0 %v424
      %498 = vmatprep.subr.bf16.mxu0 0
      %499 = vmatpush1.bf16.msra.mxu0 %v425
      %500 = vmatprep.subr.bf16.mxu0 0
      %501 = vmatpush1.bf16.msra.mxu0 %v426
      %502 = vmatprep.subr.bf16.mxu0 0
      %503 = vmatpush1.bf16.msra.mxu0 %v427
      %504 = vmatprep.subr.bf16.mxu0 0
      %505 = vmatpush1.bf16.msra.mxu0 %v428
      %506 = vmatprep.subr.bf16.mxu0 0
      %507 = vmatpush1.bf16.msra.mxu0 %v429
      %508 = vmatprep.subr.bf16.mxu0 0
      %509 = vmatpush1.bf16.msra.mxu0 %v430
      %510 = vmatprep.subr.bf16.mxu0 0
      %511 = vmatpush1.bf16.msra.mxu0 %v431
      %512 = vmatprep.subr.bf16.mxu0 0
      %513 = vmatpush1.bf16.msra.mxu0 %v432
      %514 = vmatprep.subr.bf16.mxu0 0
      %515 = vmatpush1.bf16.msra.mxu0 %v433
      %516 = vmatprep.subr.bf16.mxu0 0
      %517 = vmatpush1.bf16.msra.mxu0 %v434
      %518 = vmatprep.subr.bf16.mxu0 0
      %519 = vmatpush1.bf16.msra.mxu0 %v435
      %520 = vmatprep.subr.bf16.mxu0 0
      %521 = vmatpush1.bf16.msra.mxu0 %v436
      %522 = vmatprep.subr.bf16.mxu0 0
      %523 = vmatpush1.bf16.msra.mxu0 %v437
      %524 = vmatprep.subr.bf16.mxu0 0
      %525 = vmatpush1.bf16.msra.mxu0 %v438
      %526 = vmatprep.mubr.bf16.mxu0 %v291
      %527 = vmatmul.mubr.bf16.gmra.mrb[0].mxu0 %v290
      %v528 = vpop.f32.mrb[0].mxu0
      %v529 = vadd.f32 0.0, %v528
      %v530 = vpop.f32.mrb[0].mxu0
      %v531 = vpop.f32.mrb[0].mxu0
      %v532 = vadd.f32 0.0, %v531
      %v533 = vpop.f32.mrb[0].mxu0
      %534 = vdwg.mxu0
      %535 = vmatprep.subr.bf16.mxu0 0
      %536 = vmatpush1.bf16.msra.mxu0 %v439
      %537 = vmatprep.subr.bf16.mxu0 0
      %538 = vmatpush1.bf16.msra.mxu0 %v440
      %539 = vmatprep.subr.bf16.mxu0 0
      %540 = vmatpush1.bf16.msra.mxu0 %v441
      %541 = vmatprep.subr.bf16.mxu0 0
      %542 = vmatpush1.bf16.msra.mxu0 %v442
      %543 = vmatprep.subr.bf16.mxu0 0
      %544 = vmatpush1.bf16.msra.mxu0 %v443
      %545 = vmatprep.subr.bf16.mxu0 0
      %546 = vmatpush1.bf16.msra.mxu0 %v444
      %547 = vmatprep.subr.bf16.mxu0 0
      %548 = vmatpush1.bf16.msra.mxu0 %v445
      %549 = vmatprep.subr.bf16.mxu0 0
      %550 = vmatpush1.bf16.msra.mxu0 %v446
      %551 = vmatprep.subr.bf16.mxu0 0
      %552 = vmatpush1.bf16.msra.mxu0 %v447
      %553 = vmatprep.subr.bf16.mxu0 0
      %554 = vmatpush1.bf16.msra.mxu0 %v448
      %555 = vmatprep.subr.bf16.mxu0 0
      %556 = vmatpush1.bf16.msra.mxu0 %v449
      %557 = vmatprep.subr.bf16.mxu0 0
      %558 = vmatpush1.bf16.msra.mxu0 %v450
      %559 = vmatprep.subr.bf16.mxu0 0
      %560 = vmatpush1.bf16.msra.mxu0 %v451
      %561 = vmatprep.subr.bf16.mxu0 0
      %562 = vmatpush1.bf16.msra.mxu0 %v452
      %563 = vmatprep.subr.bf16.mxu0 0
      %564 = vmatpush1.bf16.msra.mxu0 %v453
      %565 = vmatprep.subr.bf16.mxu0 0
      %566 = vmatpush1.bf16.msra.mxu0 %v492
      %567 = vmatprep.mubr.bf16.mxu0 %v488
      %568 = vmatmul.mubr.bf16.gmra.mrb[0].mxu0 %v292
      %v569 = vpop.f32.mrb[0].mxu0
      %v570 = vadd.f32 %v529, %v569
      %v571 = vpop.f32.mrb[0].mxu0
      %v572 = vpop.f32.mrb[0].mxu0
      %v573 = vadd.f32 %v532, %v572
      %v574 = vpop.f32.mrb[0].mxu0
      %575 = vdwg.mxu0
      %s576 = scalar_lea.vmem %s200, 32
      %v577 = vld [vmem:[%s576] sm:$0xff]
      %v578 = vld [vmem:[%s576 + $0x8] sm:$0xff]
      %v579 = vld [vmem:[%s576 + $0x10] sm:$0x11]
      %v580 = vld [vmem:[%s576 + $0x18] sm:$0x11]
      %v585 = vunpack.c.l.b16 %v577
      %v586 = vunpack.c.h.b16 %v577
      %v587 = vunpack.c.l.b16 %v578
      %v588 = vunpack.c.h.b16 %v578
      %v589 = vunpack.c.l.b16 %v579
      %v590 = vunpack.c.h.b16 %v579
      %v591 = vunpack.c.l.b16 %v580
      %v592 = vunpack.c.h.b16 %v580
      %v593 = vpack.c.b16 %v589, %v585
      %v594 = vpack.c.b16 %v590, %v586
      %v595 = vpack.c.b16 %v591, %v587
      %v596 = vpack.c.b16 %v592, %v588
      %v601 = vsel %vm486, %v596, 0
      %603 = vmatprep.subr.bf16.mxu0 0
      %604 = vmatpush1.bf16.msra.mxu0 %v423
      %605 = vmatprep.subr.bf16.mxu0 0
      %606 = vmatpush1.bf16.msra.mxu0 %v424
      %607 = vmatprep.subr.bf16.mxu0 0
      %608 = vmatpush1.bf16.msra.mxu0 %v425
      %609 = vmatprep.subr.bf16.mxu0 0
      %610 = vmatpush1.bf16.msra.mxu0 %v426
      %611 = vmatprep.subr.bf16.mxu0 0
      %612 = vmatpush1.bf16.msra.mxu0 %v427
      %613 = vmatprep.subr.bf16.mxu0 0
      %614 = vmatpush1.bf16.msra.mxu0 %v428
      %615 = vmatprep.subr.bf16.mxu0 0
      %616 = vmatpush1.bf16.msra.mxu0 %v429
      %617 = vmatprep.subr.bf16.mxu0 0
      %618 = vmatpush1.bf16.msra.mxu0 %v430
      %619 = vmatprep.subr.bf16.mxu0 0
      %620 = vmatpush1.bf16.msra.mxu0 %v431
      %621 = vmatprep.subr.bf16.mxu0 0
      %622 = vmatpush1.bf16.msra.mxu0 %v432
      %623 = vmatprep.subr.bf16.mxu0 0
      %624 = vmatpush1.bf16.msra.mxu0 %v433
      %625 = vmatprep.subr.bf16.mxu0 0
      %626 = vmatpush1.bf16.msra.mxu0 %v434
      %627 = vmatprep.subr.bf16.mxu0 0
      %628 = vmatpush1.bf16.msra.mxu0 %v435
      %629 = vmatprep.subr.bf16.mxu0 0
      %630 = vmatpush1.bf16.msra.mxu0 %v436
      %631 = vmatprep.subr.bf16.mxu0 0
      %632 = vmatpush1.bf16.msra.mxu0 %v437
      %633 = vmatprep.subr.bf16.mxu0 0
      %634 = vmatpush1.bf16.msra.mxu0 %v438
      %635 = vmatprep.mubr.bf16.mxu0 %v594
      %636 = vmatmul.mubr.bf16.gmra.mrb[0].mxu0 %v593
      %v637 = vpop.f32.mrb[0].mxu0
      %v638 = vadd.f32 0.0, %v637
      %v639 = vpop.f32.mrb[0].mxu0
      %v640 = vpop.f32.mrb[0].mxu0
      %v641 = vadd.f32 0.0, %v640
      %v642 = vpop.f32.mrb[0].mxu0
      %643 = vdwg.mxu0
      %644 = vmatprep.subr.bf16.mxu0 0
      %645 = vmatpush1.bf16.msra.mxu0 %v439
      %646 = vmatprep.subr.bf16.mxu0 0
      %647 = vmatpush1.bf16.msra.mxu0 %v440
      %648 = vmatprep.subr.bf16.mxu0 0
      %649 = vmatpush1.bf16.msra.mxu0 %v441
      %650 = vmatprep.subr.bf16.mxu0 0
      %651 = vmatpush1.bf16.msra.mxu0 %v442
      %652 = vmatprep.subr.bf16.mxu0 0
      %653 = vmatpush1.bf16.msra.mxu0 %v443
      %654 = vmatprep.subr.bf16.mxu0 0
      %655 = vmatpush1.bf16.msra.mxu0 %v444
      %656 = vmatprep.subr.bf16.mxu0 0
      %657 = vmatpush1.bf16.msra.mxu0 %v445
      %658 = vmatprep.subr.bf16.mxu0 0
      %659 = vmatpush1.bf16.msra.mxu0 %v446
      %660 = vmatprep.subr.bf16.mxu0 0
      %661 = vmatpush1.bf16.msra.mxu0 %v447
      %662 = vmatprep.subr.bf16.mxu0 0
      %663 = vmatpush1.bf16.msra.mxu0 %v448
      %664 = vmatprep.subr.bf16.mxu0 0
      %665 = vmatpush1.bf16.msra.mxu0 %v449
      %666 = vmatprep.subr.bf16.mxu0 0
      %667 = vmatpush1.bf16.msra.mxu0 %v450
      %668 = vmatprep.subr.bf16.mxu0 0
      %669 = vmatpush1.bf16.msra.mxu0 %v451
      %670 = vmatprep.subr.bf16.mxu0 0
      %671 = vmatpush1.bf16.msra.mxu0 %v452
      %672 = vmatprep.subr.bf16.mxu0 0
      %673 = vmatpush1.bf16.msra.mxu0 %v453
      %674 = vmatprep.subr.bf16.mxu0 0
      %675 = vmatpush1.bf16.msra.mxu0 %v492
      %676 = vmatprep.mubr.bf16.mxu0 %v601
      %677 = vmatmul.mubr.bf16.gmra.mrb[0].mxu0 %v595
      %v678 = vpop.f32.mrb[0].mxu0
      %v679 = vadd.f32 %v638, %v678
      %v680 = vpop.f32.mrb[0].mxu0
      %v681 = vpop.f32.mrb[0].mxu0
      %v682 = vadd.f32 %v641, %v681
      %v683 = vpop.f32.mrb[0].mxu0
      %684 = vdwg.mxu0
      %v685 = vmax.f32 %v570, %v679
      %v686 = vmax.f32 %v573, %v682
      %687 = vst [vmem:[#allocation2] sm:$0xff] %v685
      %688 = vst [vmem:[#allocation2 + $0x8] sm:$0x3] %v686
      %v689 = vld [vmem:[#allocation2] ss:$2 sm:$0x1f]
      %s690 = scalar_lea.vmem [#allocation2], 1
      %v691 = vld [vmem:[%s690] ss:$2 sm:$0x1f]
      %v692 = vmax.f32 %v689, %v691
      %v693 = vld [vmem:[%s2] sm:$0x1]
      %v695 = vlaneseq
      %v696 = vshrl.u32 %v695, 7
      %v697 = vsub.s32 0, %v696
      %v698 = vrot.slane %v693, %v697
      %v700 = vadd.f32 %v692, %v698
      %v701 = vpack.c.bf16 %v700, %v700
      %vm702 = vcmask 1042432
      %vm703 = vsmask.f32 2304
      %vm704 = vmand %vm702, %vm703
      %v705 = vld [vmem:[%s209] sm:$0x7]
      %v706 = vsel %vm704, %v701, %v705
      %707 = vst [vmem:[%s209] sm:$0x7] %v706
      %p708 = scmp.lt.s32.totalorder %s18, 1
      %s709 = scalar_select %p708, %s18, 1
      %p710 = scmp.lt.s32.totalorder %s19, 4
      %s711 = scalar_select %p710, %s19, 4
      %s712 = smul.addr %s709, 5
      %s713 = sadd.s32 %s711, %s712
      %s714 = smul.addr %s713, 4
      %s715 = scalar_lea.vmem %s3, %s714
      // Predicated region
      $region33: #{net_forward.4} parent=31 // pred_check
        %p716 = pneg %p116
      $region34: #{net_forward.4} parent=31 // pred_check_branch
        %718 = sbr.rel (%p716) target = $region36
      $region35: #{net_forward.4} parent=31 // pred_region
        _
      $region36: #{net_forward.4} parent=31 // pred_fallthru
        _
    $region32: #{net_forward.4} parent=5 // pred_fallthru
      _
    %p719 = scmp.le.s32.totalorder 2, %s9
    // Predicated region
    $region37: #{net_forward.4} parent=5 // pred_check
      %p720 = pneg %p719
    $region38: #{net_forward.4} parent=5 // pred_check_branch
      %722 = sbr.rel (%p720) target = $region40
    $region39: #{net_forward.4} parent=5 // pred_region
      %s723 = ssub.s32 %s9, 2
      // Predicated region
      $region41: #{net_forward.4} parent=39 // pred_check
        %p724 = pneg %p122
      $region42: #{net_forward.4} parent=39 // pred_check_branch
        %726 = sbr.rel (%p724) target = $region44
      $region43: #{net_forward.4} parent=39 // pred_region
        %p727 = scmp.lt.s32.totalorder %s20, 1
        %s728 = scalar_select %p727, %s20, 1
        %p729 = scmp.lt.s32.totalorder %s21, 4
        %s730 = scalar_select %p729, %s21, 4
        %s731 = smul.addr %s728, 5
        %s732 = sadd.s32 %s730, %s731
        %s733 = smul.addr %s732, 4
        %s734 = scalar_lea.vmem %s3, %s733
      $region44: #{net_forward.4} parent=39 // pred_fallthru
        _
    $region40: #{net_forward.4} parent=5 // pred_fallthru
      _
  $region6: #{net_forward.4} parent=0 // loop_footer
    %s13 = sadd.s32 1, %s9
  $region7: #{net_forward.4} parent=0 // loop_footer_branch
    %8 = sbr.rel target = $region3
  $region8: #{net_forward.4} parent=0 // loop_exit
    _

// kernel: net_forward.5
$region0: #{net_forward.5}
  #allocation0 [shape = 'u32[]', space=smem, size = 0x4, offset = 0x4, fixed_abs, tag = 'smem constant byte address 0x4 - core index']
  #allocation1 [shape = 'u32[144,128]{1,0:T(1,128)}', space=vmem, size = 0x12000, scoped, tag = 'internal scratch']
  %s0 = inlined_call_operand.vmem [shape: bf16[2,3200], index: 0, kind: input, shape index: {}]
  %s1 = inlined_call_operand.vmem [shape: bf16[3200,512], index: 1, kind: input, shape index: {}]
  %s2 = inlined_call_operand.vmem [shape: f32[1,512], index: 2, kind: input, shape index: {}]
  %s3 = inlined_call_operand.vmem [shape: bf16[512,128], index: 3, kind: input, shape index: {}]
  %s4 = inlined_call_operand.vmem [shape: f32[1,128], index: 4, kind: input, shape index: {}]
  %s5 = inlined_call_operand.hbm [shape: f32[2,128], index: 5, kind: output, shape index: {}]
  %s6 = sld [smem:[#allocation0]]
  $region30: #{net_forward.5} parent=0
    _
  %s8 = ssub.s32 1, %s6
  %s9 = scalar_select 0, %s8, %s6
  $region1: #{net_forward.5} parent=0
    #allocation2 [shape = 'u8[1024]{0}', space=vmem, size = 0x400, scoped, tag = 'output window, operand 0, single buffered']
    #allocation3 [shape = 's32[1]{0}', space=sflag, size = 0x4, scoped, tag = 'scoped memory for net_forward.5']
    %10 = vsyncpa [#allocation3], 0
    // Predicated region
    $region2: #{net_forward.5} parent=1 // pred_check
      _
    $region3: #{net_forward.5} parent=1 // pred_check_branch
      %12 = sbr.rel (0) target = $region5
    $region4: #{net_forward.5} parent=1 // pred_region
      _
    $region5: #{net_forward.5} parent=1 // pred_fallthru
      _
    // Predicated region
    $region6: #{net_forward.5} parent=1 // pred_check
      _
    $region7: #{net_forward.5} parent=1 // pred_check_branch
      %14 = sbr.rel (0) target = $region9
    $region8: #{net_forward.5} parent=1 // pred_region
      _
    $region9: #{net_forward.5} parent=1 // pred_fallthru
      _
    // Predicated region
    $region10: #{net_forward.5} parent=1 // pred_check
      _
    $region11: #{net_forward.5} parent=1 // pred_check_branch
      %16 = sbr.rel (0) target = $region13
    $region12: #{net_forward.5} parent=1 // pred_region
      _
    $region13: #{net_forward.5} parent=1 // pred_fallthru
      _
    // Predicated region
    $region14: #{net_forward.5} parent=1 // pred_check
      _
    $region15: #{net_forward.5} parent=1 // pred_check_branch
      %18 = sbr.rel (0) target = $region17
    $region16: #{net_forward.5} parent=1 // pred_region
      _
    $region17: #{net_forward.5} parent=1 // pred_fallthru
      _
    // Predicated region
    $region18: #{net_forward.5} parent=1 // pred_check
      _
    $region19: #{net_forward.5} parent=1 // pred_check_branch
      %20 = sbr.rel (0) target = $region21
    $region20: #{net_forward.5} parent=1 // pred_region
      _
    $region21: #{net_forward.5} parent=1 // pred_fallthru
      _
    %v22 = vld [vmem:[%s0] sm:$0xff]
    %v23 = vld [vmem:[%s0 + $0x8] sm:$0xff]
    %v24 = vld [vmem:[%s0 + $0x10] sm:$0xff]
    %v25 = vld [vmem:[%s0 + $0x18] sm:$0x1]
    %v26 = vld [vmem:[%s1] sm:$0xff]
    %v27 = vld [vmem:[%s1 + $0x8] sm:$0xff]
    %v28 = vld [vmem:[%s1 + $0x10] sm:$0xff]
    %v29 = vld [vmem:[%s1 + $0x18] sm:$0xff]
    %v30 = vld [vmem:[%s1 + $0x20] sm:$0xff]
    %v31 = vld [vmem:[%s1 + $0x28] sm:$0xff]
    %v32 = vld [vmem:[%s1 + $0x30] sm:$0xff]
    %v33 = vld [vmem:[%s1 + $0x38] sm:$0xff]
    %v34 = vld [vmem:[%s1 + $0x40] sm:$0xff]
    %v35 = vld [vmem:[%s1 + $0x48] sm:$0xff]
    %v36 = vld [vmem:[%s1 + $0x50] sm:$0xff]
    %v37 = vld [vmem:[%s1 + $0x58] sm:$0xff]
    %v38 = vld [vmem:[%s1 + $0x60] sm:$0xff]
    %v39 = vld [vmem:[%s1 + $0x68] sm:$0xff]
    %v40 = vld [vmem:[%s1 + $0x70] sm:$0xff]
    %v41 = vld [vmem:[%s1 + $0x78] sm:$0xff]
    %v42 = vld [vmem:[%s1 + $0x80] sm:$0xff]
    %v43 = vld [vmem:[%s1 + $0x88] sm:$0xff]
    %v44 = vld [vmem:[%s1 + $0x90] sm:$0xff]
    %v45 = vld [vmem:[%s1 + $0x98] sm:$0xff]
    %v46 = vld [vmem:[%s1 + $0xa0] sm:$0xff]
    %v47 = vld [vmem:[%s1 + $0xa8] sm:$0xff]
    %v48 = vld [vmem:[%s1 + $0xb0] sm:$0xff]
    %v49 = vld [vmem:[%s1 + $0xb8] sm:$0xff]
    %v50 = vld [vmem:[%s1 + $0xc0] sm:$0xff]
    %v51 = vld [vmem:[%s1 + $0xc8] sm:$0xff]
    %v52 = vld [vmem:[%s1 + $0xd0] sm:$0xff]
    %v53 = vld [vmem:[%s1 + $0xd8] sm:$0xff]
    %v54 = vld [vmem:[%s1 + $0xe0] sm:$0xff]
    %v55 = vld [vmem:[%s1 + $0xe8] sm:$0xff]
    %v56 = vld [vmem:[%s1 + $0xf0] sm:$0xff]
    %v57 = vld [vmem:[%s1 + $0xf8] sm:$0xff]
    %v58 = vld [vmem:[%s1 + $0x100] sm:$0xff]
    %v59 = vld [vmem:[%s1 + $0x108] sm:$0xff]
    %v60 = vld [vmem:[%s1 + $0x110] sm:$0xff]
    %v61 = vld [vmem:[%s1 + $0x118] sm:$0xff]
    %v62 = vld [vmem:[%s1 + $0x120] sm:$0xff]
    %v63 = vld [vmem:[%s1 + $0x128] sm:$0xff]
    %v64 = vld [vmem:[%s1 + $0x130] sm:$0xff]
    %v65 = vld [vmem:[%s1 + $0x138] sm:$0xff]
    %v66 = vld [vmem:[%s1 + $0x140] sm:$0xff]
    %v67 = vld [vmem:[%s1 + $0x148] sm:$0xff]
    %v68 = vld [vmem:[%s1 + $0x150] sm:$0xff]
    %v69 = vld [vmem:[%s1 + $0x158] sm:$0xff]
    %v70 = vld [vmem:[%s1 + $0x160] sm:$0xff]
    %v71 = vld [vmem:[%s1 + $0x168] sm:$0xff]
    %v72 = vld [vmem:[%s1 + $0x170] sm:$0xff]
    %v73 = vld [vmem:[%s1 + $0x178] sm:$0xff]
    %v74 = vld [vmem:[%s1 + $0x180] sm:$0xff]
    %v75 = vld [vmem:[%s1 + $0x188] sm:$0xff]
    %v76 = vld [vmem:[%s1 + $0x190] sm:$0xff]
    %v77 = vld [vmem:[%s1 + $0x198] sm:$0xff]
    %v78 = vld [vmem:[%s1 + $0x1a0] sm:$0xff]
    %v79 = vld [vmem:[%s1 + $0x1a8] sm:$0xff]
    %v80 = vld [vmem:[%s1 + $0x1b0] sm:$0xff]
    %v81 = vld [vmem:[%s1 + $0x1b8] sm:$0xff]
    %v82 = vld [vmem:[%s1 + $0x1c0] sm:$0xff]
    %v83 = vld [vmem:[%s1 + $0x1c8] sm:$0xff]
    %v84 = vld [vmem:[%s1 + $0x1d0] sm:$0xff]
    %v85 = vld [vmem:[%s1 + $0x1d8] sm:$0xff]
    %v86 = vld [vmem:[%s1 + $0x1e0] sm:$0xff]
    %v87 = vld [vmem:[%s1 + $0x1e8] sm:$0xff]
    %v88 = vld [vmem:[%s1 + $0x1f0] sm:$0xff]
    %v89 = vld [vmem:[%s1 + $0x1f8] sm:$0xff]
    %v90 = vld [vmem:[%s1 + $0x200] sm:$0xff]
    %v91 = vld [vmem:[%s1 + $0x208] sm:$0xff]
    %v92 = vld [vmem:[%s1 + $0x210] sm:$0xff]
    %v93 = vld [vmem:[%s1 + $0x218] sm:$0xff]
    %v94 = vld [vmem:[%s1 + $0x220] sm:$0xff]
    %v95 = vld [vmem:[%s1 + $0x228] sm:$0xff]
    %v96 = vld [vmem:[%s1 + $0x230] sm:$0xff]
    %v97 = vld [vmem:[%s1 + $0x238] sm:$0xff]
    %v98 = vld [vmem:[%s1 + $0x240] sm:$0xff]
    %v99 = vld [vmem:[%s1 + $0x248] sm:$0xff]
    %v100 = vld [vmem:[%s1 + $0x250] sm:$0xff]
    %v101 = vld [vmem:[%s1 + $0x258] sm:$0xff]
    %v102 = vld [vmem:[%s1 + $0x260] sm:$0xff]
    %v103 = vld [vmem:[%s1 + $0x268] sm:$0xff]
    %v104 = vld [vmem:[%s1 + $0x270] sm:$0xff]
    %v105 = vld [vmem:[%s1 + $0x278] sm:$0xff]
    %v106 = vld [vmem:[%s1 + $0x280] sm:$0xff]
    %v107 = vld [vmem:[%s1 + $0x288] sm:$0xff]
    %v108 = vld [vmem:[%s1 + $0x290] sm:$0xff]
    %v109 = vld [vmem:[%s1 + $0x298] sm:$0xff]
    %v110 = vld [vmem:[%s1 + $0x2a0] sm:$0xff]
    %v111 = vld [vmem:[%s1 + $0x2a8] sm:$0xff]
    %v112 = vld [vmem:[%s1 + $0x2b0] sm:$0xff]
    %v113 = vld [vmem:[%s1 + $0x2b8] sm:$0xff]
    %v114 = vld [vmem:[%s1 + $0x2c0] sm:$0xff]
    %v115 = vld [vmem:[%s1 + $0x2c8] sm:$0xff]
    %v116 = vld [vmem:[%s1 + $0x2d0] sm:$0xff]
    %v117 = vld [vmem:[%s1 + $0x2d8] sm:$0xff]
    %v118 = vld [vmem:[%s1 + $0x2e0] sm:$0xff]
    %v119 = vld [vmem:[%s1 + $0x2e8] sm:$0xff]
    %v120 = vld [vmem:[%s1 + $0x2f0] sm:$0xff]
    %v121 = vld [vmem:[%s1 + $0x2f8] sm:$0xff]
    %v122 = vld [vmem:[%s1 + $0x300] sm:$0xff]
    %v123 = vld [vmem:[%s1 + $0x308] sm:$0xff]
    %v124 = vld [vmem:[%s1 + $0x310] sm:$0xff]
    %v125 = vld [vmem:[%s1 + $0x318] sm:$0xff]
    %v126 = vld [vmem:[%s1 + $0x320] sm:$0xff]
    %v127 = vld [vmem:[%s1 + $0x328] sm:$0xff]
    %v128 = vld [vmem:[%s1 + $0x330] sm:$0xff]
    %v129 = vld [vmem:[%s1 + $0x338] sm:$0xff]
    %v130 = vld [vmem:[%s1 + $0x340] sm:$0xff]
    %v131 = vld [vmem:[%s1 + $0x348] sm:$0xff]
    %v132 = vld [vmem:[%s1 + $0x350] sm:$0xff]
    %v133 = vld [vmem:[%s1 + $0x358] sm:$0xff]
    %v134 = vld [vmem:[%s1 + $0x360] sm:$0xff]
    %v135 = vld [vmem:[%s1 + $0x368] sm:$0xff]
    %v136 = vld [vmem:[%s1 + $0x370] sm:$0xff]
    %v137 = vld [vmem:[%s1 + $0x378] sm:$0xff]
    %v138 = vld [vmem:[%s1 + $0x380] sm:$0xff]
    %v139 = vld [vmem:[%s1 + $0x388] sm:$0xff]
    %v140 = vld [vmem:[%s1 + $0x390] sm:$0xff]
    %v141 = vld [vmem:[%s1 + $0x398] sm:$0xff]
    %v142 = vld [vmem:[%s1 + $0x3a0] sm:$0xff]
    %v143 = vld [vmem:[%s1 + $0x3a8] sm:$0xff]
    %v144 = vld [vmem:[%s1 + $0x3b0] sm:$0xff]
    %v145 = vld [vmem:[%s1 + $0x3b8] sm:$0xff]
    %v146 = vld [vmem:[%s1 + $0x3c0] sm:$0xff]
    %v147 = vld [vmem:[%s1 + $0x3c8] sm:$0xff]
    %v148 = vld [vmem:[%s1 + $0x3d0] sm:$0xff]
    %v149 = vld [vmem:[%s1 + $0x3d8] sm:$0xff]
    %v150 = vld [vmem:[%s1 + $0x3e0] sm:$0xff]
    %v151 = vld [vmem:[%s1 + $0x3e8] sm:$0xff]
    %v152 = vld [vmem:[%s1 + $0x3f0] sm:$0xff]
    %v153 = vld [vmem:[%s1 + $0x3f8] sm:$0xff]
    %v154 = vld [vmem:[%s1 + $0x400] sm:$0xff]
    %v155 = vld [vmem:[%s1 + $0x408] sm:$0xff]
    %v156 = vld [vmem:[%s1 + $0x410] sm:$0xff]
    %v157 = vld [vmem:[%s1 + $0x418] sm:$0xff]
    %v158 = vld [vmem:[%s1 + $0x420] sm:$0xff]
    %v159 = vld [vmem:[%s1 + $0x428] sm:$0xff]
    %v160 = vld [vmem:[%s1 + $0x430] sm:$0xff]
    %v161 = vld [vmem:[%s1 + $0x438] sm:$0xff]
    %v162 = vld [vmem:[%s1 + $0x440] sm:$0xff]
    %v163 = vld [vmem:[%s1 + $0x448] sm:$0xff]
    %v164 = vld [vmem:[%s1 + $0x450] sm:$0xff]
    %v165 = vld [vmem:[%s1 + $0x458] sm:$0xff]
    %v166 = vld [vmem:[%s1 + $0x460] sm:$0xff]
    %v167 = vld [vmem:[%s1 + $0x468] sm:$0xff]
    %v168 = vld [vmem:[%s1 + $0x470] sm:$0xff]
    %v169 = vld [vmem:[%s1 + $0x478] sm:$0xff]
    %v170 = vld [vmem:[%s1 + $0x480] sm:$0xff]
    %v171 = vld [vmem:[%s1 + $0x488] sm:$0xff]
    %v172 = vld [vmem:[%s1 + $0x490] sm:$0xff]
    %v173 = vld [vmem:[%s1 + $0x498] sm:$0xff]
    %v174 = vld [vmem:[%s1 + $0x4a0] sm:$0xff]
    %v175 = vld [vmem:[%s1 + $0x4a8] sm:$0xff]
    %v176 = vld [vmem:[%s1 + $0x4b0] sm:$0xff]
    %v177 = vld [vmem:[%s1 + $0x4b8] sm:$0xff]
    %v178 = vld [vmem:[%s1 + $0x4c0] sm:$0xff]
    %v179 = vld [vmem:[%s1 + $0x4c8] sm:$0xff]
    %v180 = vld [vmem:[%s1 + $0x4d0] sm:$0xff]
    %v181 = vld [vmem:[%s1 + $0x4d8] sm:$0xff]
    %v182 = vld [vmem:[%s1 + $0x4e0] sm:$0xff]
    %v183 = vld [vmem:[%s1 + $0x4e8] sm:$0xff]
    %v184 = vld [vmem:[%s1 + $0x4f0] sm:$0xff]
    %v185 = vld [vmem:[%s1 + $0x4f8] sm:$0xff]
    %v186 = vld [vmem:[%s1 + $0x500] sm:$0xff]
    %v187 = vld [vmem:[%s1 + $0x508] sm:$0xff]
    %v188 = vld [vmem:[%s1 + $0x510] sm:$0xff]
    %v189 = vld [vmem:[%s1 + $0x518] sm:$0xff]
    %v190 = vld [vmem:[%s1 + $0x520] sm:$0xff]
    %v191 = vld [vmem:[%s1 + $0x528] sm:$0xff]
    %v192 = vld [vmem:[%s1 + $0x530] sm:$0xff]
    %v193 = vld [vmem:[%s1 + $0x538] sm:$0xff]
    %v194 = vld [vmem:[%s1 + $0x540] sm:$0xff]
    %v195 = vld [vmem:[%s1 + $0x548] sm:$0xff]
    %v196 = vld [vmem:[%s1 + $0x550] sm:$0xff]
    %v197 = vld [vmem:[%s1 + $0x558] sm:$0xff]
    %v198 = vld [vmem:[%s1 + $0x560] sm:$0xff]
    %v199 = vld [vmem:[%s1 + $0x568] sm:$0xff]
    %v200 = vld [vmem:[%s1 + $0x570] sm:$0xff]
    %v201 = vld [vmem:[%s1 + $0x578] sm:$0xff]
    %v202 = vld [vmem:[%s1 + $0x580] sm:$0xff]
    %v203 = vld [vmem:[%s1 + $0x588] sm:$0xff]
    %v204 = vld [vmem:[%s1 + $0x590] sm:$0xff]
    %v205 = vld [vmem:[%s1 + $0x598] sm:$0xff]
    %v206 = vld [vmem:[%s1 + $0x5a0] sm:$0xff]
    %v207 = vld [vmem:[%s1 + $0x5a8] sm:$0xff]
    %v208 = vld [vmem:[%s1 + $0x5b0] sm:$0xff]
    %v209 = vld [vmem:[%s1 + $0x5b8] sm:$0xff]
    %v210 = vld [vmem:[%s1 + $0x5c0] sm:$0xff]
    %v211 = vld [vmem:[%s1 + $0x5c8] sm:$0xff]
    %v212 = vld [vmem:[%s1 + $0x5d0] sm:$0xff]
    %v213 = vld [vmem:[%s1 + $0x5d8] sm:$0xff]
    %v214 = vld [vmem:[%s1 + $0x5e0] sm:$0xff]
    %v215 = vld [vmem:[%s1 + $0x5e8] sm:$0xff]
    %v216 = vld [vmem:[%s1 + $0x5f0] sm:$0xff]
    %v217 = vld [vmem:[%s1 + $0x5f8] sm:$0xff]
    %v218 = vld [vmem:[%s1 + $0x600] sm:$0xff]
    %v219 = vld [vmem:[%s1 + $0x608] sm:$0xff]
    %v220 = vld [vmem:[%s1 + $0x610] sm:$0xff]
    %v221 = vld [vmem:[%s1 + $0x618] sm:$0xff]
    %v222 = vld [vmem:[%s1 + $0x620] sm:$0xff]
    %v223 = vld [vmem:[%s1 + $0x628] sm:$0xff]
    %v224 = vld [vmem:[%s1 + $0x630] sm:$0xff]
    %v225 = vld [vmem:[%s1 + $0x638] sm:$0xff]
    %v226 = vld [vmem:[%s1 + $0x640] sm:$0xff]
    %v227 = vld [vmem:[%s1 + $0x648] sm:$0xff]
    %v228 = vld [vmem:[%s1 + $0x650] sm:$0xff]
    %v229 = vld [vmem:[%s1 + $0x658] sm:$0xff]
    %v230 = vld [vmem:[%s1 + $0x660] sm:$0xff]
    %v231 = vld [vmem:[%s1 + $0x668] sm:$0xff]
    %v232 = vld [vmem:[%s1 + $0x670] sm:$0xff]
    %v233 = vld [vmem:[%s1 + $0x678] sm:$0xff]
    %v234 = vld [vmem:[%s1 + $0x680] sm:$0xff]
    %v235 = vld [vmem:[%s1 + $0x688] sm:$0xff]
    %v236 = vld [vmem:[%s1 + $0x690] sm:$0xff]
    %v237 = vld [vmem:[%s1 + $0x698] sm:$0xff]
    %v238 = vld [vmem:[%s1 + $0x6a0] sm:$0xff]
    %v239 = vld [vmem:[%s1 + $0x6a8] sm:$0xff]
    %v240 = vld [vmem:[%s1 + $0x6b0] sm:$0xff]
    %v241 = vld [vmem:[%s1 + $0x6b8] sm:$0xff]
    %v242 = vld [vmem:[%s1 + $0x6c0] sm:$0xff]
    %v243 = vld [vmem:[%s1 + $0x6c8] sm:$0xff]
    %v244 = vld [vmem:[%s1 + $0x6d0] sm:$0xff]
    %v245 = vld [vmem:[%s1 + $0x6d8] sm:$0xff]
    %v246 = vld [vmem:[%s1 + $0x6e0] sm:$0xff]
    %v247 = vld [vmem:[%s1 + $0x6e8] sm:$0xff]
    %v248 = vld [vmem:[%s1 + $0x6f0] sm:$0xff]
    %v249 = vld [vmem:[%s1 + $0x6f8] sm:$0xff]
    %v250 = vld [vmem:[%s1 + $0x700] sm:$0xff]
    %v251 = vld [vmem:[%s1 + $0x708] sm:$0xff]
    %v252 = vld [vmem:[%s1 + $0x710] sm:$0xff]
    %v253 = vld [vmem:[%s1 + $0x718] sm:$0xff]
    %v254 = vld [vmem:[%s1 + $0x720] sm:$0xff]
    %v255 = vld [vmem:[%s1 + $0x728] sm:$0xff]
    %v256 = vld [vmem:[%s1 + $0x730] sm:$0xff]
    %v257 = vld [vmem:[%s1 + $0x738] sm:$0xff]
    %v258 = vld [vmem:[%s1 + $0x740] sm:$0xff]
    %v259 = vld [vmem:[%s1 + $0x748] sm:$0xff]
    %v260 = vld [vmem:[%s1 + $0x750] sm:$0xff]
    %v261 = vld [vmem:[%s1 + $0x758] sm:$0xff]
    %v262 = vld [vmem:[%s1 + $0x760] sm:$0xff]
    %v263 = vld [vmem:[%s1 + $0x768] sm:$0xff]
    %v264 = vld [vmem:[%s1 + $0x770] sm:$0xff]
    %v265 = vld [vmem:[%s1 + $0x778] sm:$0xff]
    %v266 = vld [vmem:[%s1 + $0x780] sm:$0xff]
    %v267 = vld [vmem:[%s1 + $0x788] sm:$0xff]
    %v268 = vld [vmem:[%s1 + $0x790] sm:$0xff]
    %v269 = vld [vmem:[%s1 + $0x798] sm:$0xff]
    %v270 = vld [vmem:[%s1 + $0x7a0] sm:$0xff]
    %v271 = vld [vmem:[%s1 + $0x7a8] sm:$0xff]
    %v272 = vld [vmem:[%s1 + $0x7b0] sm:$0xff]
    %v273 = vld [vmem:[%s1 + $0x7b8] sm:$0xff]
    %v274 = vld [vmem:[%s1 + $0x7c0] sm:$0xff]
    %v275 = vld [vmem:[%s1 + $0x7c8] sm:$0xff]
    %v276 = vld [vmem:[%s1 + $0x7d0] sm:$0xff]
    %v277 = vld [vmem:[%s1 + $0x7d8] sm:$0xff]
    %v278 = vld [vmem:[%s1 + $0x7e0] sm:$0xff]
    %v279 = vld [vmem:[%s1 + $0x7e8] sm:$0xff]
    %v280 = vld [vmem:[%s1 + $0x7f0] sm:$0xff]
    %v281 = vld [vmem:[%s1 + $0x7f8] sm:$0xff]
    %v282 = vld [vmem:[%s1 + $0x800] sm:$0xff]
    %v283 = vld [vmem:[%s1 + $0x808] sm:$0xff]
    %v284 = vld [vmem:[%s1 + $0x810] sm:$0xff]
    %v285 = vld [vmem:[%s1 + $0x818] sm:$0xff]
    %v286 = vld [vmem:[%s1 + $0x820] sm:$0xff]
    %v287 = vld [vmem:[%s1 + $0x828] sm:$0xff]
    %v288 = vld [vmem:[%s1 + $0x830] sm:$0xff]
    %v289 = vld [vmem:[%s1 + $0x838] sm:$0xff]
    %v290 = vld [vmem:[%s1 + $0x840] sm:$0xff]
    %v291 = vld [vmem:[%s1 + $0x848] sm:$0xff]
    %v292 = vld [vmem:[%s1 + $0x850] sm:$0xff]
    %v293 = vld [vmem:[%s1 + $0x858] sm:$0xff]
    %v294 = vld [vmem:[%s1 + $0x860] sm:$0xff]
    %v295 = vld [vmem:[%s1 + $0x868] sm:$0xff]
    %v296 = vld [vmem:[%s1 + $0x870] sm:$0xff]
    %v297 = vld [vmem:[%s1 + $0x878] sm:$0xff]
    %v298 = vld [vmem:[%s1 + $0x880] sm:$0xff]
    %v299 = vld [vmem:[%s1 + $0x888] sm:$0xff]
    %v300 = vld [vmem:[%s1 + $0x890] sm:$0xff]
    %v301 = vld [vmem:[%s1 + $0x898] sm:$0xff]
    %v302 = vld [vmem:[%s1 + $0x8a0] sm:$0xff]
    %v303 = vld [vmem:[%s1 + $0x8a8] sm:$0xff]
    %v304 = vld [vmem:[%s1 + $0x8b0] sm:$0xff]
    %v305 = vld [vmem:[%s1 + $0x8b8] sm:$0xff]
    %v306 = vld [vmem:[%s1 + $0x8c0] sm:$0xff]
    %v307 = vld [vmem:[%s1 + $0x8c8] sm:$0xff]
    %v308 = vld [vmem:[%s1 + $0x8d0] sm:$0xff]
    %v309 = vld [vmem:[%s1 + $0x8d8] sm:$0xff]
    %v310 = vld [vmem:[%s1 + $0x8e0] sm:$0xff]
    %v311 = vld [vmem:[%s1 + $0x8e8] sm:$0xff]
    %v312 = vld [vmem:[%s1 + $0x8f0] sm:$0xff]
    %v313 = vld [vmem:[%s1 + $0x8f8] sm:$0xff]
    %v314 = vld [vmem:[%s1 + $0x900] sm:$0xff]
    %v315 = vld [vmem:[%s1 + $0x908] sm:$0xff]
    %v316 = vld [vmem:[%s1 + $0x910] sm:$0xff]
    %v317 = vld [vmem:[%s1 + $0x918] sm:$0xff]
    %v318 = vld [vmem:[%s1 + $0x920] sm:$0xff]
    %v319 = vld [vmem:[%s1 + $0x928] sm:$0xff]
    %v320 = vld [vmem:[%s1 + $0x930] sm:$0xff]
    %v321 = vld [vmem:[%s1 + $0x938] sm:$0xff]
    %v322 = vld [vmem:[%s1 + $0x940] sm:$0xff]
    %v323 = vld [vmem:[%s1 + $0x948] sm:$0xff]
    %v324 = vld [vmem:[%s1 + $0x950] sm:$0xff]
    %v325 = vld [vmem:[%s1 + $0x958] sm:$0xff]
    %v326 = vld [vmem:[%s1 + $0x960] sm:$0xff]
    %v327 = vld [vmem:[%s1 + $0x968] sm:$0xff]
    %v328 = vld [vmem:[%s1 + $0x970] sm:$0xff]
    %v329 = vld [vmem:[%s1 + $0x978] sm:$0xff]
    %v330 = vld [vmem:[%s1 + $0x980] sm:$0xff]
    %v331 = vld [vmem:[%s1 + $0x988] sm:$0xff]
    %v332 = vld [vmem:[%s1 + $0x990] sm:$0xff]
    %v333 = vld [vmem:[%s1 + $0x998] sm:$0xff]
    %v334 = vld [vmem:[%s1 + $0x9a0] sm:$0xff]
    %v335 = vld [vmem:[%s1 + $0x9a8] sm:$0xff]
    %v336 = vld [vmem:[%s1 + $0x9b0] sm:$0xff]
    %v337 = vld [vmem:[%s1 + $0x9b8] sm:$0xff]
    %v338 = vld [vmem:[%s1 + $0x9c0] sm:$0xff]
    %v339 = vld [vmem:[%s1 + $0x9c8] sm:$0xff]
    %v340 = vld [vmem:[%s1 + $0x9d0] sm:$0xff]
    %v341 = vld [vmem:[%s1 + $0x9d8] sm:$0xff]
    %v342 = vld [vmem:[%s1 + $0x9e0] sm:$0xff]
    %v343 = vld [vmem:[%s1 + $0x9e8] sm:$0xff]
    %v344 = vld [vmem:[%s1 + $0x9f0] sm:$0xff]
    %v345 = vld [vmem:[%s1 + $0x9f8] sm:$0xff]
    %v346 = vld [vmem:[%s1 + $0xa00] sm:$0xff]
    %v347 = vld [vmem:[%s1 + $0xa08] sm:$0xff]
    %v348 = vld [vmem:[%s1 + $0xa10] sm:$0xff]
    %v349 = vld [vmem:[%s1 + $0xa18] sm:$0xff]
    %v350 = vld [vmem:[%s1 + $0xa20] sm:$0xff]
    %v351 = vld [vmem:[%s1 + $0xa28] sm:$0xff]
    %v352 = vld [vmem:[%s1 + $0xa30] sm:$0xff]
    %v353 = vld [vmem:[%s1 + $0xa38] sm:$0xff]
    %v354 = vld [vmem:[%s1 + $0xa40] sm:$0xff]
    %v355 = vld [vmem:[%s1 + $0xa48] sm:$0xff]
    %v356 = vld [vmem:[%s1 + $0xa50] sm:$0xff]
    %v357 = vld [vmem:[%s1 + $0xa58] sm:$0xff]
    %v358 = vld [vmem:[%s1 + $0xa60] sm:$0xff]
    %v359 = vld [vmem:[%s1 + $0xa68] sm:$0xff]
    %v360 = vld [vmem:[%s1 + $0xa70] sm:$0xff]
    %v361 = vld [vmem:[%s1 + $0xa78] sm:$0xff]
    %v362 = vld [vmem:[%s1 + $0xa80] sm:$0xff]
    %v363 = vld [vmem:[%s1 + $0xa88] sm:$0xff]
    %v364 = vld [vmem:[%s1 + $0xa90] sm:$0xff]
    %v365 = vld [vmem:[%s1 + $0xa98] sm:$0xff]
    %v366 = vld [vmem:[%s1 + $0xaa0] sm:$0xff]
    %v367 = vld [vmem:[%s1 + $0xaa8] sm:$0xff]
    %v368 = vld [vmem:[%s1 + $0xab0] sm:$0xff]
    %v369 = vld [vmem:[%s1 + $0xab8] sm:$0xff]
    %v370 = vld [vmem:[%s1 + $0xac0] sm:$0xff]
    %v371 = vld [vmem:[%s1 + $0xac8] sm:$0xff]
    %v372 = vld [vmem:[%s1 + $0xad0] sm:$0xff]
    %v373 = vld [vmem:[%s1 + $0xad8] sm:$0xff]
    %v374 = vld [vmem:[%s1 + $0xae0] sm:$0xff]
    %v375 = vld [vmem:[%s1 + $0xae8] sm:$0xff]
    %v376 = vld [vmem:[%s1 + $0xaf0] sm:$0xff]
    %v377 = vld [vmem:[%s1 + $0xaf8] sm:$0xff]
    %v378 = vld [vmem:[%s1 + $0xb00] sm:$0xff]
    %v379 = vld [vmem:[%s1 + $0xb08] sm:$0xff]
    %v380 = vld [vmem:[%s1 + $0xb10] sm:$0xff]
    %v381 = vld [vmem:[%s1 + $0xb18] sm:$0xff]
    %v382 = vld [vmem:[%s1 + $0xb20] sm:$0xff]
    %v383 = vld [vmem:[%s1 + $0xb28] sm:$0xff]
    %v384 = vld [vmem:[%s1 + $0xb30] sm:$0xff]
    %v385 = vld [vmem:[%s1 + $0xb38] sm:$0xff]
    %v386 = vld [vmem:[%s1 + $0xb40] sm:$0xff]
    %v387 = vld [vmem:[%s1 + $0xb48] sm:$0xff]
    %v388 = vld [vmem:[%s1 + $0xb50] sm:$0xff]
    %v389 = vld [vmem:[%s1 + $0xb58] sm:$0xff]
    %v390 = vld [vmem:[%s1 + $0xb60] sm:$0xff]
    %v391 = vld [vmem:[%s1 + $0xb68] sm:$0xff]
    %v392 = vld [vmem:[%s1 + $0xb70] sm:$0xff]
    %v393 = vld [vmem:[%s1 + $0xb78] sm:$0xff]
    %v394 = vld [vmem:[%s1 + $0xb80] sm:$0xff]
    %v395 = vld [vmem:[%s1 + $0xb88] sm:$0xff]
    %v396 = vld [vmem:[%s1 + $0xb90] sm:$0xff]
    %v397 = vld [vmem:[%s1 + $0xb98] sm:$0xff]
    %v398 = vld [vmem:[%s1 + $0xba0] sm:$0xff]
    %v399 = vld [vmem:[%s1 + $0xba8] sm:$0xff]
    %v400 = vld [vmem:[%s1 + $0xbb0] sm:$0xff]
    %v401 = vld [vmem:[%s1 + $0xbb8] sm:$0xff]
    %v402 = vld [vmem:[%s1 + $0xbc0] sm:$0xff]
    %v403 = vld [vmem:[%s1 + $0xbc8] sm:$0xff]
    %v404 = vld [vmem:[%s1 + $0xbd0] sm:$0xff]
    %v405 = vld [vmem:[%s1 + $0xbd8] sm:$0xff]
    %v406 = vld [vmem:[%s1 + $0xbe0] sm:$0xff]
    %v407 = vld [vmem:[%s1 + $0xbe8] sm:$0xff]
    %v408 = vld [vmem:[%s1 + $0xbf0] sm:$0xff]
    %v409 = vld [vmem:[%s1 + $0xbf8] sm:$0xff]
    %v410 = vld [vmem:[%s1 + $0xc00] sm:$0xff]
    %v411 = vld [vmem:[%s1 + $0xc08] sm:$0xff]
    %v412 = vld [vmem:[%s1 + $0xc10] sm:$0xff]
    %v413 = vld [vmem:[%s1 + $0xc18] sm:$0xff]
    %v414 = vld [vmem:[%s1 + $0xc20] sm:$0xff]
    %v415 = vld [vmem:[%s1 + $0xc28] sm:$0xff]
    %v416 = vld [vmem:[%s1 + $0xc30] sm:$0xff]
    %v417 = vld [vmem:[%s1 + $0xc38] sm:$0xff]
    %v418 = vld [vmem:[%s1 + $0xc40] sm:$0xff]
    %v419 = vld [vmem:[%s1 + $0xc48] sm:$0xff]
    %v420 = vld [vmem:[%s1 + $0xc50] sm:$0xff]
    %v421 = vld [vmem:[%s1 + $0xc58] sm:$0xff]
    %v422 = vld [vmem:[%s1 + $0xc60] sm:$0xff]
    %v423 = vld [vmem:[%s1 + $0xc68] sm:$0xff]
    %v424 = vld [vmem:[%s1 + $0xc70] sm:$0xff]
    %v425 = vld [vmem:[%s1 + $0xc78] sm:$0xff]
    %v426 = vld [vmem:[%s1 + $0xc80] sm:$0xff]
    %v427 = vld [vmem:[%s1 + $0xc88] sm:$0xff]
    %v428 = vld [vmem:[%s1 + $0xc90] sm:$0xff]
    %v429 = vld [vmem:[%s1 + $0xc98] sm:$0xff]
    %v430 = vld [vmem:[%s1 + $0xca0] sm:$0xff]
    %v431 = vld [vmem:[%s1 + $0xca8] sm:$0xff]
    %v432 = vld [vmem:[%s1 + $0xcb0] sm:$0xff]
    %v433 = vld [vmem:[%s1 + $0xcb8] sm:$0xff]
    %v434 = vld [vmem:[%s1 + $0xcc0] sm:$0xff]
    %v435 = vld [vmem:[%s1 + $0xcc8] sm:$0xff]
    %v436 = vld [vmem:[%s1 + $0xcd0] sm:$0xff]
    %v437 = vld [vmem:[%s1 + $0xcd8] sm:$0xff]
    %v438 = vld [vmem:[%s1 + $0xce0] sm:$0xff]
    %v439 = vld [vmem:[%s1 + $0xce8] sm:$0xff]
    %v440 = vld [vmem:[%s1 + $0xcf0] sm:$0xff]
    %v441 = vld [vmem:[%s1 + $0xcf8] sm:$0xff]
    %v442 = vld [vmem:[%s1 + $0xd00] sm:$0xff]
    %v443 = vld [vmem:[%s1 + $0xd08] sm:$0xff]
    %v444 = vld [vmem:[%s1 + $0xd10] sm:$0xff]
    %v445 = vld [vmem:[%s1 + $0xd18] sm:$0xff]
    %v446 = vld [vmem:[%s1 + $0xd20] sm:$0xff]
    %v447 = vld [vmem:[%s1 + $0xd28] sm:$0xff]
    %v448 = vld [vmem:[%s1 + $0xd30] sm:$0xff]
    %v449 = vld [vmem:[%s1 + $0xd38] sm:$0xff]
    %v450 = vld [vmem:[%s1 + $0xd40] sm:$0xff]
    %v451 = vld [vmem:[%s1 + $0xd48] sm:$0xff]
    %v452 = vld [vmem:[%s1 + $0xd50] sm:$0xff]
    %v453 = vld [vmem:[%s1 + $0xd58] sm:$0xff]
    %v454 = vld [vmem:[%s1 + $0xd60] sm:$0xff]
    %v455 = vld [vmem:[%s1 + $0xd68] sm:$0xff]
    %v456 = vld [vmem:[%s1 + $0xd70] sm:$0xff]
    %v457 = vld [vmem:[%s1 + $0xd78] sm:$0xff]
    %v458 = vld [vmem:[%s1 + $0xd80] sm:$0xff]
    %v459 = vld [vmem:[%s1 + $0xd88] sm:$0xff]
    %v460 = vld [vmem:[%s1 + $0xd90] sm:$0xff]
    %v461 = vld [vmem:[%s1 + $0xd98] sm:$0xff]
    %v462 = vld [vmem:[%s1 + $0xda0] sm:$0xff]
    %v463 = vld [vmem:[%s1 + $0xda8] sm:$0xff]
    %v464 = vld [vmem:[%s1 + $0xdb0] sm:$0xff]
    %v465 = vld [vmem:[%s1 + $0xdb8] sm:$0xff]
    %v466 = vld [vmem:[%s1 + $0xdc0] sm:$0xff]
    %v467 = vld [vmem:[%s1 + $0xdc8] sm:$0xff]
    %v468 = vld [vmem:[%s1 + $0xdd0] sm:$0xff]
    %v469 = vld [vmem:[%s1 + $0xdd8] sm:$0xff]
    %v470 = vld [vmem:[%s1 + $0xde0] sm:$0xff]
    %v471 = vld [vmem:[%s1 + $0xde8] sm:$0xff]
    %v472 = vld [vmem:[%s1 + $0xdf0] sm:$0xff]
    %v473 = vld [vmem:[%s1 + $0xdf8] sm:$0xff]
    %v474 = vld [vmem:[%s1 + $0xe00] sm:$0xff]
    %v475 = vld [vmem:[%s1 + $0xe08] sm:$0xff]
    %v476 = vld [vmem:[%s1 + $0xe10] sm:$0xff]
    %v477 = vld [vmem:[%s1 + $0xe18] sm:$0xff]
    %v478 = vld [vmem:[%s1 + $0xe20] sm:$0xff]
    %v479 = vld [vmem:[%s1 + $0xe28] sm:$0xff]
    %v480 = vld [vmem:[%s1 + $0xe30] sm:$0xff]
    %v481 = vld [vmem:[%s1 + $0xe38] sm:$0xff]
    %v482 = vld [vmem:[%s1 + $0xe40] sm:$0xff]
    %v483 = vld [vmem:[%s1 + $0xe48] sm:$0xff]
    %v484 = vld [vmem:[%s1 + $0xe50] sm:$0xff]
    %v485 = vld [vmem:[%s1 + $0xe58] sm:$0xff]
    %v486 = vld [vmem:[%s1 + $0xe60] sm:$0xff]
    %v487 = vld [vmem:[%s1 + $0xe68] sm:$0xff]
    %v488 = vld [vmem:[%s1 + $0xe70] sm:$0xff]
    %v489 = vld [vmem:[%s1 + $0xe78] sm:$0xff]
    %v490 = vld [vmem:[%s1 + $0xe80] sm:$0xff]
    %v491 = vld [vmem:[%s1 + $0xe88] sm:$0xff]
    %v492 = vld [vmem:[%s1 + $0xe90] sm:$0xff]
    %v493 = vld [vmem:[%s1 + $0xe98] sm:$0xff]
    %v494 = vld [vmem:[%s1 + $0xea0] sm:$0xff]
    %v495 = vld [vmem:[%s1 + $0xea8] sm:$0xff]
    %v496 = vld [vmem:[%s1 + $0xeb0] sm:$0xff]
    %v497 = vld [vmem:[%s1 + $0xeb8] sm:$0xff]
    %v498 = vld [vmem:[%s1 + $0xec0] sm:$0xff]
    %v499 = vld [vmem:[%s1 + $0xec8] sm:$0xff]
    %v500 = vld [vmem:[%s1 + $0xed0] sm:$0xff]
    %v501 = vld [vmem:[%s1 + $0xed8] sm:$0xff]
    %v502 = vld [vmem:[%s1 + $0xee0] sm:$0xff]
    %v503 = vld [vmem:[%s1 + $0xee8] sm:$0xff]
    %v504 = vld [vmem:[%s1 + $0xef0] sm:$0xff]
    %v505 = vld [vmem:[%s1 + $0xef8] sm:$0xff]
    %v506 = vld [vmem:[%s1 + $0xf00] sm:$0xff]
    %v507 = vld [vmem:[%s1 + $0xf08] sm:$0xff]
    %v508 = vld [vmem:[%s1 + $0xf10] sm:$0xff]
    %v509 = vld [vmem:[%s1 + $0xf18] sm:$0xff]
    %v510 = vld [vmem:[%s1 + $0xf20] sm:$0xff]
    %v511 = vld [vmem:[%s1 + $0xf28] sm:$0xff]
    %v512 = vld [vmem:[%s1 + $0xf30] sm:$0xff]
    %v513 = vld [vmem:[%s1 + $0xf38] sm:$0xff]
    %v514 = vld [vmem:[%s1 + $0xf40] sm:$0xff]
    %v515 = vld [vmem:[%s1 + $0xf48] sm:$0xff]
    %v516 = vld [vmem:[%s1 + $0xf50] sm:$0xff]
    %v517 = vld [vmem:[%s1 + $0xf58] sm:$0xff]
    %v518 = vld [vmem:[%s1 + $0xf60] sm:$0xff]
    %v519 = vld [vmem:[%s1 + $0xf68] sm:$0xff]
    %v520 = vld [vmem:[%s1 + $0xf70] sm:$0xff]
    %v521 = vld [vmem:[%s1 + $0xf78] sm:$0xff]
    %v522 = vld [vmem:[%s1 + $0xf80] sm:$0xff]
    %v523 = vld [vmem:[%s1 + $0xf88] sm:$0xff]
    %v524 = vld [vmem:[%s1 + $0xf90] sm:$0xff]
    %v525 = vld [vmem:[%s1 + $0xf98] sm:$0xff]
    %v526 = vld [vmem:[%s1 + $0xfa0] sm:$0xff]
    %v527 = vld [vmem:[%s1 + $0xfa8] sm:$0xff]
    %v528 = vld [vmem:[%s1 + $0xfb0] sm:$0xff]
    %v529 = vld [vmem:[%s1 + $0xfb8] sm:$0xff]
    %v530 = vld [vmem:[%s1 + $0xfc0] sm:$0xff]
    %v531 = vld [vmem:[%s1 + $0xfc8] sm:$0xff]
    %v532 = vld [vmem:[%s1 + $0xfd0] sm:$0xff]
    %v533 = vld [vmem:[%s1 + $0xfd8] sm:$0xff]
    %v534 = vld [vmem:[%s1 + $0xfe0] sm:$0xff]
    %v535 = vld [vmem:[%s1 + $0xfe8] sm:$0xff]
    %v536 = vld [vmem:[%s1 + $0xff0] sm:$0xff]
    %v537 = vld [vmem:[%s1 + $0xff8] sm:$0xff]
    %v538 = vld [vmem:[%s1 + $0x1000] sm:$0xff]
    %v539 = vld [vmem:[%s1 + $0x1008] sm:$0xff]
    %v540 = vld [vmem:[%s1 + $0x1010] sm:$0xff]
    %v541 = vld [vmem:[%s1 + $0x1018] sm:$0xff]
    %v542 = vld [vmem:[%s1 + $0x1020] sm:$0xff]
    %v543 = vld [vmem:[%s1 + $0x1028] sm:$0xff]
    %v544 = vld [vmem:[%s1 + $0x1030] sm:$0xff]
    %v545 = vld [vmem:[%s1 + $0x1038] sm:$0xff]
    %v546 = vld [vmem:[%s1 + $0x1040] sm:$0xff]
    %v547 = vld [vmem:[%s1 + $0x1048] sm:$0xff]
    %v548 = vld [vmem:[%s1 + $0x1050] sm:$0xff]
    %v549 = vld [vmem:[%s1 + $0x1058] sm:$0xff]
    %v550 = vld [vmem:[%s1 + $0x1060] sm:$0xff]
    %v551 = vld [vmem:[%s1 + $0x1068] sm:$0xff]
    %v552 = vld [vmem:[%s1 + $0x1070] sm:$0xff]
    %v553 = vld [vmem:[%s1 + $0x1078] sm:$0xff]
    %v554 = vld [vmem:[%s1 + $0x1080] sm:$0xff]
    %v555 = vld [vmem:[%s1 + $0x1088] sm:$0xff]
    %v556 = vld [vmem:[%s1 + $0x1090] sm:$0xff]
    %v557 = vld [vmem:[%s1 + $0x1098] sm:$0xff]
    %v558 = vld [vmem:[%s1 + $0x10a0] sm:$0xff]
    %v559 = vld [vmem:[%s1 + $0x10a8] sm:$0xff]
    %v560 = vld [vmem:[%s1 + $0x10b0] sm:$0xff]
    %v561 = vld [vmem:[%s1 + $0x10b8] sm:$0xff]
    %v562 = vld [vmem:[%s1 + $0x10c0] sm:$0xff]
    %v563 = vld [vmem:[%s1 + $0x10c8] sm:$0xff]
    %v564 = vld [vmem:[%s1 + $0x10d0] sm:$0xff]
    %v565 = vld [vmem:[%s1 + $0x10d8] sm:$0xff]
    %v566 = vld [vmem:[%s1 + $0x10e0] sm:$0xff]
    %v567 = vld [vmem:[%s1 + $0x10e8] sm:$0xff]
    %v568 = vld [vmem:[%s1 + $0x10f0] sm:$0xff]
    %v569 = vld [vmem:[%s1 + $0x10f8] sm:$0xff]
    %v570 = vld [vmem:[%s1 + $0x1100] sm:$0xff]
    %v571 = vld [vmem:[%s1 + $0x1108] sm:$0xff]
    %v572 = vld [vmem:[%s1 + $0x1110] sm:$0xff]
    %v573 = vld [vmem:[%s1 + $0x1118] sm:$0xff]
    %v574 = vld [vmem:[%s1 + $0x1120] sm:$0xff]
    %v575 = vld [vmem:[%s1 + $0x1128] sm:$0xff]
    %v576 = vld [vmem:[%s1 + $0x1130] sm:$0xff]
    %v577 = vld [vmem:[%s1 + $0x1138] sm:$0xff]
    %v578 = vld [vmem:[%s1 + $0x1140] sm:$0xff]
    %v579 = vld [vmem:[%s1 + $0x1148] sm:$0xff]
    %v580 = vld [vmem:[%s1 + $0x1150] sm:$0xff]
    %v581 = vld [vmem:[%s1 + $0x1158] sm:$0xff]
    %v582 = vld [vmem:[%s1 + $0x1160] sm:$0xff]
    %v583 = vld [vmem:[%s1 + $0x1168] sm:$0xff]
    %v584 = vld [vmem:[%s1 + $0x1170] sm:$0xff]
    %v585 = vld [vmem:[%s1 + $0x1178] sm:$0xff]
    %v586 = vld [vmem:[%s1 + $0x1180] sm:$0xff]
    %v587 = vld [vmem:[%s1 + $0x1188] sm:$0xff]
    %v588 = vld [vmem:[%s1 + $0x1190] sm:$0xff]
    %v589 = vld [vmem:[%s1 + $0x1198] sm:$0xff]
    %v590 = vld [vmem:[%s1 + $0x11a0] sm:$0xff]
    %v591 = vld [vmem:[%s1 + $0x11a8] sm:$0xff]
    %v592 = vld [vmem:[%s1 + $0x11b0] sm:$0xff]
    %v593 = vld [vmem:[%s1 + $0x11b8] sm:$0xff]
    %v594 = vld [vmem:[%s1 + $0x11c0] sm:$0xff]
    %v595 = vld [vmem:[%s1 + $0x11c8] sm:$0xff]
    %v596 = vld [vmem:[%s1 + $0x11d0] sm:$0xff]
    %v597 = vld [vmem:[%s1 + $0x11d8] sm:$0xff]
    %v598 = vld [vmem:[%s1 + $0x11e0] sm:$0xff]
    %v599 = vld [vmem:[%s1 + $0x11e8] sm:$0xff]
    %v600 = vld [vmem:[%s1 + $0x11f0] sm:$0xff]
    %v601 = vld [vmem:[%s1 + $0x11f8] sm:$0xff]
    %v602 = vld [vmem:[%s1 + $0x1200] sm:$0xff]
    %v603 = vld [vmem:[%s1 + $0x1208] sm:$0xff]
    %v604 = vld [vmem:[%s1 + $0x1210] sm:$0xff]
    %v605 = vld [vmem:[%s1 + $0x1218] sm:$0xff]
    %v606 = vld [vmem:[%s1 + $0x1220] sm:$0xff]
    %v607 = vld [vmem:[%s1 + $0x1228] sm:$0xff]
    %v608 = vld [vmem:[%s1 + $0x1230] sm:$0xff]
    %v609 = vld [vmem:[%s1 + $0x1238] sm:$0xff]
    %v610 = vld [vmem:[%s1 + $0x1240] sm:$0xff]
    %v611 = vld [vmem:[%s1 + $0x1248] sm:$0xff]
    %v612 = vld [vmem:[%s1 + $0x1250] sm:$0xff]
    %v613 = vld [vmem:[%s1 + $0x1258] sm:$0xff]
    %v614 = vld [vmem:[%s1 + $0x1260] sm:$0xff]
    %v615 = vld [vmem:[%s1 + $0x1268] sm:$0xff]
    %v616 = vld [vmem:[%s1 + $0x1270] sm:$0xff]
    %v617 = vld [vmem:[%s1 + $0x1278] sm:$0xff]
    %v618 = vld [vmem:[%s1 + $0x1280] sm:$0xff]
    %v619 = vld [vmem:[%s1 + $0x1288] sm:$0xff]
    %v620 = vld [vmem:[%s1 + $0x1290] sm:$0xff]
    %v621 = vld [vmem:[%s1 + $0x1298] sm:$0xff]
    %v622 = vld [vmem:[%s1 + $0x12a0] sm:$0xff]
    %v623 = vld [vmem:[%s1 + $0x12a8] sm:$0xff]
    %v624 = vld [vmem:[%s1 + $0x12b0] sm:$0xff]
    %v625 = vld [vmem:[%s1 + $0x12b8] sm:$0xff]
    %v626 = vld [vmem:[%s1 + $0x12c0] sm:$0xff]
    %v627 = vld [vmem:[%s1 + $0x12c8] sm:$0xff]
    %v628 = vld [vmem:[%s1 + $0x12d0] sm:$0xff]
    %v629 = vld [vmem:[%s1 + $0x12d8] sm:$0xff]
    %v630 = vld [vmem:[%s1 + $0x12e0] sm:$0xff]
    %v631 = vld [vmem:[%s1 + $0x12e8] sm:$0xff]
    %v632 = vld [vmem:[%s1 + $0x12f0] sm:$0xff]
    %v633 = vld [vmem:[%s1 + $0x12f8] sm:$0xff]
    %v634 = vld [vmem:[%s1 + $0x1300] sm:$0xff]
    %v635 = vld [vmem:[%s1 + $0x1308] sm:$0xff]
    %v636 = vld [vmem:[%s1 + $0x1310] sm:$0xff]
    %v637 = vld [vmem:[%s1 + $0x1318] sm:$0xff]
    %v638 = vld [vmem:[%s1 + $0x1320] sm:$0xff]
    %v639 = vld [vmem:[%s1 + $0x1328] sm:$0xff]
    %v640 = vld [vmem:[%s1 + $0x1330] sm:$0xff]
    %v641 = vld [vmem:[%s1 + $0x1338] sm:$0xff]
    %v642 = vld [vmem:[%s1 + $0x1340] sm:$0xff]
    %v643 = vld [vmem:[%s1 + $0x1348] sm:$0xff]
    %v644 = vld [vmem:[%s1 + $0x1350] sm:$0xff]
    %v645 = vld [vmem:[%s1 + $0x1358] sm:$0xff]
    %v646 = vld [vmem:[%s1 + $0x1360] sm:$0xff]
    %v647 = vld [vmem:[%s1 + $0x1368] sm:$0xff]
    %v648 = vld [vmem:[%s1 + $0x1370] sm:$0xff]
    %v649 = vld [vmem:[%s1 + $0x1378] sm:$0xff]
    %v650 = vld [vmem:[%s1 + $0x1380] sm:$0xff]
    %v651 = vld [vmem:[%s1 + $0x1388] sm:$0xff]
    %v652 = vld [vmem:[%s1 + $0x1390] sm:$0xff]
    %v653 = vld [vmem:[%s1 + $0x1398] sm:$0xff]
    %v654 = vld [vmem:[%s1 + $0x13a0] sm:$0xff]
    %v655 = vld [vmem:[%s1 + $0x13a8] sm:$0xff]
    %v656 = vld [vmem:[%s1 + $0x13b0] sm:$0xff]
    %v657 = vld [vmem:[%s1 + $0x13b8] sm:$0xff]
    %v658 = vld [vmem:[%s1 + $0x13c0] sm:$0xff]
    %v659 = vld [vmem:[%s1 + $0x13c8] sm:$0xff]
    %v660 = vld [vmem:[%s1 + $0x13d0] sm:$0xff]
    %v661 = vld [vmem:[%s1 + $0x13d8] sm:$0xff]
    %v662 = vld [vmem:[%s1 + $0x13e0] sm:$0xff]
    %v663 = vld [vmem:[%s1 + $0x13e8] sm:$0xff]
    %v664 = vld [vmem:[%s1 + $0x13f0] sm:$0xff]
    %v665 = vld [vmem:[%s1 + $0x13f8] sm:$0xff]
    %v666 = vld [vmem:[%s1 + $0x1400] sm:$0xff]
    %v667 = vld [vmem:[%s1 + $0x1408] sm:$0xff]
    %v668 = vld [vmem:[%s1 + $0x1410] sm:$0xff]
    %v669 = vld [vmem:[%s1 + $0x1418] sm:$0xff]
    %v670 = vld [vmem:[%s1 + $0x1420] sm:$0xff]
    %v671 = vld [vmem:[%s1 + $0x1428] sm:$0xff]
    %v672 = vld [vmem:[%s1 + $0x1430] sm:$0xff]
    %v673 = vld [vmem:[%s1 + $0x1438] sm:$0xff]
    %v674 = vld [vmem:[%s1 + $0x1440] sm:$0xff]
    %v675 = vld [vmem:[%s1 + $0x1448] sm:$0xff]
    %v676 = vld [vmem:[%s1 + $0x1450] sm:$0xff]
    %v677 = vld [vmem:[%s1 + $0x1458] sm:$0xff]
    %v678 = vld [vmem:[%s1 + $0x1460] sm:$0xff]
    %v679 = vld [vmem:[%s1 + $0x1468] sm:$0xff]
    %v680 = vld [vmem:[%s1 + $0x1470] sm:$0xff]
    %v681 = vld [vmem:[%s1 + $0x1478] sm:$0xff]
    %v682 = vld [vmem:[%s1 + $0x1480] sm:$0xff]
    %v683 = vld [vmem:[%s1 + $0x1488] sm:$0xff]
    %v684 = vld [vmem:[%s1 + $0x1490] sm:$0xff]
    %v685 = vld [vmem:[%s1 + $0x1498] sm:$0xff]
    %v686 = vld [vmem:[%s1 + $0x14a0] sm:$0xff]
    %v687 = vld [vmem:[%s1 + $0x14a8] sm:$0xff]
    %v688 = vld [vmem:[%s1 + $0x14b0] sm:$0xff]
    %v689 = vld [vmem:[%s1 + $0x14b8] sm:$0xff]
    %v690 = vld [vmem:[%s1 + $0x14c0] sm:$0xff]
    %v691 = vld [vmem:[%s1 + $0x14c8] sm:$0xff]
    %v692 = vld [vmem:[%s1 + $0x14d0] sm:$0xff]
    %v693 = vld [vmem:[%s1 + $0x14d8] sm:$0xff]
    %v694 = vld [vmem:[%s1 + $0x14e0] sm:$0xff]
    %v695 = vld [vmem:[%s1 + $0x14e8] sm:$0xff]
    %v696 = vld [vmem:[%s1 + $0x14f0] sm:$0xff]
    %v697 = vld [vmem:[%s1 + $0x14f8] sm:$0xff]
    %v698 = vld [vmem:[%s1 + $0x1500] sm:$0xff]
    %v699 = vld [vmem:[%s1 + $0x1508] sm:$0xff]
    %v700 = vld [vmem:[%s1 + $0x1510] sm:$0xff]
    %v701 = vld [vmem:[%s1 + $0x1518] sm:$0xff]
    %v702 = vld [vmem:[%s1 + $0x1520] sm:$0xff]
    %v703 = vld [vmem:[%s1 + $0x1528] sm:$0xff]
    %v704 = vld [vmem:[%s1 + $0x1530] sm:$0xff]
    %v705 = vld [vmem:[%s1 + $0x1538] sm:$0xff]
    %v706 = vld [vmem:[%s1 + $0x1540] sm:$0xff]
    %v707 = vld [vmem:[%s1 + $0x1548] sm:$0xff]
    %v708 = vld [vmem:[%s1 + $0x1550] sm:$0xff]
    %v709 = vld [vmem:[%s1 + $0x1558] sm:$0xff]
    %v710 = vld [vmem:[%s1 + $0x1560] sm:$0xff]
    %v711 = vld [vmem:[%s1 + $0x1568] sm:$0xff]
    %v712 = vld [vmem:[%s1 + $0x1570] sm:$0xff]
    %v713 = vld [vmem:[%s1 + $0x1578] sm:$0xff]
    %v714 = vld [vmem:[%s1 + $0x1580] sm:$0xff]
    %v715 = vld [vmem:[%s1 + $0x1588] sm:$0xff]
    %v716 = vld [vmem:[%s1 + $0x1590] sm:$0xff]
    %v717 = vld [vmem:[%s1 + $0x1598] sm:$0xff]
    %v718 = vld [vmem:[%s1 + $0x15a0] sm:$0xff]
    %v719 = vld [vmem:[%s1 + $0x15a8] sm:$0xff]
    %v720 = vld [vmem:[%s1 + $0x15b0] sm:$0xff]
    %v721 = vld [vmem:[%s1 + $0x15b8] sm:$0xff]
    %v722 = vld [vmem:[%s1 + $0x15c0] sm:$0xff]
    %v723 = vld [vmem:[%s1 + $0x15c8] sm:$0xff]
    %v724 = vld [vmem:[%s1 + $0x15d0] sm:$0xff]
    %v725 = vld [vmem:[%s1 + $0x15d8] sm:$0xff]
    %v726 = vld [vmem:[%s1 + $0x15e0] sm:$0xff]
    %v727 = vld [vmem:[%s1 + $0x15e8] sm:$0xff]
    %v728 = vld [vmem:[%s1 + $0x15f0] sm:$0xff]
    %v729 = vld [vmem:[%s1 + $0x15f8] sm:$0xff]
    %v730 = vld [vmem:[%s1 + $0x1600] sm:$0xff]
    %v731 = vld [vmem:[%s1 + $0x1608] sm:$0xff]
    %v732 = vld [vmem:[%s1 + $0x1610] sm:$0xff]
    %v733 = vld [vmem:[%s1 + $0x1618] sm:$0xff]
    %v734 = vld [vmem:[%s1 + $0x1620] sm:$0xff]
    %v735 = vld [vmem:[%s1 + $0x1628] sm:$0xff]
    %v736 = vld [vmem:[%s1 + $0x1630] sm:$0xff]
    %v737 = vld [vmem:[%s1 + $0x1638] sm:$0xff]
    %v738 = vld [vmem:[%s1 + $0x1640] sm:$0xff]
    %v739 = vld [vmem:[%s1 + $0x1648] sm:$0xff]
    %v740 = vld [vmem:[%s1 + $0x1650] sm:$0xff]
    %v741 = vld [vmem:[%s1 + $0x1658] sm:$0xff]
    %v742 = vld [vmem:[%s1 + $0x1660] sm:$0xff]
    %v743 = vld [vmem:[%s1 + $0x1668] sm:$0xff]
    %v744 = vld [vmem:[%s1 + $0x1670] sm:$0xff]
    %v745 = vld [vmem:[%s1 + $0x1678] sm:$0xff]
    %v746 = vld [vmem:[%s1 + $0x1680] sm:$0xff]
    %v747 = vld [vmem:[%s1 + $0x1688] sm:$0xff]
    %v748 = vld [vmem:[%s1 + $0x1690] sm:$0xff]
    %v749 = vld [vmem:[%s1 + $0x1698] sm:$0xff]
    %v750 = vld [vmem:[%s1 + $0x16a0] sm:$0xff]
    %v751 = vld [vmem:[%s1 + $0x16a8] sm:$0xff]
    %v752 = vld [vmem:[%s1 + $0x16b0] sm:$0xff]
    %v753 = vld [vmem:[%s1 + $0x16b8] sm:$0xff]
    %v754 = vld [vmem:[%s1 + $0x16c0] sm:$0xff]
    %v755 = vld [vmem:[%s1 + $0x16c8] sm:$0xff]
    %v756 = vld [vmem:[%s1 + $0x16d0] sm:$0xff]
    %v757 = vld [vmem:[%s1 + $0x16d8] sm:$0xff]
    %v758 = vld [vmem:[%s1 + $0x16e0] sm:$0xff]
    %v759 = vld [vmem:[%s1 + $0x16e8] sm:$0xff]
    %v760 = vld [vmem:[%s1 + $0x16f0] sm:$0xff]
    %v761 = vld [vmem:[%s1 + $0x16f8] sm:$0xff]
    %v762 = vld [vmem:[%s1 + $0x1700] sm:$0xff]
    %v763 = vld [vmem:[%s1 + $0x1708] sm:$0xff]
    %v764 = vld [vmem:[%s1 + $0x1710] sm:$0xff]
    %v765 = vld [vmem:[%s1 + $0x1718] sm:$0xff]
    %v766 = vld [vmem:[%s1 + $0x1720] sm:$0xff]
    %v767 = vld [vmem:[%s1 + $0x1728] sm:$0xff]
    %v768 = vld [vmem:[%s1 + $0x1730] sm:$0xff]
    %v769 = vld [vmem:[%s1 + $0x1738] sm:$0xff]
    %v770 = vld [vmem:[%s1 + $0x1740] sm:$0xff]
    %v771 = vld [vmem:[%s1 + $0x1748] sm:$0xff]
    %v772 = vld [vmem:[%s1 + $0x1750] sm:$0xff]
    %v773 = vld [vmem:[%s1 + $0x1758] sm:$0xff]
    %v774 = vld [vmem:[%s1 + $0x1760] sm:$0xff]
    %v775 = vld [vmem:[%s1 + $0x1768] sm:$0xff]
    %v776 = vld [vmem:[%s1 + $0x1770] sm:$0xff]
    %v777 = vld [vmem:[%s1 + $0x1778] sm:$0xff]
    %v778 = vld [vmem:[%s1 + $0x1780] sm:$0xff]
    %v779 = vld [vmem:[%s1 + $0x1788] sm:$0xff]
    %v780 = vld [vmem:[%s1 + $0x1790] sm:$0xff]
    %v781 = vld [vmem:[%s1 + $0x1798] sm:$0xff]
    %v782 = vld [vmem:[%s1 + $0x17a0] sm:$0xff]
    %v783 = vld [vmem:[%s1 + $0x17a8] sm:$0xff]
    %v784 = vld [vmem:[%s1 + $0x17b0] sm:$0xff]
    %v785 = vld [vmem:[%s1 + $0x17b8] sm:$0xff]
    %v786 = vld [vmem:[%s1 + $0x17c0] sm:$0xff]
    %v787 = vld [vmem:[%s1 + $0x17c8] sm:$0xff]
    %v788 = vld [vmem:[%s1 + $0x17d0] sm:$0xff]
    %v789 = vld [vmem:[%s1 + $0x17d8] sm:$0xff]
    %v790 = vld [vmem:[%s1 + $0x17e0] sm:$0xff]
    %v791 = vld [vmem:[%s1 + $0x17e8] sm:$0xff]
    %v792 = vld [vmem:[%s1 + $0x17f0] sm:$0xff]
    %v793 = vld [vmem:[%s1 + $0x17f8] sm:$0xff]
    %v794 = vld [vmem:[%s1 + $0x1800] sm:$0xff]
    %v795 = vld [vmem:[%s1 + $0x1808] sm:$0xff]
    %v796 = vld [vmem:[%s1 + $0x1810] sm:$0xff]
    %v797 = vld [vmem:[%s1 + $0x1818] sm:$0xff]
    %v798 = vld [vmem:[%s1 + $0x1820] sm:$0xff]
    %v799 = vld [vmem:[%s1 + $0x1828] sm:$0xff]
    %v800 = vld [vmem:[%s1 + $0x1830] sm:$0xff]
    %v801 = vld [vmem:[%s1 + $0x1838] sm:$0xff]
    %v802 = vld [vmem:[%s1 + $0x1840] sm:$0xff]
    %v803 = vld [vmem:[%s1 + $0x1848] sm:$0xff]
    %v804 = vld [vmem:[%s1 + $0x1850] sm:$0xff]
    %v805 = vld [vmem:[%s1 + $0x1858] sm:$0xff]
    %v806 = vld [vmem:[%s1 + $0x1860] sm:$0xff]
    %v807 = vld [vmem:[%s1 + $0x1868] sm:$0xff]
    %v808 = vld [vmem:[%s1 + $0x1870] sm:$0xff]
    %v809 = vld [vmem:[%s1 + $0x1878] sm:$0xff]
    %v810 = vld [vmem:[%s1 + $0x1880] sm:$0xff]
    %v811 = vld [vmem:[%s1 + $0x1888] sm:$0xff]
    %v812 = vld [vmem:[%s1 + $0x1890] sm:$0xff]
    %v813 = vld [vmem:[%s1 + $0x1898] sm:$0xff]
    %v814 = vld [vmem:[%s1 + $0x18a0] sm:$0xff]
    %v815 = vld [vmem:[%s1 + $0x18a8] sm:$0xff]
    %v816 = vld [vmem:[%s1 + $0x18b0] sm:$0xff]
    %v817 = vld [vmem:[%s1 + $0x18b8] sm:$0xff]
    %v818 = vld [vmem:[%s1 + $0x18c0] sm:$0xff]
    %v819 = vld [vmem:[%s1 + $0x18c8] sm:$0xff]
    %v820 = vld [vmem:[%s1 + $0x18d0] sm:$0xff]
    %v821 = vld [vmem:[%s1 + $0x18d8] sm:$0xff]
    %v822 = vld [vmem:[%s1 + $0x18e0] sm:$0xff]
    %v823 = vld [vmem:[%s1 + $0x18e8] sm:$0xff]
    %v824 = vld [vmem:[%s1 + $0x18f0] sm:$0xff]
    %v825 = vld [vmem:[%s1 + $0x18f8] sm:$0xff]
    %v826 = vld [vmem:[%s2] sm:$0xf]
    %v828 = vlaneseq
    %v829 = vshrl.u32 %v828, 7
    %v830 = vsub.s32 0, %v829
    %v831 = vrot.slane %v826, %v830
    %v832 = vlaneseq
    %v833 = vshrl.u32 %v832, 7
    %v834 = vsub.s32 1, %v833
    %v835 = vrot.slane %v826, %v834
    %v836 = vlaneseq
    %v837 = vshrl.u32 %v836, 7
    %v838 = vsub.s32 2, %v837
    %v839 = vrot.slane %v826, %v838
    %v840 = vlaneseq
    %v841 = vshrl.u32 %v840, 7
    %v842 = vsub.s32 3, %v841
    %v843 = vrot.slane %v826, %v842
    %v852 = vcombine.high %v22, %v22
    %v854 = vunpack.c.l.s4 1966171168
    %v855 = vunpack.c.0.s8 %v854
    %v856 = vlaneseq
    %v857 = vshrl.u32 %v856, 7
    %v858 = vsub.s32 %v855, %v857
    %v859 = vrot.slane %v22, %v858
    %v861 = vunpack.c.l.s4 1966171168
    %v862 = vunpack.c.0.s8 %v861
    %v863 = vlaneseq
    %v864 = vshrl.u32 %v863, 7
    %v865 = vsub.s32 %v862, %v864
    %v866 = vrot.slane %v852, %v865
    %v867 = vcombine.high %v859, %v859
    %v868 = vcombine.high %v866, %v866
    %v870 = vunpack.c.l.s4 1966171168
    %v871 = vunpack.c.0.s8 %v870
    %v872 = vlaneseq
    %v873 = vshrl.u32 %v872, 7
    %v874 = vsub.s32 %v871, %v873
    %v875 = vrot.slane %v859, %v874
    %v877 = vunpack.c.l.s4 1966171168
    %v878 = vunpack.c.0.s8 %v877
    %v879 = vlaneseq
    %v880 = vshrl.u32 %v879, 7
    %v881 = vsub.s32 %v878, %v880
    %v882 = vrot.slane %v866, %v881
    %v884 = vunpack.c.l.s4 1966171168
    %v885 = vunpack.c.0.s8 %v884
    %v886 = vlaneseq
    %v887 = vshrl.u32 %v886, 7
    %v888 = vsub.s32 %v885, %v887
    %v889 = vrot.slane %v867, %v888
    %v891 = vunpack.c.l.s4 1966171168
    %v892 = vunpack.c.0.s8 %v891
    %v893 = vlaneseq
    %v894 = vshrl.u32 %v893, 7
    %v895 = vsub.s32 %v892, %v894
    %v896 = vrot.slane %v868, %v895
    %v897 = vcombine.high %v875, %v875
    %v898 = vcombine.high %v882, %v882
    %v899 = vcombine.high %v889, %v889
    %v900 = vcombine.high %v896, %v896
    %v901 = vcombine.high %v23, %v23
    %v903 = vunpack.c.l.s4 1966171168
    %v904 = vunpack.c.0.s8 %v903
    %v905 = vlaneseq
    %v906 = vshrl.u32 %v905, 7
    %v907 = vsub.s32 %v904, %v906
    %v908 = vrot.slane %v23, %v907
    %v910 = vunpack.c.l.s4 1966171168
    %v911 = vunpack.c.0.s8 %v910
    %v912 = vlaneseq
    %v913 = vshrl.u32 %v912, 7
    %v914 = vsub.s32 %v911, %v913
    %v915 = vrot.slane %v901, %v914
    %v916 = vcombine.high %v908, %v908
    %v917 = vcombine.high %v915, %v915
    %v919 = vunpack.c.l.s4 1966171168
    %v920 = vunpack.c.0.s8 %v919
    %v921 = vlaneseq
    %v922 = vshrl.u32 %v921, 7
    %v923 = vsub.s32 %v920, %v922
    %v924 = vrot.slane %v908, %v923
    %v926 = vunpack.c.l.s4 1966171168
    %v927 = vunpack.c.0.s8 %v926
    %v928 = vlaneseq
    %v929 = vshrl.u32 %v928, 7
    %v930 = vsub.s32 %v927, %v929
    %v931 = vrot.slane %v915, %v930
    %v933 = vunpack.c.l.s4 1966171168
    %v934 = vunpack.c.0.s8 %v933
    %v935 = vlaneseq
    %v936 = vshrl.u32 %v935, 7
    %v937 = vsub.s32 %v934, %v936
    %v938 = vrot.slane %v916, %v937
    %v940 = vunpack.c.l.s4 1966171168
    %v941 = vunpack.c.0.s8 %v940
    %v942 = vlaneseq
    %v943 = vshrl.u32 %v942, 7
    %v944 = vsub.s32 %v941, %v943
    %v945 = vrot.slane %v917, %v944
    %v946 = vcombine.high %v924, %v924
    %v947 = vcombine.high %v931, %v931
    %v948 = vcombine.high %v938, %v938
    %v949 = vcombine.high %v945, %v945
    %v950 = vcombine.high %v24, %v24
    %v952 = vunpack.c.l.s4 1966171168
    %v953 = vunpack.c.0.s8 %v952
    %v954 = vlaneseq
    %v955 = vshrl.u32 %v954, 7
    %v956 = vsub.s32 %v953, %v955
    %v957 = vrot.slane %v24, %v956
    %v959 = vunpack.c.l.s4 1966171168
    %v960 = vunpack.c.0.s8 %v959
    %v961 = vlaneseq
    %v962 = vshrl.u32 %v961, 7
    %v963 = vsub.s32 %v960, %v962
    %v964 = vrot.slane %v950, %v963
    %v965 = vcombine.high %v957, %v957
    %v966 = vcombine.high %v964, %v964
    %v968 = vunpack.c.l.s4 1966171168
    %v969 = vunpack.c.0.s8 %v968
    %v970 = vlaneseq
    %v971 = vshrl.u32 %v970, 7
    %v972 = vsub.s32 %v969, %v971
    %v973 = vrot.slane %v957, %v972
    %v975 = vunpack.c.l.s4 1966171168
    %v976 = vunpack.c.0.s8 %v975
    %v977 = vlaneseq
    %v978 = vshrl.u32 %v977, 7
    %v979 = vsub.s32 %v976, %v978
    %v980 = vrot.slane %v964, %v979
    %v982 = vunpack.c.l.s4 1966171168
    %v983 = vunpack.c.0.s8 %v982
    %v984 = vlaneseq
    %v985 = vshrl.u32 %v984, 7
    %v986 = vsub.s32 %v983, %v985
    %v987 = vrot.slane %v965, %v986
    %v989 = vunpack.c.l.s4 1966171168
    %v990 = vunpack.c.0.s8 %v989
    %v991 = vlaneseq
    %v992 = vshrl.u32 %v991, 7
    %v993 = vsub.s32 %v990, %v992
    %v994 = vrot.slane %v966, %v993
    %v995 = vcombine.high %v973, %v973
    %v996 = vcombine.high %v980, %v980
    %v997 = vcombine.high %v987, %v987
    %v998 = vcombine.high %v994, %v994
    %v1000 = vunpack.c.l.s4 1966171168
    %v1001 = vunpack.c.0.s8 %v1000
    %v1002 = vlaneseq
    %v1003 = vshrl.u32 %v1002, 7
    %v1004 = vsub.s32 %v1001, %v1003
    %v1005 = vrot.slane %v25, %v1004
    %v1007 = vunpack.c.l.s4 1966171168
    %v1008 = vunpack.c.0.s8 %v1007
    %v1009 = vlaneseq
    %v1010 = vshrl.u32 %v1009, 7
    %v1011 = vsub.s32 %v1008, %v1010
    %v1012 = vrot.slane %v1005, %v1011
    %v1838 = vunpack.c.l.b16 %v26
    %v1839 = vunpack.c.h.b16 %v26
    %v1840 = vunpack.c.l.b16 %v27
    %v1841 = vunpack.c.h.b16 %v27
    %v1842 = vunpack.c.l.b16 %v28
    %v1843 = vunpack.c.h.b16 %v28
    %v1844 = vunpack.c.l.b16 %v29
    %v1845 = vunpack.c.h.b16 %v29
    %v1846 = vunpack.c.l.b16 %v30
    %v1847 = vunpack.c.h.b16 %v30
    %v1848 = vunpack.c.l.b16 %v31
    %v1849 = vunpack.c.h.b16 %v31
    %v1850 = vunpack.c.l.b16 %v32
    %v1851 = vunpack.c.h.b16 %v32
    %v1852 = vunpack.c.l.b16 %v33
    %v1853 = vunpack.c.h.b16 %v33
    %v1854 = vunpack.c.l.b16 %v34
    %v1855 = vunpack.c.h.b16 %v34
    %v1856 = vunpack.c.l.b16 %v35
    %v1857 = vunpack.c.h.b16 %v35
    %v1858 = vunpack.c.l.b16 %v36
    %v1859 = vunpack.c.h.b16 %v36
    %v1860 = vunpack.c.l.b16 %v37
    %v1861 = vunpack.c.h.b16 %v37
    %v1862 = vunpack.c.l.b16 %v38
    %v1863 = vunpack.c.h.b16 %v38
    %v1864 = vunpack.c.l.b16 %v39
    %v1865 = vunpack.c.h.b16 %v39
    %v1866 = vunpack.c.l.b16 %v40
    %v1867 = vunpack.c.h.b16 %v40
    %v1868 = vunpack.c.l.b16 %v41
    %v1869 = vunpack.c.h.b16 %v41
    %v1870 = vunpack.c.l.b16 %v42
    %v1871 = vunpack.c.h.b16 %v42
    %v1872 = vunpack.c.l.b16 %v43
    %v1873 = vunpack.c.h.b16 %v43
    %v1874 = vunpack.c.l.b16 %v44
    %v1875 = vunpack.c.h.b16 %v44
    %v1876 = vunpack.c.l.b16 %v45
    %v1877 = vunpack.c.h.b16 %v45
    %v1878 = vunpack.c.l.b16 %v46
    %v1879 = vunpack.c.h.b16 %v46
    %v1880 = vunpack.c.l.b16 %v47
    %v1881 = vunpack.c.h.b16 %v47
    %v1882 = vunpack.c.l.b16 %v48
    %v1883 = vunpack.c.h.b16 %v48
    %v1884 = vunpack.c.l.b16 %v49
    %v1885 = vunpack.c.h.b16 %v49
    %v1886 = vunpack.c.l.b16 %v50
    %v1887 = vunpack.c.h.b16 %v50
    %v1888 = vunpack.c.l.b16 %v51
    %v1889 = vunpack.c.h.b16 %v51
    %v1890 = vunpack.c.l.b16 %v52
    %v1891 = vunpack.c.h.b16 %v52
    %v1892 = vunpack.c.l.b16 %v53
    %v1893 = vunpack.c.h.b16 %v53
    %v1894 = vunpack.c.l.b16 %v54
    %v1895 = vunpack.c.h.b16 %v54
    %v1896 = vunpack.c.l.b16 %v55
    %v1897 = vunpack.c.h.b16 %v55
    %v1898 = vunpack.c.l.b16 %v56
    %v1899 = vunpack.c.h.b16 %v56
    %v1900 = vunpack.c.l.b16 %v57
    %v1901 = vunpack.c.h.b16 %v57
    %v1902 = vunpack.c.l.b16 %v58
    %v1903 = vunpack.c.h.b16 %v58
    %v1904 = vunpack.c.l.b16 %v59
    %v1905 = vunpack.c.h.b16 %v59
    %v1906 = vunpack.c.l.b16 %v60
    %v1907 = vunpack.c.h.b16 %v60
    %v1908 = vunpack.c.l.b16 %v61
    %v1909 = vunpack.c.h.b16 %v61
    %v1910 = vunpack.c.l.b16 %v62
    %v1911 = vunpack.c.h.b16 %v62
    %v1912 = vunpack.c.l.b16 %v63
    %v1913 = vunpack.c.h.b16 %v63
    %v1914 = vunpack.c.l.b16 %v64
    %v1915 = vunpack.c.h.b16 %v64
    %v1916 = vunpack.c.l.b16 %v65
    %v1917 = vunpack.c.h.b16 %v65
    %v1918 = vunpack.c.l.b16 %v66
    %v1919 = vunpack.c.h.b16 %v66
    %v1920 = vunpack.c.l.b16 %v67
    %v1921 = vunpack.c.h.b16 %v67
    %v1922 = vunpack.c.l.b16 %v68
    %v1923 = vunpack.c.h.b16 %v68
    %v1924 = vunpack.c.l.b16 %v69
    %v1925 = vunpack.c.h.b16 %v69
    %v1926 = vunpack.c.l.b16 %v70
    %v1927 = vunpack.c.h.b16 %v70
    %v1928 = vunpack.c.l.b16 %v71
    %v1929 = vunpack.c.h.b16 %v71
    %v1930 = vunpack.c.l.b16 %v72
    %v1931 = vunpack.c.h.b16 %v72
    %v1932 = vunpack.c.l.b16 %v73
    %v1933 = vunpack.c.h.b16 %v73
    %v1934 = vunpack.c.l.b16 %v74
    %v1935 = vunpack.c.h.b16 %v74
    %v1936 = vunpack.c.l.b16 %v75
    %v1937 = vunpack.c.h.b16 %v75
    %v1938 = vunpack.c.l.b16 %v76
    %v1939 = vunpack.c.h.b16 %v76
    %v1940 = vunpack.c.l.b16 %v77
    %v1941 = vunpack.c.h.b16 %v77
    %v1942 = vunpack.c.l.b16 %v78
    %v1943 = vunpack.c.h.b16 %v78
    %v1944 = vunpack.c.l.b16 %v79
    %v1945 = vunpack.c.h.b16 %v79
    %v1946 = vunpack.c.l.b16 %v80
    %v1947 = vunpack.c.h.b16 %v80
    %v1948 = vunpack.c.l.b16 %v81
    %v1949 = vunpack.c.h.b16 %v81
    %v1950 = vunpack.c.l.b16 %v82
    %v1951 = vunpack.c.h.b16 %v82
    %v1952 = vunpack.c.l.b16 %v83
    %v1953 = vunpack.c.h.b16 %v83
    %v1954 = vunpack.c.l.b16 %v84
    %v1955 = vunpack.c.h.b16 %v84
    %v1956 = vunpack.c.l.b16 %v85
    %v1957 = vunpack.c.h.b16 %v85
    %v1958 = vunpack.c.l.b16 %v86
    %v1959 = vunpack.c.h.b16 %v86
    %v1960 = vunpack.c.l.b16 %v87
    %v1961 = vunpack.c.h.b16 %v87
    %v1962 = vunpack.c.l.b16 %v88
    %v1963 = vunpack.c.h.b16 %v88
    %v1964 = vunpack.c.l.b16 %v89
    %v1965 = vunpack.c.h.b16 %v89
    %v1966 = vunpack.c.l.b16 %v90
    %v1967 = vunpack.c.h.b16 %v90
    %v1968 = vunpack.c.l.b16 %v91
    %v1969 = vunpack.c.h.b16 %v91
    %v1970 = vunpack.c.l.b16 %v92
    %v1971 = vunpack.c.h.b16 %v92
    %v1972 = vunpack.c.l.b16 %v93
    %v1973 = vunpack.c.h.b16 %v93
    %v1974 = vunpack.c.l.b16 %v94
    %v1975 = vunpack.c.h.b16 %v94
    %v1976 = vunpack.c.l.b16 %v95
    %v1977 = vunpack.c.h.b16 %v95
    %v1978 = vunpack.c.l.b16 %v96
    %v1979 = vunpack.c.h.b16 %v96
    %v1980 = vunpack.c.l.b16 %v97
    %v1981 = vunpack.c.h.b16 %v97
    %v1982 = vunpack.c.l.b16 %v98
    %v1983 = vunpack.c.h.b16 %v98
    %v1984 = vunpack.c.l.b16 %v99
    %v1985 = vunpack.c.h.b16 %v99
    %v1986 = vunpack.c.l.b16 %v100
    %v1987 = vunpack.c.h.b16 %v100
    %v1988 = vunpack.c.l.b16 %v101
    %v1989 = vunpack.c.h.b16 %v101
    %v1990 = vunpack.c.l.b16 %v102
    %v1991 = vunpack.c.h.b16 %v102
    %v1992 = vunpack.c.l.b16 %v103
    %v1993 = vunpack.c.h.b16 %v103
    %v1994 = vunpack.c.l.b16 %v104
    %v1995 = vunpack.c.h.b16 %v104
    %v1996 = vunpack.c.l.b16 %v105
    %v1997 = vunpack.c.h.b16 %v105
    %v1998 = vunpack.c.l.b16 %v106
    %v1999 = vunpack.c.h.b16 %v106
    %v2000 = vunpack.c.l.b16 %v107
    %v2001 = vunpack.c.h.b16 %v107
    %v2002 = vunpack.c.l.b16 %v108
    %v2003 = vunpack.c.h.b16 %v108
    %v2004 = vunpack.c.l.b16 %v109
    %v2005 = vunpack.c.h.b16 %v109
    %v2006 = vunpack.c.l.b16 %v110
    %v2007 = vunpack.c.h.b16 %v110
    %v2008 = vunpack.c.l.b16 %v111
    %v2009 = vunpack.c.h.b16 %v111
    %v2010 = vunpack.c.l.b16 %v112
    %v2011 = vunpack.c.h.b16 %v112
    %v2012 = vunpack.c.l.b16 %v113
    %v2013 = vunpack.c.h.b16 %v113
    %v2014 = vunpack.c.l.b16 %v114
    %v2015 = vunpack.c.h.b16 %v114
    %v2016 = vunpack.c.l.b16 %v115
    %v2017 = vunpack.c.h.b16 %v115
    %v2018 = vunpack.c.l.b16 %v116
    %v2019 = vunpack.c.h.b16 %v116
    %v2020 = vunpack.c.l.b16 %v117
    %v2021 = vunpack.c.h.b16 %v117
    %v2022 = vunpack.c.l.b16 %v118
    %v2023 = vunpack.c.h.b16 %v118
    %v2024 = vunpack.c.l.b16 %v119
    %v2025 = vunpack.c.h.b16 %v119
    %v2026 = vunpack.c.l.b16 %v120
    %v2027 = vunpack.c.h.b16 %v120
    %v2028 = vunpack.c.l.b16 %v121
    %v2029 = vunpack.c.h.b16 %v121
    %v2030 = vunpack.c.l.b16 %v122
    %v2031 = vunpack.c.h.b16 %v122
    %v2032 = vunpack.c.l.b16 %v123
    %v2033 = vunpack.c.h.b16 %v123
    %v2034 = vunpack.c.l.b16 %v124
    %v2035 = vunpack.c.h.b16 %v124
    %v2036 = vunpack.c.l.b16 %v125
    %v2037 = vunpack.c.h.b16 %v125
    %v2038 = vunpack.c.l.b16 %v126
    %v2039 = vunpack.c.h.b16 %v126
    %v2040 = vunpack.c.l.b16 %v127
    %v2041 = vunpack.c.h.b16 %v127
    %v2042 = vunpack.c.l.b16 %v128
    %v2043 = vunpack.c.h.b16 %v128
    %v2044 = vunpack.c.l.b16 %v129
    %v2045 = vunpack.c.h.b16 %v129
    %v2046 = vunpack.c.l.b16 %v130
    %v2047 = vunpack.c.h.b16 %v130
    %v2048 = vunpack.c.l.b16 %v131
    %v2049 = vunpack.c.h.b16 %v131
    %v2050 = vunpack.c.l.b16 %v132
    %v2051 = vunpack.c.h.b16 %v132
    %v2052 = vunpack.c.l.b16 %v133
    %v2053 = vunpack.c.h.b16 %v133
    %v2054 = vunpack.c.l.b16 %v134
    %v2055 = vunpack.c.h.b16 %v134
    %v2056 = vunpack.c.l.b16 %v135
    %v2057 = vunpack.c.h.b16 %v135
    %v2058 = vunpack.c.l.b16 %v136
    %v2059 = vunpack.c.h.b16 %v136
    %v2060 = vunpack.c.l.b16 %v137
    %v2061 = vunpack.c.h.b16 %v137
    %v2062 = vunpack.c.l.b16 %v138
    %v2063 = vunpack.c.h.b16 %v138
    %v2064 = vunpack.c.l.b16 %v139
    %v2065 = vunpack.c.h.b16 %v139
    %v2066 = vunpack.c.l.b16 %v140
    %v2067 = vunpack.c.h.b16 %v140
    %v2068 = vunpack.c.l.b16 %v141
    %v2069 = vunpack.c.h.b16 %v141
    %v2070 = vunpack.c.l.b16 %v142
    %v2071 = vunpack.c.h.b16 %v142
    %v2072 = vunpack.c.l.b16 %v143
    %v2073 = vunpack.c.h.b16 %v143
    %v2074 = vunpack.c.l.b16 %v144
    %v2075 = vunpack.c.h.b16 %v144
    %v2076 = vunpack.c.l.b16 %v145
    %v2077 = vunpack.c.h.b16 %v145
    %v2078 = vunpack.c.l.b16 %v146
    %v2079 = vunpack.c.h.b16 %v146
    %v2080 = vunpack.c.l.b16 %v147
    %v2081 = vunpack.c.h.b16 %v147
    %v2082 = vunpack.c.l.b16 %v148
    %v2083 = vunpack.c.h.b16 %v148
    %v2084 = vunpack.c.l.b16 %v149
    %v2085 = vunpack.c.h.b16 %v149
    %v2086 = vunpack.c.l.b16 %v150
    %v2087 = vunpack.c.h.b16 %v150
    %v2088 = vunpack.c.l.b16 %v151
    %v2089 = vunpack.c.h.b16 %v151
    %v2090 = vunpack.c.l.b16 %v152
    %v2091 = vunpack.c.h.b16 %v152
    %v2092 = vunpack.c.l.b16 %v153
    %v2093 = vunpack.c.h.b16 %v153
    %v2094 = vunpack.c.l.b16 %v154
    %v2095 = vunpack.c.h.b16 %v154
    %v2096 = vunpack.c.l.b16 %v155
    %v2097 = vunpack.c.h.b16 %v155
    %v2098 = vunpack.c.l.b16 %v156
    %v2099 = vunpack.c.h.b16 %v156
    %v2100 = vunpack.c.l.b16 %v157
    %v2101 = vunpack.c.h.b16 %v157
    %v2102 = vunpack.c.l.b16 %v158
    %v2103 = vunpack.c.h.b16 %v158
    %v2104 = vunpack.c.l.b16 %v159
    %v2105 = vunpack.c.h.b16 %v159
    %v2106 = vunpack.c.l.b16 %v160
    %v2107 = vunpack.c.h.b16 %v160
    %v2108 = vunpack.c.l.b16 %v161
    %v2109 = vunpack.c.h.b16 %v161
    %v2110 = vunpack.c.l.b16 %v162
    %v2111 = vunpack.c.h.b16 %v162
    %v2112 = vunpack.c.l.b16 %v163
    %v2113 = vunpack.c.h.b16 %v163
    %v2114 = vunpack.c.l.b16 %v164
    %v2115 = vunpack.c.h.b16 %v164
    %v2116 = vunpack.c.l.b16 %v165
    %v2117 = vunpack.c.h.b16 %v165
    %v2118 = vunpack.c.l.b16 %v166
    %v2119 = vunpack.c.h.b16 %v166
    %v2120 = vunpack.c.l.b16 %v167
    %v2121 = vunpack.c.h.b16 %v167
    %v2122 = vunpack.c.l.b16 %v168
    %v2123 = vunpack.c.h.b16 %v168
    %v2124 = vunpack.c.l.b16 %v169
    %v2125 = vunpack.c.h.b16 %v169
    %v2126 = vunpack.c.l.b16 %v170
    %v2127 = vunpack.c.h.b16 %v170
    %v2128 = vunpack.c.l.b16 %v171
    %v2129 = vunpack.c.h.b16 %v171
    %v2130 = vunpack.c.l.b16 %v172
    %v2131 = vunpack.c.h.b16 %v172
    %v2132 = vunpack.c.l.b16 %v173
    %v2133 = vunpack.c.h.b16 %v173
    %v2134 = vunpack.c.l.b16 %v174
    %v2135 = vunpack.c.h.b16 %v174
    %v2136 = vunpack.c.l.b16 %v175
    %v2137 = vunpack.c.h.b16 %v175
    %v2138 = vunpack.c.l.b16 %v176
    %v2139 = vunpack.c.h.b16 %v176
    %v2140 = vunpack.c.l.b16 %v177
    %v2141 = vunpack.c.h.b16 %v177
    %v2142 = vunpack.c.l.b16 %v178
    %v2143 = vunpack.c.h.b16 %v178
    %v2144 = vunpack.c.l.b16 %v179
    %v2145 = vunpack.c.h.b16 %v179
    %v2146 = vunpack.c.l.b16 %v180
    %v2147 = vunpack.c.h.b16 %v180
    %v2148 = vunpack.c.l.b16 %v181
    %v2149 = vunpack.c.h.b16 %v181
    %v2150 = vunpack.c.l.b16 %v182
    %v2151 = vunpack.c.h.b16 %v182
    %v2152 = vunpack.c.l.b16 %v183
    %v2153 = vunpack.c.h.b16 %v183
    %v2154 = vunpack.c.l.b16 %v184
    %v2155 = vunpack.c.h.b16 %v184
    %v2156 = vunpack.c.l.b16 %v185
    %v2157 = vunpack.c.h.b16 %v185
    %v2158 = vunpack.c.l.b16 %v186
    %v2159 = vunpack.c.h.b16 %v186
    %v2160 = vunpack.c.l.b16 %v187
    %v2161 = vunpack.c.h.b16 %v187
    %v2162 = vunpack.c.l.b16 %v188
    %v2163 = vunpack.c.h.b16 %v188
    %v2164 = vunpack.c.l.b16 %v189
    %v2165 = vunpack.c.h.b16 %v189
    %v2166 = vunpack.c.l.b16 %v190
    %v2167 = vunpack.c.h.b16 %v190
    %v2168 = vunpack.c.l.b16 %v191
    %v2169 = vunpack.c.h.b16 %v191
    %v2170 = vunpack.c.l.b16 %v192
    %v2171 = vunpack.c.h.b16 %v192
    %v2172 = vunpack.c.l.b16 %v193
    %v2173 = vunpack.c.h.b16 %v193
    %v2174 = vunpack.c.l.b16 %v194
    %v2175 = vunpack.c.h.b16 %v194
    %v2176 = vunpack.c.l.b16 %v195
    %v2177 = vunpack.c.h.b16 %v195
    %v2178 = vunpack.c.l.b16 %v196
    %v2179 = vunpack.c.h.b16 %v196
    %v2180 = vunpack.c.l.b16 %v197
    %v2181 = vunpack.c.h.b16 %v197
    %v2182 = vunpack.c.l.b16 %v198
    %v2183 = vunpack.c.h.b16 %v198
    %v2184 = vunpack.c.l.b16 %v199
    %v2185 = vunpack.c.h.b16 %v199
    %v2186 = vunpack.c.l.b16 %v200
    %v2187 = vunpack.c.h.b16 %v200
    %v2188 = vunpack.c.l.b16 %v201
    %v2189 = vunpack.c.h.b16 %v201
    %v2190 = vunpack.c.l.b16 %v202
    %v2191 = vunpack.c.h.b16 %v202
    %v2192 = vunpack.c.l.b16 %v203
    %v2193 = vunpack.c.h.b16 %v203
    %v2194 = vunpack.c.l.b16 %v204
    %v2195 = vunpack.c.h.b16 %v204
    %v2196 = vunpack.c.l.b16 %v205
    %v2197 = vunpack.c.h.b16 %v205
    %v2198 = vunpack.c.l.b16 %v206
    %v2199 = vunpack.c.h.b16 %v206
    %v2200 = vunpack.c.l.b16 %v207
    %v2201 = vunpack.c.h.b16 %v207
    %v2202 = vunpack.c.l.b16 %v208
    %v2203 = vunpack.c.h.b16 %v208
    %v2204 = vunpack.c.l.b16 %v209
    %v2205 = vunpack.c.h.b16 %v209
    %v2206 = vunpack.c.l.b16 %v210
    %v2207 = vunpack.c.h.b16 %v210
    %v2208 = vunpack.c.l.b16 %v211
    %v2209 = vunpack.c.h.b16 %v211
    %v2210 = vunpack.c.l.b16 %v212
    %v2211 = vunpack.c.h.b16 %v212
    %v2212 = vunpack.c.l.b16 %v213
    %v2213 = vunpack.c.h.b16 %v213
    %v2214 = vunpack.c.l.b16 %v214
    %v2215 = vunpack.c.h.b16 %v214
    %v2216 = vunpack.c.l.b16 %v215
    %v2217 = vunpack.c.h.b16 %v215
    %v2218 = vunpack.c.l.b16 %v216
    %v2219 = vunpack.c.h.b16 %v216
    %v2220 = vunpack.c.l.b16 %v217
    %v2221 = vunpack.c.h.b16 %v217
    %v2222 = vunpack.c.l.b16 %v218
    %v2223 = vunpack.c.h.b16 %v218
    %v2224 = vunpack.c.l.b16 %v219
    %v2225 = vunpack.c.h.b16 %v219
    %v2226 = vunpack.c.l.b16 %v220
    %v2227 = vunpack.c.h.b16 %v220
    %v2228 = vunpack.c.l.b16 %v221
    %v2229 = vunpack.c.h.b16 %v221
    %v2230 = vunpack.c.l.b16 %v222
    %v2231 = vunpack.c.h.b16 %v222
    %v2232 = vunpack.c.l.b16 %v223
    %v2233 = vunpack.c.h.b16 %v223
    %v2234 = vunpack.c.l.b16 %v224
    %v2235 = vunpack.c.h.b16 %v224
    %v2236 = vunpack.c.l.b16 %v225
    %v2237 = vunpack.c.h.b16 %v225
    %v2238 = vunpack.c.l.b16 %v226
    %v2239 = vunpack.c.h.b16 %v226
    %v2240 = vunpack.c.l.b16 %v227
    %v2241 = vunpack.c.h.b16 %v227
    %v2242 = vunpack.c.l.b16 %v228
    %v2243 = vunpack.c.h.b16 %v228
    %v2244 = vunpack.c.l.b16 %v229
    %v2245 = vunpack.c.h.b16 %v229
    %v2246 = vunpack.c.l.b16 %v230
    %v2247 = vunpack.c.h.b16 %v230
    %v2248 = vunpack.c.l.b16 %v231
    %v2249 = vunpack.c.h.b16 %v231
    %v2250 = vunpack.c.l.b16 %v232
    %v2251 = vunpack.c.h.b16 %v232
    %v2252 = vunpack.c.l.b16 %v233
    %v2253 = vunpack.c.h.b16 %v233
    %v2254 = vunpack.c.l.b16 %v234
    %v2255 = vunpack.c.h.b16 %v234
    %v2256 = vunpack.c.l.b16 %v235
    %v2257 = vunpack.c.h.b16 %v235
    %v2258 = vunpack.c.l.b16 %v236
    %v2259 = vunpack.c.h.b16 %v236
    %v2260 = vunpack.c.l.b16 %v237
    %v2261 = vunpack.c.h.b16 %v237
    %v2262 = vunpack.c.l.b16 %v238
    %v2263 = vunpack.c.h.b16 %v238
    %v2264 = vunpack.c.l.b16 %v239
    %v2265 = vunpack.c.h.b16 %v239
    %v2266 = vunpack.c.l.b16 %v240
    %v2267 = vunpack.c.h.b16 %v240
    %v2268 = vunpack.c.l.b16 %v241
    %v2269 = vunpack.c.h.b16 %v241
    %v2270 = vunpack.c.l.b16 %v242
    %v2271 = vunpack.c.h.b16 %v242
    %v2272 = vunpack.c.l.b16 %v243
    %v2273 = vunpack.c.h.b16 %v243
    %v2274 = vunpack.c.l.b16 %v244
    %v2275 = vunpack.c.h.b16 %v244
    %v2276 = vunpack.c.l.b16 %v245
    %v2277 = vunpack.c.h.b16 %v245
    %v2278 = vunpack.c.l.b16 %v246
    %v2279 = vunpack.c.h.b16 %v246
    %v2280 = vunpack.c.l.b16 %v247
    %v2281 = vunpack.c.h.b16 %v247
    %v2282 = vunpack.c.l.b16 %v248
    %v2283 = vunpack.c.h.b16 %v248
    %v2284 = vunpack.c.l.b16 %v249
    %v2285 = vunpack.c.h.b16 %v249
    %v2286 = vunpack.c.l.b16 %v250
    %v2287 = vunpack.c.h.b16 %v250
    %v2288 = vunpack.c.l.b16 %v251
    %v2289 = vunpack.c.h.b16 %v251
    %v2290 = vunpack.c.l.b16 %v252
    %v2291 = vunpack.c.h.b16 %v252
    %v2292 = vunpack.c.l.b16 %v253
    %v2293 = vunpack.c.h.b16 %v253
    %v2294 = vunpack.c.l.b16 %v254
    %v2295 = vunpack.c.h.b16 %v254
    %v2296 = vunpack.c.l.b16 %v255
    %v2297 = vunpack.c.h.b16 %v255
    %v2298 = vunpack.c.l.b16 %v256
    %v2299 = vunpack.c.h.b16 %v256
    %v2300 = vunpack.c.l.b16 %v257
    %v2301 = vunpack.c.h.b16 %v257
    %v2302 = vunpack.c.l.b16 %v258
    %v2303 = vunpack.c.h.b16 %v258
    %v2304 = vunpack.c.l.b16 %v259
    %v2305 = vunpack.c.h.b16 %v259
    %v2306 = vunpack.c.l.b16 %v260
    %v2307 = vunpack.c.h.b16 %v260
    %v2308 = vunpack.c.l.b16 %v261
    %v2309 = vunpack.c.h.b16 %v261
    %v2310 = vunpack.c.l.b16 %v262
    %v2311 = vunpack.c.h.b16 %v262
    %v2312 = vunpack.c.l.b16 %v263
    %v2313 = vunpack.c.h.b16 %v263
    %v2314 = vunpack.c.l.b16 %v264
    %v2315 = vunpack.c.h.b16 %v264
    %v2316 = vunpack.c.l.b16 %v265
    %v2317 = vunpack.c.h.b16 %v265
    %v2318 = vunpack.c.l.b16 %v266
    %v2319 = vunpack.c.h.b16 %v266
    %v2320 = vunpack.c.l.b16 %v267
    %v2321 = vunpack.c.h.b16 %v267
    %v2322 = vunpack.c.l.b16 %v268
    %v2323 = vunpack.c.h.b16 %v268
    %v2324 = vunpack.c.l.b16 %v269
    %v2325 = vunpack.c.h.b16 %v269
    %v2326 = vunpack.c.l.b16 %v270
    %v2327 = vunpack.c.h.b16 %v270
    %v2328 = vunpack.c.l.b16 %v271
    %v2329 = vunpack.c.h.b16 %v271
    %v2330 = vunpack.c.l.b16 %v272
    %v2331 = vunpack.c.h.b16 %v272
    %v2332 = vunpack.c.l.b16 %v273
    %v2333 = vunpack.c.h.b16 %v273
    %v2334 = vunpack.c.l.b16 %v274
    %v2335 = vunpack.c.h.b16 %v274
    %v2336 = vunpack.c.l.b16 %v275
    %v2337 = vunpack.c.h.b16 %v275
    %v2338 = vunpack.c.l.b16 %v276
    %v2339 = vunpack.c.h.b16 %v276
    %v2340 = vunpack.c.l.b16 %v277
    %v2341 = vunpack.c.h.b16 %v277
    %v2342 = vunpack.c.l.b16 %v278
    %v2343 = vunpack.c.h.b16 %v278
    %v2344 = vunpack.c.l.b16 %v279
    %v2345 = vunpack.c.h.b16 %v279
    %v2346 = vunpack.c.l.b16 %v280
    %v2347 = vunpack.c.h.b16 %v280
    %v2348 = vunpack.c.l.b16 %v281
    %v2349 = vunpack.c.h.b16 %v281
    %v2350 = vunpack.c.l.b16 %v282
    %v2351 = vunpack.c.h.b16 %v282
    %v2352 = vunpack.c.l.b16 %v283
    %v2353 = vunpack.c.h.b16 %v283
    %v2354 = vunpack.c.l.b16 %v284
    %v2355 = vunpack.c.h.b16 %v284
    %v2356 = vunpack.c.l.b16 %v285
    %v2357 = vunpack.c.h.b16 %v285
    %v2358 = vunpack.c.l.b16 %v286
    %v2359 = vunpack.c.h.b16 %v286
    %v2360 = vunpack.c.l.b16 %v287
    %v2361 = vunpack.c.h.b16 %v287
    %v2362 = vunpack.c.l.b16 %v288
    %v2363 = vunpack.c.h.b16 %v288
    %v2364 = vunpack.c.l.b16 %v289
    %v2365 = vunpack.c.h.b16 %v289
    %v2366 = vunpack.c.l.b16 %v290
    %v2367 = vunpack.c.h.b16 %v290
    %v2368 = vunpack.c.l.b16 %v291
    %v2369 = vunpack.c.h.b16 %v291
    %v2370 = vunpack.c.l.b16 %v292
    %v2371 = vunpack.c.h.b16 %v292
    %v2372 = vunpack.c.l.b16 %v293
    %v2373 = vunpack.c.h.b16 %v293
    %v2374 = vunpack.c.l.b16 %v294
    %v2375 = vunpack.c.h.b16 %v294
    %v2376 = vunpack.c.l.b16 %v295
    %v2377 = vunpack.c.h.b16 %v295
    %v2378 = vunpack.c.l.b16 %v296
    %v2379 = vunpack.c.h.b16 %v296
    %v2380 = vunpack.c.l.b16 %v297
    %v2381 = vunpack.c.h.b16 %v297
    %v2382 = vunpack.c.l.b16 %v298
    %v2383 = vunpack.c.h.b16 %v298
    %v2384 = vunpack.c.l.b16 %v299
    %v2385 = vunpack.c.h.b16 %v299
    %v2386 = vunpack.c.l.b16 %v300
    %v2387 = vunpack.c.h.b16 %v300
    %v2388 = vunpack.c.l.b16 %v301
    %v2389 = vunpack.c.h.b16 %v301
    %v2390 = vunpack.c.l.b16 %v302
    %v2391 = vunpack.c.h.b16 %v302
    %v2392 = vunpack.c.l.b16 %v303
    %v2393 = vunpack.c.h.b16 %v303
    %v2394 = vunpack.c.l.b16 %v304
    %v2395 = vunpack.c.h.b16 %v304
    %v2396 = vunpack.c.l.b16 %v305
    %v2397 = vunpack.c.h.b16 %v305
    %v2398 = vunpack.c.l.b16 %v306
    %v2399 = vunpack.c.h.b16 %v306
    %v2400 = vunpack.c.l.b16 %v307
    %v2401 = vunpack.c.h.b16 %v307
    %v2402 = vunpack.c.l.b16 %v308
    %v2403 = vunpack.c.h.b16 %v308
    %v2404 = vunpack.c.l.b16 %v309
    %v2405 = vunpack.c.h.b16 %v309
    %v2406 = vunpack.c.l.b16 %v310
    %v2407 = vunpack.c.h.b16 %v310
    %v2408 = vunpack.c.l.b16 %v311
    %v2409 = vunpack.c.h.b16 %v311
    %v2410 = vunpack.c.l.b16 %v312
    %v2411 = vunpack.c.h.b16 %v312
    %v2412 = vunpack.c.l.b16 %v313
    %v2413 = vunpack.c.h.b16 %v313
    %v2414 = vunpack.c.l.b16 %v314
    %v2415 = vunpack.c.h.b16 %v314
    %v2416 = vunpack.c.l.b16 %v315
    %v2417 = vunpack.c.h.b16 %v315
    %v2418 = vunpack.c.l.b16 %v316
    %v2419 = vunpack.c.h.b16 %v316
    %v2420 = vunpack.c.l.b16 %v317
    %v2421 = vunpack.c.h.b16 %v317
    %v2422 = vunpack.c.l.b16 %v318
    %v2423 = vunpack.c.h.b16 %v318
    %v2424 = vunpack.c.l.b16 %v319
    %v2425 = vunpack.c.h.b16 %v319
    %v2426 = vunpack.c.l.b16 %v320
    %v2427 = vunpack.c.h.b16 %v320
    %v2428 = vunpack.c.l.b16 %v321
    %v2429 = vunpack.c.h.b16 %v321
    %v2430 = vunpack.c.l.b16 %v322
    %v2431 = vunpack.c.h.b16 %v322
    %v2432 = vunpack.c.l.b16 %v323
    %v2433 = vunpack.c.h.b16 %v323
    %v2434 = vunpack.c.l.b16 %v324
    %v2435 = vunpack.c.h.b16 %v324
    %v2436 = vunpack.c.l.b16 %v325
    %v2437 = vunpack.c.h.b16 %v325
    %v2438 = vunpack.c.l.b16 %v326
    %v2439 = vunpack.c.h.b16 %v326
    %v2440 = vunpack.c.l.b16 %v327
    %v2441 = vunpack.c.h.b16 %v327
    %v2442 = vunpack.c.l.b16 %v328
    %v2443 = vunpack.c.h.b16 %v328
    %v2444 = vunpack.c.l.b16 %v329
    %v2445 = vunpack.c.h.b16 %v329
    %v2446 = vunpack.c.l.b16 %v330
    %v2447 = vunpack.c.h.b16 %v330
    %v2448 = vunpack.c.l.b16 %v331
    %v2449 = vunpack.c.h.b16 %v331
    %v2450 = vunpack.c.l.b16 %v332
    %v2451 = vunpack.c.h.b16 %v332
    %v2452 = vunpack.c.l.b16 %v333
    %v2453 = vunpack.c.h.b16 %v333
    %v2454 = vunpack.c.l.b16 %v334
    %v2455 = vunpack.c.h.b16 %v334
    %v2456 = vunpack.c.l.b16 %v335
    %v2457 = vunpack.c.h.b16 %v335
    %v2458 = vunpack.c.l.b16 %v336
    %v2459 = vunpack.c.h.b16 %v336
    %v2460 = vunpack.c.l.b16 %v337
    %v2461 = vunpack.c.h.b16 %v337
    %v2462 = vunpack.c.l.b16 %v338
    %v2463 = vunpack.c.h.b16 %v338
    %v2464 = vunpack.c.l.b16 %v339
    %v2465 = vunpack.c.h.b16 %v339
    %v2466 = vunpack.c.l.b16 %v340
    %v2467 = vunpack.c.h.b16 %v340
    %v2468 = vunpack.c.l.b16 %v341
    %v2469 = vunpack.c.h.b16 %v341
    %v2470 = vunpack.c.l.b16 %v342
    %v2471 = vunpack.c.h.b16 %v342
    %v2472 = vunpack.c.l.b16 %v343
    %v2473 = vunpack.c.h.b16 %v343
    %v2474 = vunpack.c.l.b16 %v344
    %v2475 = vunpack.c.h.b16 %v344
    %v2476 = vunpack.c.l.b16 %v345
    %v2477 = vunpack.c.h.b16 %v345
    %v2478 = vunpack.c.l.b16 %v346
    %v2479 = vunpack.c.h.b16 %v346
    %v2480 = vunpack.c.l.b16 %v347
    %v2481 = vunpack.c.h.b16 %v347
    %v2482 = vunpack.c.l.b16 %v348
    %v2483 = vunpack.c.h.b16 %v348
    %v2484 = vunpack.c.l.b16 %v349
    %v2485 = vunpack.c.h.b16 %v349
    %v2486 = vunpack.c.l.b16 %v350
    %v2487 = vunpack.c.h.b16 %v350
    %v2488 = vunpack.c.l.b16 %v351
    %v2489 = vunpack.c.h.b16 %v351
    %v2490 = vunpack.c.l.b16 %v352
    %v2491 = vunpack.c.h.b16 %v352
    %v2492 = vunpack.c.l.b16 %v353
    %v2493 = vunpack.c.h.b16 %v353
    %v2494 = vunpack.c.l.b16 %v354
    %v2495 = vunpack.c.h.b16 %v354
    %v2496 = vunpack.c.l.b16 %v355
    %v2497 = vunpack.c.h.b16 %v355
    %v2498 = vunpack.c.l.b16 %v356
    %v2499 = vunpack.c.h.b16 %v356
    %v2500 = vunpack.c.l.b16 %v357
    %v2501 = vunpack.c.h.b16 %v357
    %v2502 = vunpack.c.l.b16 %v358
    %v2503 = vunpack.c.h.b16 %v358
    %v2504 = vunpack.c.l.b16 %v359
    %v2505 = vunpack.c.h.b16 %v359
    %v2506 = vunpack.c.l.b16 %v360
    %v2507 = vunpack.c.h.b16 %v360
    %v2508 = vunpack.c.l.b16 %v361
    %v2509 = vunpack.c.h.b16 %v361
    %v2510 = vunpack.c.l.b16 %v362
    %v2511 = vunpack.c.h.b16 %v362
    %v2512 = vunpack.c.l.b16 %v363
    %v2513 = vunpack.c.h.b16 %v363
    %v2514 = vunpack.c.l.b16 %v364
    %v2515 = vunpack.c.h.b16 %v364
    %v2516 = vunpack.c.l.b16 %v365
    %v2517 = vunpack.c.h.b16 %v365
    %v2518 = vunpack.c.l.b16 %v366
    %v2519 = vunpack.c.h.b16 %v366
    %v2520 = vunpack.c.l.b16 %v367
    %v2521 = vunpack.c.h.b16 %v367
    %v2522 = vunpack.c.l.b16 %v368
    %v2523 = vunpack.c.h.b16 %v368
    %v2524 = vunpack.c.l.b16 %v369
    %v2525 = vunpack.c.h.b16 %v369
    %v2526 = vunpack.c.l.b16 %v370
    %v2527 = vunpack.c.h.b16 %v370
    %v2528 = vunpack.c.l.b16 %v371
    %v2529 = vunpack.c.h.b16 %v371
    %v2530 = vunpack.c.l.b16 %v372
    %v2531 = vunpack.c.h.b16 %v372
    %v2532 = vunpack.c.l.b16 %v373
    %v2533 = vunpack.c.h.b16 %v373
    %v2534 = vunpack.c.l.b16 %v374
    %v2535 = vunpack.c.h.b16 %v374
    %v2536 = vunpack.c.l.b16 %v375
    %v2537 = vunpack.c.h.b16 %v375
    %v2538 = vunpack.c.l.b16 %v376
    %v2539 = vunpack.c.h.b16 %v376
    %v2540 = vunpack.c.l.b16 %v377
    %v2541 = vunpack.c.h.b16 %v377
    %v2542 = vunpack.c.l.b16 %v378
    %v2543 = vunpack.c.h.b16 %v378
    %v2544 = vunpack.c.l.b16 %v379
    %v2545 = vunpack.c.h.b16 %v379
    %v2546 = vunpack.c.l.b16 %v380
    %v2547 = vunpack.c.h.b16 %v380
    %v2548 = vunpack.c.l.b16 %v381
    %v2549 = vunpack.c.h.b16 %v381
    %v2550 = vunpack.c.l.b16 %v382
    %v2551 = vunpack.c.h.b16 %v382
    %v2552 = vunpack.c.l.b16 %v383
    %v2553 = vunpack.c.h.b16 %v383
    %v2554 = vunpack.c.l.b16 %v384
    %v2555 = vunpack.c.h.b16 %v384
    %v2556 = vunpack.c.l.b16 %v385
    %v2557 = vunpack.c.h.b16 %v385
    %v2558 = vunpack.c.l.b16 %v386
    %v2559 = vunpack.c.h.b16 %v386
    %v2560 = vunpack.c.l.b16 %v387
    %v2561 = vunpack.c.h.b16 %v387
    %v2562 = vunpack.c.l.b16 %v388
    %v2563 = vunpack.c.h.b16 %v388
    %v2564 = vunpack.c.l.b16 %v389
    %v2565 = vunpack.c.h.b16 %v389
    %v2566 = vunpack.c.l.b16 %v390
    %v2567 = vunpack.c.h.b16 %v390
    %v2568 = vunpack.c.l.b16 %v391
    %v2569 = vunpack.c.h.b16 %v391
    %v2570 = vunpack.c.l.b16 %v392
    %v2571 = vunpack.c.h.b16 %v392
    %v2572 = vunpack.c.l.b16 %v393
    %v2573 = vunpack.c.h.b16 %v393
    %v2574 = vunpack.c.l.b16 %v394
    %v2575 = vunpack.c.h.b16 %v394
    %v2576 = vunpack.c.l.b16 %v395
    %v2577 = vunpack.c.h.b16 %v395
    %v2578 = vunpack.c.l.b16 %v396
    %v2579 = vunpack.c.h.b16 %v396
    %v2580 = vunpack.c.l.b16 %v397
    %v2581 = vunpack.c.h.b16 %v397
    %v2582 = vunpack.c.l.b16 %v398
    %v2583 = vunpack.c.h.b16 %v398
    %v2584 = vunpack.c.l.b16 %v399
    %v2585 = vunpack.c.h.b16 %v399
    %v2586 = vunpack.c.l.b16 %v400
    %v2587 = vunpack.c.h.b16 %v400
    %v2588 = vunpack.c.l.b16 %v401
    %v2589 = vunpack.c.h.b16 %v401
    %v2590 = vunpack.c.l.b16 %v402
    %v2591 = vunpack.c.h.b16 %v402
    %v2592 = vunpack.c.l.b16 %v403
    %v2593 = vunpack.c.h.b16 %v403
    %v2594 = vunpack.c.l.b16 %v404
    %v2595 = vunpack.c.h.b16 %v404
    %v2596 = vunpack.c.l.b16 %v405
    %v2597 = vunpack.c.h.b16 %v405
    %v2598 = vunpack.c.l.b16 %v406
    %v2599 = vunpack.c.h.b16 %v406
    %v2600 = vunpack.c.l.b16 %v407
    %v2601 = vunpack.c.h.b16 %v407
    %v2602 = vunpack.c.l.b16 %v408
    %v2603 = vunpack.c.h.b16 %v408
    %v2604 = vunpack.c.l.b16 %v409
    %v2605 = vunpack.c.h.b16 %v409
    %v2606 = vunpack.c.l.b16 %v410
    %v2607 = vunpack.c.h.b16 %v410
    %v2608 = vunpack.c.l.b16 %v411
    %v2609 = vunpack.c.h.b16 %v411
    %v2610 = vunpack.c.l.b16 %v412
    %v2611 = vunpack.c.h.b16 %v412
    %v2612 = vunpack.c.l.b16 %v413
    %v2613 = vunpack.c.h.b16 %v413
    %v2614 = vunpack.c.l.b16 %v414
    %v2615 = vunpack.c.h.b16 %v414
    %v2616 = vunpack.c.l.b16 %v415
    %v2617 = vunpack.c.h.b16 %v415
    %v2618 = vunpack.c.l.b16 %v416
    %v2619 = vunpack.c.h.b16 %v416
    %v2620 = vunpack.c.l.b16 %v417
    %v2621 = vunpack.c.h.b16 %v417
    %v2622 = vunpack.c.l.b16 %v418
    %v2623 = vunpack.c.h.b16 %v418
    %v2624 = vunpack.c.l.b16 %v419
    %v2625 = vunpack.c.h.b16 %v419
    %v2626 = vunpack.c.l.b16 %v420
    %v2627 = vunpack.c.h.b16 %v420
    %v2628 = vunpack.c.l.b16 %v421
    %v2629 = vunpack.c.h.b16 %v421
    %v2630 = vunpack.c.l.b16 %v422
    %v2631 = vunpack.c.h.b16 %v422
    %v2632 = vunpack.c.l.b16 %v423
    %v2633 = vunpack.c.h.b16 %v423
    %v2634 = vunpack.c.l.b16 %v424
    %v2635 = vunpack.c.h.b16 %v424
    %v2636 = vunpack.c.l.b16 %v425
    %v2637 = vunpack.c.h.b16 %v425
    %v2638 = vunpack.c.l.b16 %v426
    %v2639 = vunpack.c.h.b16 %v426
    %v2640 = vunpack.c.l.b16 %v427
    %v2641 = vunpack.c.h.b16 %v427
    %v2642 = vunpack.c.l.b16 %v428
    %v2643 = vunpack.c.h.b16 %v428
    %v2644 = vunpack.c.l.b16 %v429
    %v2645 = vunpack.c.h.b16 %v429
    %v2646 = vunpack.c.l.b16 %v430
    %v2647 = vunpack.c.h.b16 %v430
    %v2648 = vunpack.c.l.b16 %v431
    %v2649 = vunpack.c.h.b16 %v431
    %v2650 = vunpack.c.l.b16 %v432
    %v2651 = vunpack.c.h.b16 %v432
    %v2652 = vunpack.c.l.b16 %v433
    %v2653 = vunpack.c.h.b16 %v433
    %v2654 = vunpack.c.l.b16 %v434
    %v2655 = vunpack.c.h.b16 %v434
    %v2656 = vunpack.c.l.b16 %v435
    %v2657 = vunpack.c.h.b16 %v435
    %v2658 = vunpack.c.l.b16 %v436
    %v2659 = vunpack.c.h.b16 %v436
    %v2660 = vunpack.c.l.b16 %v437
    %v2661 = vunpack.c.h.b16 %v437
    %v2662 = vunpack.c.l.b16 %v438
    %v2663 = vunpack.c.h.b16 %v438
    %v2664 = vunpack.c.l.b16 %v439
    %v2665 = vunpack.c.h.b16 %v439
    %v2666 = vunpack.c.l.b16 %v440
    %v2667 = vunpack.c.h.b16 %v440
    %v2668 = vunpack.c.l.b16 %v441
    %v2669 = vunpack.c.h.b16 %v441
    %v2670 = vunpack.c.l.b16 %v442
    %v2671 = vunpack.c.h.b16 %v442
    %v2672 = vunpack.c.l.b16 %v443
    %v2673 = vunpack.c.h.b16 %v443
    %v2674 = vunpack.c.l.b16 %v444
    %v2675 = vunpack.c.h.b16 %v444
    %v2676 = vunpack.c.l.b16 %v445
    %v2677 = vunpack.c.h.b16 %v445
    %v2678 = vunpack.c.l.b16 %v446
    %v2679 = vunpack.c.h.b16 %v446
    %v2680 = vunpack.c.l.b16 %v447
    %v2681 = vunpack.c.h.b16 %v447
    %v2682 = vunpack.c.l.b16 %v448
    %v2683 = vunpack.c.h.b16 %v448
    %v2684 = vunpack.c.l.b16 %v449
    %v2685 = vunpack.c.h.b16 %v449
    %v2686 = vunpack.c.l.b16 %v450
    %v2687 = vunpack.c.h.b16 %v450
    %v2688 = vunpack.c.l.b16 %v451
    %v2689 = vunpack.c.h.b16 %v451
    %v2690 = vunpack.c.l.b16 %v452
    %v2691 = vunpack.c.h.b16 %v452
    %v2692 = vunpack.c.l.b16 %v453
    %v2693 = vunpack.c.h.b16 %v453
    %v2694 = vunpack.c.l.b16 %v454
    %v2695 = vunpack.c.h.b16 %v454
    %v2696 = vunpack.c.l.b16 %v455
    %v2697 = vunpack.c.h.b16 %v455
    %v2698 = vunpack.c.l.b16 %v456
    %v2699 = vunpack.c.h.b16 %v456
    %v2700 = vunpack.c.l.b16 %v457
    %v2701 = vunpack.c.h.b16 %v457
    %v2702 = vunpack.c.l.b16 %v458
    %v2703 = vunpack.c.h.b16 %v458
    %v2704 = vunpack.c.l.b16 %v459
    %v2705 = vunpack.c.h.b16 %v459
    %v2706 = vunpack.c.l.b16 %v460
    %v2707 = vunpack.c.h.b16 %v460
    %v2708 = vunpack.c.l.b16 %v461
    %v2709 = vunpack.c.h.b16 %v461
    %v2710 = vunpack.c.l.b16 %v462
    %v2711 = vunpack.c.h.b16 %v462
    %v2712 = vunpack.c.l.b16 %v463
    %v2713 = vunpack.c.h.b16 %v463
    %v2714 = vunpack.c.l.b16 %v464
    %v2715 = vunpack.c.h.b16 %v464
    %v2716 = vunpack.c.l.b16 %v465
    %v2717 = vunpack.c.h.b16 %v465
    %v2718 = vunpack.c.l.b16 %v466
    %v2719 = vunpack.c.h.b16 %v466
    %v2720 = vunpack.c.l.b16 %v467
    %v2721 = vunpack.c.h.b16 %v467
    %v2722 = vunpack.c.l.b16 %v468
    %v2723 = vunpack.c.h.b16 %v468
    %v2724 = vunpack.c.l.b16 %v469
    %v2725 = vunpack.c.h.b16 %v469
    %v2726 = vunpack.c.l.b16 %v470
    %v2727 = vunpack.c.h.b16 %v470
    %v2728 = vunpack.c.l.b16 %v471
    %v2729 = vunpack.c.h.b16 %v471
    %v2730 = vunpack.c.l.b16 %v472
    %v2731 = vunpack.c.h.b16 %v472
    %v2732 = vunpack.c.l.b16 %v473
    %v2733 = vunpack.c.h.b16 %v473
    %v2734 = vunpack.c.l.b16 %v474
    %v2735 = vunpack.c.h.b16 %v474
    %v2736 = vunpack.c.l.b16 %v475
    %v2737 = vunpack.c.h.b16 %v475
    %v2738 = vunpack.c.l.b16 %v476
    %v2739 = vunpack.c.h.b16 %v476
    %v2740 = vunpack.c.l.b16 %v477
    %v2741 = vunpack.c.h.b16 %v477
    %v2742 = vunpack.c.l.b16 %v478
    %v2743 = vunpack.c.h.b16 %v478
    %v2744 = vunpack.c.l.b16 %v479
    %v2745 = vunpack.c.h.b16 %v479
    %v2746 = vunpack.c.l.b16 %v480
    %v2747 = vunpack.c.h.b16 %v480
    %v2748 = vunpack.c.l.b16 %v481
    %v2749 = vunpack.c.h.b16 %v481
    %v2750 = vunpack.c.l.b16 %v482
    %v2751 = vunpack.c.h.b16 %v482
    %v2752 = vunpack.c.l.b16 %v483
    %v2753 = vunpack.c.h.b16 %v483
    %v2754 = vunpack.c.l.b16 %v484
    %v2755 = vunpack.c.h.b16 %v484
    %v2756 = vunpack.c.l.b16 %v485
    %v2757 = vunpack.c.h.b16 %v485
    %v2758 = vunpack.c.l.b16 %v486
    %v2759 = vunpack.c.h.b16 %v486
    %v2760 = vunpack.c.l.b16 %v487
    %v2761 = vunpack.c.h.b16 %v487
    %v2762 = vunpack.c.l.b16 %v488
    %v2763 = vunpack.c.h.b16 %v488
    %v2764 = vunpack.c.l.b16 %v489
    %v2765 = vunpack.c.h.b16 %v489
    %v2766 = vunpack.c.l.b16 %v490
    %v2767 = vunpack.c.h.b16 %v490
    %v2768 = vunpack.c.l.b16 %v491
    %v2769 = vunpack.c.h.b16 %v491
    %v2770 = vunpack.c.l.b16 %v492
    %v2771 = vunpack.c.h.b16 %v492
    %v2772 = vunpack.c.l.b16 %v493
    %v2773 = vunpack.c.h.b16 %v493
    %v2774 = vunpack.c.l.b16 %v494
    %v2775 = vunpack.c.h.b16 %v494
    %v2776 = vunpack.c.l.b16 %v495
    %v2777 = vunpack.c.h.b16 %v495
    %v2778 = vunpack.c.l.b16 %v496
    %v2779 = vunpack.c.h.b16 %v496
    %v2780 = vunpack.c.l.b16 %v497
    %v2781 = vunpack.c.h.b16 %v497
    %v2782 = vunpack.c.l.b16 %v498
    %v2783 = vunpack.c.h.b16 %v498
    %v2784 = vunpack.c.l.b16 %v499
    %v2785 = vunpack.c.h.b16 %v499
    %v2786 = vunpack.c.l.b16 %v500
    %v2787 = vunpack.c.h.b16 %v500
    %v2788 = vunpack.c.l.b16 %v501
    %v2789 = vunpack.c.h.b16 %v501
    %v2790 = vunpack.c.l.b16 %v502
    %v2791 = vunpack.c.h.b16 %v502
    %v2792 = vunpack.c.l.b16 %v503
    %v2793 = vunpack.c.h.b16 %v503
    %v2794 = vunpack.c.l.b16 %v504
    %v2795 = vunpack.c.h.b16 %v504
    %v2796 = vunpack.c.l.b16 %v505
    %v2797 = vunpack.c.h.b16 %v505
    %v2798 = vunpack.c.l.b16 %v506
    %v2799 = vunpack.c.h.b16 %v506
    %v2800 = vunpack.c.l.b16 %v507
    %v2801 = vunpack.c.h.b16 %v507
    %v2802 = vunpack.c.l.b16 %v508
    %v2803 = vunpack.c.h.b16 %v508
    %v2804 = vunpack.c.l.b16 %v509
    %v2805 = vunpack.c.h.b16 %v509
    %v2806 = vunpack.c.l.b16 %v510
    %v2807 = vunpack.c.h.b16 %v510
    %v2808 = vunpack.c.l.b16 %v511
    %v2809 = vunpack.c.h.b16 %v511
    %v2810 = vunpack.c.l.b16 %v512
    %v2811 = vunpack.c.h.b16 %v512
    %v2812 = vunpack.c.l.b16 %v513
    %v2813 = vunpack.c.h.b16 %v513
    %v2814 = vunpack.c.l.b16 %v514
    %v2815 = vunpack.c.h.b16 %v514
    %v2816 = vunpack.c.l.b16 %v515
    %v2817 = vunpack.c.h.b16 %v515
    %v2818 = vunpack.c.l.b16 %v516
    %v2819 = vunpack.c.h.b16 %v516
    %v2820 = vunpack.c.l.b16 %v517
    %v2821 = vunpack.c.h.b16 %v517
    %v2822 = vunpack.c.l.b16 %v518
    %v2823 = vunpack.c.h.b16 %v518
    %v2824 = vunpack.c.l.b16 %v519
    %v2825 = vunpack.c.h.b16 %v519
    %v2826 = vunpack.c.l.b16 %v520
    %v2827 = vunpack.c.h.b16 %v520
    %v2828 = vunpack.c.l.b16 %v521
    %v2829 = vunpack.c.h.b16 %v521
    %v2830 = vunpack.c.l.b16 %v522
    %v2831 = vunpack.c.h.b16 %v522
    %v2832 = vunpack.c.l.b16 %v523
    %v2833 = vunpack.c.h.b16 %v523
    %v2834 = vunpack.c.l.b16 %v524
    %v2835 = vunpack.c.h.b16 %v524
    %v2836 = vunpack.c.l.b16 %v525
    %v2837 = vunpack.c.h.b16 %v525
    %v2838 = vunpack.c.l.b16 %v526
    %v2839 = vunpack.c.h.b16 %v526
    %v2840 = vunpack.c.l.b16 %v527
    %v2841 = vunpack.c.h.b16 %v527
    %v2842 = vunpack.c.l.b16 %v528
    %v2843 = vunpack.c.h.b16 %v528
    %v2844 = vunpack.c.l.b16 %v529
    %v2845 = vunpack.c.h.b16 %v529
    %v2846 = vunpack.c.l.b16 %v530
    %v2847 = vunpack.c.h.b16 %v530
    %v2848 = vunpack.c.l.b16 %v531
    %v2849 = vunpack.c.h.b16 %v531
    %v2850 = vunpack.c.l.b16 %v532
    %v2851 = vunpack.c.h.b16 %v532
    %v2852 = vunpack.c.l.b16 %v533
    %v2853 = vunpack.c.h.b16 %v533
    %v2854 = vunpack.c.l.b16 %v534
    %v2855 = vunpack.c.h.b16 %v534
    %v2856 = vunpack.c.l.b16 %v535
    %v2857 = vunpack.c.h.b16 %v535
    %v2858 = vunpack.c.l.b16 %v536
    %v2859 = vunpack.c.h.b16 %v536
    %v2860 = vunpack.c.l.b16 %v537
    %v2861 = vunpack.c.h.b16 %v537
    %v2862 = vunpack.c.l.b16 %v538
    %v2863 = vunpack.c.h.b16 %v538
    %v2864 = vunpack.c.l.b16 %v539
    %v2865 = vunpack.c.h.b16 %v539
    %v2866 = vunpack.c.l.b16 %v540
    %v2867 = vunpack.c.h.b16 %v540
    %v2868 = vunpack.c.l.b16 %v541
    %v2869 = vunpack.c.h.b16 %v541
    %v2870 = vunpack.c.l.b16 %v542
    %v2871 = vunpack.c.h.b16 %v542
    %v2872 = vunpack.c.l.b16 %v543
    %v2873 = vunpack.c.h.b16 %v543
    %v2874 = vunpack.c.l.b16 %v544
    %v2875 = vunpack.c.h.b16 %v544
    %v2876 = vunpack.c.l.b16 %v545
    %v2877 = vunpack.c.h.b16 %v545
    %v2878 = vunpack.c.l.b16 %v546
    %v2879 = vunpack.c.h.b16 %v546
    %v2880 = vunpack.c.l.b16 %v547
    %v2881 = vunpack.c.h.b16 %v547
    %v2882 = vunpack.c.l.b16 %v548
    %v2883 = vunpack.c.h.b16 %v548
    %v2884 = vunpack.c.l.b16 %v549
    %v2885 = vunpack.c.h.b16 %v549
    %v2886 = vunpack.c.l.b16 %v550
    %v2887 = vunpack.c.h.b16 %v550
    %v2888 = vunpack.c.l.b16 %v551
    %v2889 = vunpack.c.h.b16 %v551
    %v2890 = vunpack.c.l.b16 %v552
    %v2891 = vunpack.c.h.b16 %v552
    %v2892 = vunpack.c.l.b16 %v553
    %v2893 = vunpack.c.h.b16 %v553
    %v2894 = vunpack.c.l.b16 %v554
    %v2895 = vunpack.c.h.b16 %v554
    %v2896 = vunpack.c.l.b16 %v555
    %v2897 = vunpack.c.h.b16 %v555
    %v2898 = vunpack.c.l.b16 %v556
    %v2899 = vunpack.c.h.b16 %v556
    %v2900 = vunpack.c.l.b16 %v557
    %v2901 = vunpack.c.h.b16 %v557
    %v2902 = vunpack.c.l.b16 %v558
    %v2903 = vunpack.c.h.b16 %v558
    %v2904 = vunpack.c.l.b16 %v559
    %v2905 = vunpack.c.h.b16 %v559
    %v2906 = vunpack.c.l.b16 %v560
    %v2907 = vunpack.c.h.b16 %v560
    %v2908 = vunpack.c.l.b16 %v561
    %v2909 = vunpack.c.h.b16 %v561
    %v2910 = vunpack.c.l.b16 %v562
    %v2911 = vunpack.c.h.b16 %v562
    %v2912 = vunpack.c.l.b16 %v563
    %v2913 = vunpack.c.h.b16 %v563
    %v2914 = vunpack.c.l.b16 %v564
    %v2915 = vunpack.c.h.b16 %v564
    %v2916 = vunpack.c.l.b16 %v565
    %v2917 = vunpack.c.h.b16 %v565
    %v2918 = vunpack.c.l.b16 %v566
    %v2919 = vunpack.c.h.b16 %v566
    %v2920 = vunpack.c.l.b16 %v567
    %v2921 = vunpack.c.h.b16 %v567
    %v2922 = vunpack.c.l.b16 %v568
    %v2923 = vunpack.c.h.b16 %v568
    %v2924 = vunpack.c.l.b16 %v569
    %v2925 = vunpack.c.h.b16 %v569
    %v2926 = vunpack.c.l.b16 %v570
    %v2927 = vunpack.c.h.b16 %v570
    %v2928 = vunpack.c.l.b16 %v571
    %v2929 = vunpack.c.h.b16 %v571
    %v2930 = vunpack.c.l.b16 %v572
    %v2931 = vunpack.c.h.b16 %v572
    %v2932 = vunpack.c.l.b16 %v573
    %v2933 = vunpack.c.h.b16 %v573
    %v2934 = vunpack.c.l.b16 %v574
    %v2935 = vunpack.c.h.b16 %v574
    %v2936 = vunpack.c.l.b16 %v575
    %v2937 = vunpack.c.h.b16 %v575
    %v2938 = vunpack.c.l.b16 %v576
    %v2939 = vunpack.c.h.b16 %v576
    %v2940 = vunpack.c.l.b16 %v577
    %v2941 = vunpack.c.h.b16 %v577
    %v2942 = vunpack.c.l.b16 %v578
    %v2943 = vunpack.c.h.b16 %v578
    %v2944 = vunpack.c.l.b16 %v579
    %v2945 = vunpack.c.h.b16 %v579
    %v2946 = vunpack.c.l.b16 %v580
    %v2947 = vunpack.c.h.b16 %v580
    %v2948 = vunpack.c.l.b16 %v581
    %v2949 = vunpack.c.h.b16 %v581
    %v2950 = vunpack.c.l.b16 %v582
    %v2951 = vunpack.c.h.b16 %v582
    %v2952 = vunpack.c.l.b16 %v583
    %v2953 = vunpack.c.h.b16 %v583
    %v2954 = vunpack.c.l.b16 %v584
    %v2955 = vunpack.c.h.b16 %v584
    %v2956 = vunpack.c.l.b16 %v585
    %v2957 = vunpack.c.h.b16 %v585
    %v2958 = vunpack.c.l.b16 %v586
    %v2959 = vunpack.c.h.b16 %v586
    %v2960 = vunpack.c.l.b16 %v587
    %v2961 = vunpack.c.h.b16 %v587
    %v2962 = vunpack.c.l.b16 %v588
    %v2963 = vunpack.c.h.b16 %v588
    %v2964 = vunpack.c.l.b16 %v589
    %v2965 = vunpack.c.h.b16 %v589
    %v2966 = vunpack.c.l.b16 %v590
    %v2967 = vunpack.c.h.b16 %v590
    %v2968 = vunpack.c.l.b16 %v591
    %v2969 = vunpack.c.h.b16 %v591
    %v2970 = vunpack.c.l.b16 %v592
    %v2971 = vunpack.c.h.b16 %v592
    %v2972 = vunpack.c.l.b16 %v593
    %v2973 = vunpack.c.h.b16 %v593
    %v2974 = vunpack.c.l.b16 %v594
    %v2975 = vunpack.c.h.b16 %v594
    %v2976 = vunpack.c.l.b16 %v595
    %v2977 = vunpack.c.h.b16 %v595
    %v2978 = vunpack.c.l.b16 %v596
    %v2979 = vunpack.c.h.b16 %v596
    %v2980 = vunpack.c.l.b16 %v597
    %v2981 = vunpack.c.h.b16 %v597
    %v2982 = vunpack.c.l.b16 %v598
    %v2983 = vunpack.c.h.b16 %v598
    %v2984 = vunpack.c.l.b16 %v599
    %v2985 = vunpack.c.h.b16 %v599
    %v2986 = vunpack.c.l.b16 %v600
    %v2987 = vunpack.c.h.b16 %v600
    %v2988 = vunpack.c.l.b16 %v601
    %v2989 = vunpack.c.h.b16 %v601
    %v2990 = vunpack.c.l.b16 %v602
    %v2991 = vunpack.c.h.b16 %v602
    %v2992 = vunpack.c.l.b16 %v603
    %v2993 = vunpack.c.h.b16 %v603
    %v2994 = vunpack.c.l.b16 %v604
    %v2995 = vunpack.c.h.b16 %v604
    %v2996 = vunpack.c.l.b16 %v605
    %v2997 = vunpack.c.h.b16 %v605
    %v2998 = vunpack.c.l.b16 %v606
    %v2999 = vunpack.c.h.b16 %v606
    %v3000 = vunpack.c.l.b16 %v607
    %v3001 = vunpack.c.h.b16 %v607
    %v3002 = vunpack.c.l.b16 %v608
    %v3003 = vunpack.c.h.b16 %v608
    %v3004 = vunpack.c.l.b16 %v609
    %v3005 = vunpack.c.h.b16 %v609
    %v3006 = vunpack.c.l.b16 %v610
    %v3007 = vunpack.c.h.b16 %v610
    %v3008 = vunpack.c.l.b16 %v611
    %v3009 = vunpack.c.h.b16 %v611
    %v3010 = vunpack.c.l.b16 %v612
    %v3011 = vunpack.c.h.b16 %v612
    %v3012 = vunpack.c.l.b16 %v613
    %v3013 = vunpack.c.h.b16 %v613
    %v3014 = vunpack.c.l.b16 %v614
    %v3015 = vunpack.c.h.b16 %v614
    %v3016 = vunpack.c.l.b16 %v615
    %v3017 = vunpack.c.h.b16 %v615
    %v3018 = vunpack.c.l.b16 %v616
    %v3019 = vunpack.c.h.b16 %v616
    %v3020 = vunpack.c.l.b16 %v617
    %v3021 = vunpack.c.h.b16 %v617
    %v3022 = vunpack.c.l.b16 %v618
    %v3023 = vunpack.c.h.b16 %v618
    %v3024 = vunpack.c.l.b16 %v619
    %v3025 = vunpack.c.h.b16 %v619
    %v3026 = vunpack.c.l.b16 %v620
    %v3027 = vunpack.c.h.b16 %v620
    %v3028 = vunpack.c.l.b16 %v621
    %v3029 = vunpack.c.h.b16 %v621
    %v3030 = vunpack.c.l.b16 %v622
    %v3031 = vunpack.c.h.b16 %v622
    %v3032 = vunpack.c.l.b16 %v623
    %v3033 = vunpack.c.h.b16 %v623
    %v3034 = vunpack.c.l.b16 %v624
    %v3035 = vunpack.c.h.b16 %v624
    %v3036 = vunpack.c.l.b16 %v625
    %v3037 = vunpack.c.h.b16 %v625
    %v3038 = vunpack.c.l.b16 %v626
    %v3039 = vunpack.c.h.b16 %v626
    %v3040 = vunpack.c.l.b16 %v627
    %v3041 = vunpack.c.h.b16 %v627
    %v3042 = vunpack.c.l.b16 %v628
    %v3043 = vunpack.c.h.b16 %v628
    %v3044 = vunpack.c.l.b16 %v629
    %v3045 = vunpack.c.h.b16 %v629
    %v3046 = vunpack.c.l.b16 %v630
    %v3047 = vunpack.c.h.b16 %v630
    %v3048 = vunpack.c.l.b16 %v631
    %v3049 = vunpack.c.h.b16 %v631
    %v3050 = vunpack.c.l.b16 %v632
    %v3051 = vunpack.c.h.b16 %v632
    %v3052 = vunpack.c.l.b16 %v633
    %v3053 = vunpack.c.h.b16 %v633
    %v3054 = vunpack.c.l.b16 %v634
    %v3055 = vunpack.c.h.b16 %v634
    %v3056 = vunpack.c.l.b16 %v635
    %v3057 = vunpack.c.h.b16 %v635
    %v3058 = vunpack.c.l.b16 %v636
    %v3059 = vunpack.c.h.b16 %v636
    %v3060 = vunpack.c.l.b16 %v637
    %v3061 = vunpack.c.h.b16 %v637
    %v3062 = vunpack.c.l.b16 %v638
    %v3063 = vunpack.c.h.b16 %v638
    %v3064 = vunpack.c.l.b16 %v639
    %v3065 = vunpack.c.h.b16 %v639
    %v3066 = vunpack.c.l.b16 %v640
    %v3067 = vunpack.c.h.b16 %v640
    %v3068 = vunpack.c.l.b16 %v641
    %v3069 = vunpack.c.h.b16 %v641
    %v3070 = vunpack.c.l.b16 %v642
    %v3071 = vunpack.c.h.b16 %v642
    %v3072 = vunpack.c.l.b16 %v643
    %v3073 = vunpack.c.h.b16 %v643
    %v3074 = vunpack.c.l.b16 %v644
    %v3075 = vunpack.c.h.b16 %v644
    %v3076 = vunpack.c.l.b16 %v645
    %v3077 = vunpack.c.h.b16 %v645
    %v3078 = vunpack.c.l.b16 %v646
    %v3079 = vunpack.c.h.b16 %v646
    %v3080 = vunpack.c.l.b16 %v647
    %v3081 = vunpack.c.h.b16 %v647
    %v3082 = vunpack.c.l.b16 %v648
    %v3083 = vunpack.c.h.b16 %v648
    %v3084 = vunpack.c.l.b16 %v649
    %v3085 = vunpack.c.h.b16 %v649
    %v3086 = vunpack.c.l.b16 %v650
    %v3087 = vunpack.c.h.b16 %v650
    %v3088 = vunpack.c.l.b16 %v651
    %v3089 = vunpack.c.h.b16 %v651
    %v3090 = vunpack.c.l.b16 %v652
    %v3091 = vunpack.c.h.b16 %v652
    %v3092 = vunpack.c.l.b16 %v653
    %v3093 = vunpack.c.h.b16 %v653
    %v3094 = vunpack.c.l.b16 %v654
    %v3095 = vunpack.c.h.b16 %v654
    %v3096 = vunpack.c.l.b16 %v655
    %v3097 = vunpack.c.h.b16 %v655
    %v3098 = vunpack.c.l.b16 %v656
    %v3099 = vunpack.c.h.b16 %v656
    %v3100 = vunpack.c.l.b16 %v657
    %v3101 = vunpack.c.h.b16 %v657
    %v3102 = vunpack.c.l.b16 %v658
    %v3103 = vunpack.c.h.b16 %v658
    %v3104 = vunpack.c.l.b16 %v659
    %v3105 = vunpack.c.h.b16 %v659
    %v3106 = vunpack.c.l.b16 %v660
    %v3107 = vunpack.c.h.b16 %v660
    %v3108 = vunpack.c.l.b16 %v661
    %v3109 = vunpack.c.h.b16 %v661
    %v3110 = vunpack.c.l.b16 %v662
    %v3111 = vunpack.c.h.b16 %v662
    %v3112 = vunpack.c.l.b16 %v663
    %v3113 = vunpack.c.h.b16 %v663
    %v3114 = vunpack.c.l.b16 %v664
    %v3115 = vunpack.c.h.b16 %v664
    %v3116 = vunpack.c.l.b16 %v665
    %v3117 = vunpack.c.h.b16 %v665
    %v3118 = vunpack.c.l.b16 %v666
    %v3119 = vunpack.c.h.b16 %v666
    %v3120 = vunpack.c.l.b16 %v667
    %v3121 = vunpack.c.h.b16 %v667
    %v3122 = vunpack.c.l.b16 %v668
    %v3123 = vunpack.c.h.b16 %v668
    %v3124 = vunpack.c.l.b16 %v669
    %v3125 = vunpack.c.h.b16 %v669
    %v3126 = vunpack.c.l.b16 %v670
    %v3127 = vunpack.c.h.b16 %v670
    %v3128 = vunpack.c.l.b16 %v671
    %v3129 = vunpack.c.h.b16 %v671
    %v3130 = vunpack.c.l.b16 %v672
    %v3131 = vunpack.c.h.b16 %v672
    %v3132 = vunpack.c.l.b16 %v673
    %v3133 = vunpack.c.h.b16 %v673
    %v3134 = vunpack.c.l.b16 %v674
    %v3135 = vunpack.c.h.b16 %v674
    %v3136 = vunpack.c.l.b16 %v675
    %v3137 = vunpack.c.h.b16 %v675
    %v3138 = vunpack.c.l.b16 %v676
    %v3139 = vunpack.c.h.b16 %v676
    %v3140 = vunpack.c.l.b16 %v677
    %v3141 = vunpack.c.h.b16 %v677
    %v3142 = vunpack.c.l.b16 %v678
    %v3143 = vunpack.c.h.b16 %v678
    %v3144 = vunpack.c.l.b16 %v679
    %v3145 = vunpack.c.h.b16 %v679
    %v3146 = vunpack.c.l.b16 %v680
    %v3147 = vunpack.c.h.b16 %v680
    %v3148 = vunpack.c.l.b16 %v681
    %v3149 = vunpack.c.h.b16 %v681
    %v3150 = vunpack.c.l.b16 %v682
    %v3151 = vunpack.c.h.b16 %v682
    %v3152 = vunpack.c.l.b16 %v683
    %v3153 = vunpack.c.h.b16 %v683
    %v3154 = vunpack.c.l.b16 %v684
    %v3155 = vunpack.c.h.b16 %v684
    %v3156 = vunpack.c.l.b16 %v685
    %v3157 = vunpack.c.h.b16 %v685
    %v3158 = vunpack.c.l.b16 %v686
    %v3159 = vunpack.c.h.b16 %v686
    %v3160 = vunpack.c.l.b16 %v687
    %v3161 = vunpack.c.h.b16 %v687
    %v3162 = vunpack.c.l.b16 %v688
    %v3163 = vunpack.c.h.b16 %v688
    %v3164 = vunpack.c.l.b16 %v689
    %v3165 = vunpack.c.h.b16 %v689
    %v3166 = vunpack.c.l.b16 %v690
    %v3167 = vunpack.c.h.b16 %v690
    %v3168 = vunpack.c.l.b16 %v691
    %v3169 = vunpack.c.h.b16 %v691
    %v3170 = vunpack.c.l.b16 %v692
    %v3171 = vunpack.c.h.b16 %v692
    %v3172 = vunpack.c.l.b16 %v693
    %v3173 = vunpack.c.h.b16 %v693
    %v3174 = vunpack.c.l.b16 %v694
    %v3175 = vunpack.c.h.b16 %v694
    %v3176 = vunpack.c.l.b16 %v695
    %v3177 = vunpack.c.h.b16 %v695
    %v3178 = vunpack.c.l.b16 %v696
    %v3179 = vunpack.c.h.b16 %v696
    %v3180 = vunpack.c.l.b16 %v697
    %v3181 = vunpack.c.h.b16 %v697
    %v3182 = vunpack.c.l.b16 %v698
    %v3183 = vunpack.c.h.b16 %v698
    %v3184 = vunpack.c.l.b16 %v699
    %v3185 = vunpack.c.h.b16 %v699
    %v3186 = vunpack.c.l.b16 %v700
    %v3187 = vunpack.c.h.b16 %v700
    %v3188 = vunpack.c.l.b16 %v701
    %v3189 = vunpack.c.h.b16 %v701
    %v3190 = vunpack.c.l.b16 %v702
    %v3191 = vunpack.c.h.b16 %v702
    %v3192 = vunpack.c.l.b16 %v703
    %v3193 = vunpack.c.h.b16 %v703
    %v3194 = vunpack.c.l.b16 %v704
    %v3195 = vunpack.c.h.b16 %v704
    %v3196 = vunpack.c.l.b16 %v705
    %v3197 = vunpack.c.h.b16 %v705
    %v3198 = vunpack.c.l.b16 %v706
    %v3199 = vunpack.c.h.b16 %v706
    %v3200 = vunpack.c.l.b16 %v707
    %v3201 = vunpack.c.h.b16 %v707
    %v3202 = vunpack.c.l.b16 %v708
    %v3203 = vunpack.c.h.b16 %v708
    %v3204 = vunpack.c.l.b16 %v709
    %v3205 = vunpack.c.h.b16 %v709
    %v3206 = vunpack.c.l.b16 %v710
    %v3207 = vunpack.c.h.b16 %v710
    %v3208 = vunpack.c.l.b16 %v711
    %v3209 = vunpack.c.h.b16 %v711
    %v3210 = vunpack.c.l.b16 %v712
    %v3211 = vunpack.c.h.b16 %v712
    %v3212 = vunpack.c.l.b16 %v713
    %v3213 = vunpack.c.h.b16 %v713
    %v3214 = vunpack.c.l.b16 %v714
    %v3215 = vunpack.c.h.b16 %v714
    %v3216 = vunpack.c.l.b16 %v715
    %v3217 = vunpack.c.h.b16 %v715
    %v3218 = vunpack.c.l.b16 %v716
    %v3219 = vunpack.c.h.b16 %v716
    %v3220 = vunpack.c.l.b16 %v717
    %v3221 = vunpack.c.h.b16 %v717
    %v3222 = vunpack.c.l.b16 %v718
    %v3223 = vunpack.c.h.b16 %v718
    %v3224 = vunpack.c.l.b16 %v719
    %v3225 = vunpack.c.h.b16 %v719
    %v3226 = vunpack.c.l.b16 %v720
    %v3227 = vunpack.c.h.b16 %v720
    %v3228 = vunpack.c.l.b16 %v721
    %v3229 = vunpack.c.h.b16 %v721
    %v3230 = vunpack.c.l.b16 %v722
    %v3231 = vunpack.c.h.b16 %v722
    %v3232 = vunpack.c.l.b16 %v723
    %v3233 = vunpack.c.h.b16 %v723
    %v3234 = vunpack.c.l.b16 %v724
    %v3235 = vunpack.c.h.b16 %v724
    %v3236 = vunpack.c.l.b16 %v725
    %v3237 = vunpack.c.h.b16 %v725
    %v3238 = vunpack.c.l.b16 %v726
    %v3239 = vunpack.c.h.b16 %v726
    %v3240 = vunpack.c.l.b16 %v727
    %v3241 = vunpack.c.h.b16 %v727
    %v3242 = vunpack.c.l.b16 %v728
    %v3243 = vunpack.c.h.b16 %v728
    %v3244 = vunpack.c.l.b16 %v729
    %v3245 = vunpack.c.h.b16 %v729
    %v3246 = vunpack.c.l.b16 %v730
    %v3247 = vunpack.c.h.b16 %v730
    %v3248 = vunpack.c.l.b16 %v731
    %v3249 = vunpack.c.h.b16 %v731
    %v3250 = vunpack.c.l.b16 %v732
    %v3251 = vunpack.c.h.b16 %v732
    %v3252 = vunpack.c.l.b16 %v733
    %v3253 = vunpack.c.h.b16 %v733
    %v3254 = vunpack.c.l.b16 %v734
    %v3255 = vunpack.c.h.b16 %v734
    %v3256 = vunpack.c.l.b16 %v735
    %v3257 = vunpack.c.h.b16 %v735
    %v3258 = vunpack.c.l.b16 %v736
    %v3259 = vunpack.c.h.b16 %v736
    %v3260 = vunpack.c.l.b16 %v737
    %v3261 = vunpack.c.h.b16 %v737
    %v3262 = vunpack.c.l.b16 %v738
    %v3263 = vunpack.c.h.b16 %v738
    %v3264 = vunpack.c.l.b16 %v739
    %v3265 = vunpack.c.h.b16 %v739
    %v3266 = vunpack.c.l.b16 %v740
    %v3267 = vunpack.c.h.b16 %v740
    %v3268 = vunpack.c.l.b16 %v741
    %v3269 = vunpack.c.h.b16 %v741
    %v3270 = vunpack.c.l.b16 %v742
    %v3271 = vunpack.c.h.b16 %v742
    %v3272 = vunpack.c.l.b16 %v743
    %v3273 = vunpack.c.h.b16 %v743
    %v3274 = vunpack.c.l.b16 %v744
    %v3275 = vunpack.c.h.b16 %v744
    %v3276 = vunpack.c.l.b16 %v745
    %v3277 = vunpack.c.h.b16 %v745
    %v3278 = vunpack.c.l.b16 %v746
    %v3279 = vunpack.c.h.b16 %v746
    %v3280 = vunpack.c.l.b16 %v747
    %v3281 = vunpack.c.h.b16 %v747
    %v3282 = vunpack.c.l.b16 %v748
    %v3283 = vunpack.c.h.b16 %v748
    %v3284 = vunpack.c.l.b16 %v749
    %v3285 = vunpack.c.h.b16 %v749
    %v3286 = vunpack.c.l.b16 %v750
    %v3287 = vunpack.c.h.b16 %v750
    %v3288 = vunpack.c.l.b16 %v751
    %v3289 = vunpack.c.h.b16 %v751
    %v3290 = vunpack.c.l.b16 %v752
    %v3291 = vunpack.c.h.b16 %v752
    %v3292 = vunpack.c.l.b16 %v753
    %v3293 = vunpack.c.h.b16 %v753
    %v3294 = vunpack.c.l.b16 %v754
    %v3295 = vunpack.c.h.b16 %v754
    %v3296 = vunpack.c.l.b16 %v755
    %v3297 = vunpack.c.h.b16 %v755
    %v3298 = vunpack.c.l.b16 %v756
    %v3299 = vunpack.c.h.b16 %v756
    %v3300 = vunpack.c.l.b16 %v757
    %v3301 = vunpack.c.h.b16 %v757
    %v3302 = vunpack.c.l.b16 %v758
    %v3303 = vunpack.c.h.b16 %v758
    %v3304 = vunpack.c.l.b16 %v759
    %v3305 = vunpack.c.h.b16 %v759
    %v3306 = vunpack.c.l.b16 %v760
    %v3307 = vunpack.c.h.b16 %v760
    %v3308 = vunpack.c.l.b16 %v761
    %v3309 = vunpack.c.h.b16 %v761
    %v3310 = vunpack.c.l.b16 %v762
    %v3311 = vunpack.c.h.b16 %v762
    %v3312 = vunpack.c.l.b16 %v763
    %v3313 = vunpack.c.h.b16 %v763
    %v3314 = vunpack.c.l.b16 %v764
    %v3315 = vunpack.c.h.b16 %v764
    %v3316 = vunpack.c.l.b16 %v765
    %v3317 = vunpack.c.h.b16 %v765
    %v3318 = vunpack.c.l.b16 %v766
    %v3319 = vunpack.c.h.b16 %v766
    %v3320 = vunpack.c.l.b16 %v767
    %v3321 = vunpack.c.h.b16 %v767
    %v3322 = vunpack.c.l.b16 %v768
    %v3323 = vunpack.c.h.b16 %v768
    %v3324 = vunpack.c.l.b16 %v769
    %v3325 = vunpack.c.h.b16 %v769
    %v3326 = vunpack.c.l.b16 %v770
    %v3327 = vunpack.c.h.b16 %v770
    %v3328 = vunpack.c.l.b16 %v771
    %v3329 = vunpack.c.h.b16 %v771
    %v3330 = vunpack.c.l.b16 %v772
    %v3331 = vunpack.c.h.b16 %v772
    %v3332 = vunpack.c.l.b16 %v773
    %v3333 = vunpack.c.h.b16 %v773
    %v3334 = vunpack.c.l.b16 %v774
    %v3335 = vunpack.c.h.b16 %v774
    %v3336 = vunpack.c.l.b16 %v775
    %v3337 = vunpack.c.h.b16 %v775
    %v3338 = vunpack.c.l.b16 %v776
    %v3339 = vunpack.c.h.b16 %v776
    %v3340 = vunpack.c.l.b16 %v777
    %v3341 = vunpack.c.h.b16 %v777
    %v3342 = vunpack.c.l.b16 %v778
    %v3343 = vunpack.c.h.b16 %v778
    %v3344 = vunpack.c.l.b16 %v779
    %v3345 = vunpack.c.h.b16 %v779
    %v3346 = vunpack.c.l.b16 %v780
    %v3347 = vunpack.c.h.b16 %v780
    %v3348 = vunpack.c.l.b16 %v781
    %v3349 = vunpack.c.h.b16 %v781
    %v3350 = vunpack.c.l.b16 %v782
    %v3351 = vunpack.c.h.b16 %v782
    %v3352 = vunpack.c.l.b16 %v783
    %v3353 = vunpack.c.h.b16 %v783
    %v3354 = vunpack.c.l.b16 %v784
    %v3355 = vunpack.c.h.b16 %v784
    %v3356 = vunpack.c.l.b16 %v785
    %v3357 = vunpack.c.h.b16 %v785
    %v3358 = vunpack.c.l.b16 %v786
    %v3359 = vunpack.c.h.b16 %v786
    %v3360 = vunpack.c.l.b16 %v787
    %v3361 = vunpack.c.h.b16 %v787
    %v3362 = vunpack.c.l.b16 %v788
    %v3363 = vunpack.c.h.b16 %v788
    %v3364 = vunpack.c.l.b16 %v789
    %v3365 = vunpack.c.h.b16 %v789
    %v3366 = vunpack.c.l.b16 %v790
    %v3367 = vunpack.c.h.b16 %v790
    %v3368 = vunpack.c.l.b16 %v791
    %v3369 = vunpack.c.h.b16 %v791
    %v3370 = vunpack.c.l.b16 %v792
    %v3371 = vunpack.c.h.b16 %v792
    %v3372 = vunpack.c.l.b16 %v793
    %v3373 = vunpack.c.h.b16 %v793
    %v3374 = vunpack.c.l.b16 %v794
    %v3375 = vunpack.c.h.b16 %v794
    %v3376 = vunpack.c.l.b16 %v795
    %v3377 = vunpack.c.h.b16 %v795
    %v3378 = vunpack.c.l.b16 %v796
    %v3379 = vunpack.c.h.b16 %v796
    %v3380 = vunpack.c.l.b16 %v797
    %v3381 = vunpack.c.h.b16 %v797
    %v3382 = vunpack.c.l.b16 %v798
    %v3383 = vunpack.c.h.b16 %v798
    %v3384 = vunpack.c.l.b16 %v799
    %v3385 = vunpack.c.h.b16 %v799
    %v3386 = vunpack.c.l.b16 %v800
    %v3387 = vunpack.c.h.b16 %v800
    %v3388 = vunpack.c.l.b16 %v801
    %v3389 = vunpack.c.h.b16 %v801
    %v3390 = vunpack.c.l.b16 %v802
    %v3391 = vunpack.c.h.b16 %v802
    %v3392 = vunpack.c.l.b16 %v803
    %v3393 = vunpack.c.h.b16 %v803
    %v3394 = vunpack.c.l.b16 %v804
    %v3395 = vunpack.c.h.b16 %v804
    %v3396 = vunpack.c.l.b16 %v805
    %v3397 = vunpack.c.h.b16 %v805
    %v3398 = vunpack.c.l.b16 %v806
    %v3399 = vunpack.c.h.b16 %v806
    %v3400 = vunpack.c.l.b16 %v807
    %v3401 = vunpack.c.h.b16 %v807
    %v3402 = vunpack.c.l.b16 %v808
    %v3403 = vunpack.c.h.b16 %v808
    %v3404 = vunpack.c.l.b16 %v809
    %v3405 = vunpack.c.h.b16 %v809
    %v3406 = vunpack.c.l.b16 %v810
    %v3407 = vunpack.c.h.b16 %v810
    %v3408 = vunpack.c.l.b16 %v811
    %v3409 = vunpack.c.h.b16 %v811
    %v3410 = vunpack.c.l.b16 %v812
    %v3411 = vunpack.c.h.b16 %v812
    %v3412 = vunpack.c.l.b16 %v813
    %v3413 = vunpack.c.h.b16 %v813
    %v3414 = vunpack.c.l.b16 %v814
    %v3415 = vunpack.c.h.b16 %v814
    %v3416 = vunpack.c.l.b16 %v815
    %v3417 = vunpack.c.h.b16 %v815
    %v3418 = vunpack.c.l.b16 %v816
    %v3419 = vunpack.c.h.b16 %v816
    %v3420 = vunpack.c.l.b16 %v817
    %v3421 = vunpack.c.h.b16 %v817
    %v3422 = vunpack.c.l.b16 %v818
    %v3423 = vunpack.c.h.b16 %v818
    %v3424 = vunpack.c.l.b16 %v819
    %v3425 = vunpack.c.h.b16 %v819
    %v3426 = vunpack.c.l.b16 %v820
    %v3427 = vunpack.c.h.b16 %v820
    %v3428 = vunpack.c.l.b16 %v821
    %v3429 = vunpack.c.h.b16 %v821
    %v3430 = vunpack.c.l.b16 %v822
    %v3431 = vunpack.c.h.b16 %v822
    %v3432 = vunpack.c.l.b16 %v823
    %v3433 = vunpack.c.h.b16 %v823
    %v3434 = vunpack.c.l.b16 %v824
    %v3435 = vunpack.c.h.b16 %v824
    %v3436 = vunpack.c.l.b16 %v825
    %v3437 = vunpack.c.h.b16 %v825
    %v3438 = vpack.c.b16 %v1842, %v1838
    %v3439 = vpack.c.b16 %v1843, %v1839
    %v3440 = vpack.c.b16 %v1844, %v1840
    %v3441 = vpack.c.b16 %v1845, %v1841
    %v3442 = vpack.c.b16 %v1850, %v1846
    %v3443 = vpack.c.b16 %v1851, %v1847
    %v3444 = vpack.c.b16 %v1852, %v1848
    %v3445 = vpack.c.b16 %v1853, %v1849
    %v3446 = vpack.c.b16 %v1858, %v1854
    %v3447 = vpack.c.b16 %v1859, %v1855
    %v3448 = vpack.c.b16 %v1860, %v1856
    %v3449 = vpack.c.b16 %v1861, %v1857
    %v3450 = vpack.c.b16 %v1866, %v1862
    %v3451 = vpack.c.b16 %v1867, %v1863
    %v3452 = vpack.c.b16 %v1868, %v1864
    %v3453 = vpack.c.b16 %v1869, %v1865
    %v3454 = vpack.c.b16 %v1874, %v1870
    %v3455 = vpack.c.b16 %v1875, %v1871
    %v3456 = vpack.c.b16 %v1876, %v1872
    %v3457 = vpack.c.b16 %v1877, %v1873
    %v3458 = vpack.c.b16 %v1882, %v1878
    %v3459 = vpack.c.b16 %v1883, %v1879
    %v3460 = vpack.c.b16 %v1884, %v1880
    %v3461 = vpack.c.b16 %v1885, %v1881
    %v3462 = vpack.c.b16 %v1890, %v1886
    %v3463 = vpack.c.b16 %v1891, %v1887
    %v3464 = vpack.c.b16 %v1892, %v1888
    %v3465 = vpack.c.b16 %v1893, %v1889
    %v3466 = vpack.c.b16 %v1898, %v1894
    %v3467 = vpack.c.b16 %v1899, %v1895
    %v3468 = vpack.c.b16 %v1900, %v1896
    %v3469 = vpack.c.b16 %v1901, %v1897
    %v3470 = vpack.c.b16 %v1906, %v1902
    %v3471 = vpack.c.b16 %v1907, %v1903
    %v3472 = vpack.c.b16 %v1908, %v1904
    %v3473 = vpack.c.b16 %v1909, %v1905
    %v3474 = vpack.c.b16 %v1914, %v1910
    %v3475 = vpack.c.b16 %v1915, %v1911
    %v3476 = vpack.c.b16 %v1916, %v1912
    %v3477 = vpack.c.b16 %v1917, %v1913
    %v3478 = vpack.c.b16 %v1922, %v1918
    %v3479 = vpack.c.b16 %v1923, %v1919
    %v3480 = vpack.c.b16 %v1924, %v1920
    %v3481 = vpack.c.b16 %v1925, %v1921
    %v3482 = vpack.c.b16 %v1930, %v1926
    %v3483 = vpack.c.b16 %v1931, %v1927
    %v3484 = vpack.c.b16 %v1932, %v1928
    %v3485 = vpack.c.b16 %v1933, %v1929
    %v3486 = vpack.c.b16 %v1938, %v1934
    %v3487 = vpack.c.b16 %v1939, %v1935
    %v3488 = vpack.c.b16 %v1940, %v1936
    %v3489 = vpack.c.b16 %v1941, %v1937
    %v3490 = vpack.c.b16 %v1946, %v1942
    %v3491 = vpack.c.b16 %v1947, %v1943
    %v3492 = vpack.c.b16 %v1948, %v1944
    %v3493 = vpack.c.b16 %v1949, %v1945
    %v3494 = vpack.c.b16 %v1954, %v1950
    %v3495 = vpack.c.b16 %v1955, %v1951
    %v3496 = vpack.c.b16 %v1956, %v1952
    %v3497 = vpack.c.b16 %v1957, %v1953
    %v3498 = vpack.c.b16 %v1962, %v1958
    %v3499 = vpack.c.b16 %v1963, %v1959
    %v3500 = vpack.c.b16 %v1964, %v1960
    %v3501 = vpack.c.b16 %v1965, %v1961
    %v3502 = vpack.c.b16 %v1970, %v1966
    %v3503 = vpack.c.b16 %v1971, %v1967
    %v3504 = vpack.c.b16 %v1972, %v1968
    %v3505 = vpack.c.b16 %v1973, %v1969
    %v3506 = vpack.c.b16 %v1978, %v1974
    %v3507 = vpack.c.b16 %v1979, %v1975
    %v3508 = vpack.c.b16 %v1980, %v1976
    %v3509 = vpack.c.b16 %v1981, %v1977
    %v3510 = vpack.c.b16 %v1986, %v1982
    %v3511 = vpack.c.b16 %v1987, %v1983
    %v3512 = vpack.c.b16 %v1988, %v1984
    %v3513 = vpack.c.b16 %v1989, %v1985
    %v3514 = vpack.c.b16 %v1994, %v1990
    %v3515 = vpack.c.b16 %v1995, %v1991
    %v3516 = vpack.c.b16 %v1996, %v1992
    %v3517 = vpack.c.b16 %v1997, %v1993
    %v3518 = vpack.c.b16 %v2002, %v1998
    %v3519 = vpack.c.b16 %v2003, %v1999
    %v3520 = vpack.c.b16 %v2004, %v2000
    %v3521 = vpack.c.b16 %v2005, %v2001
    %v3522 = vpack.c.b16 %v2010, %v2006
    %v3523 = vpack.c.b16 %v2011, %v2007
    %v3524 = vpack.c.b16 %v2012, %v2008
    %v3525 = vpack.c.b16 %v2013, %v2009
    %v3526 = vpack.c.b16 %v2018, %v2014
    %v3527 = vpack.c.b16 %v2019, %v2015
    %v3528 = vpack.c.b16 %v2020, %v2016
    %v3529 = vpack.c.b16 %v2021, %v2017
    %v3530 = vpack.c.b16 %v2026, %v2022
    %v3531 = vpack.c.b16 %v2027, %v2023
    %v3532 = vpack.c.b16 %v2028, %v2024
    %v3533 = vpack.c.b16 %v2029, %v2025
    %v3534 = vpack.c.b16 %v2034, %v2030
    %v3535 = vpack.c.b16 %v2035, %v2031
    %v3536 = vpack.c.b16 %v2036, %v2032
    %v3537 = vpack.c.b16 %v2037, %v2033
    %v3538 = vpack.c.b16 %v2042, %v2038
    %v3539 = vpack.c.b16 %v2043, %v2039
    %v3540 = vpack.c.b16 %v2044, %v2040
    %v3541 = vpack.c.b16 %v2045, %v2041
    %v3542 = vpack.c.b16 %v2050, %v2046
    %v3543 = vpack.c.b16 %v2051, %v2047
    %v3544 = vpack.c.b16 %v2052, %v2048
    %v3545 = vpack.c.b16 %v2053, %v2049
    %v3546 = vpack.c.b16 %v2058, %v2054
    %v3547 = vpack.c.b16 %v2059, %v2055
    %v3548 = vpack.c.b16 %v2060, %v2056
    %v3549 = vpack.c.b16 %v2061, %v2057
    %v3550 = vpack.c.b16 %v2066, %v2062
    %v3551 = vpack.c.b16 %v2067, %v2063
    %v3552 = vpack.c.b16 %v2068, %v2064
    %v3553 = vpack.c.b16 %v2069, %v2065
    %v3554 = vpack.c.b16 %v2074, %v2070
    %v3555 = vpack.c.b16 %v2075, %v2071
    %v3556 = vpack.c.b16 %v2076, %v2072
    %v3557 = vpack.c.b16 %v2077, %v2073
    %v3558 = vpack.c.b16 %v2082, %v2078
    %v3559 = vpack.c.b16 %v2083, %v2079
    %v3560 = vpack.c.b16 %v2084, %v2080
    %v3561 = vpack.c.b16 %v2085, %v2081
    %v3562 = vpack.c.b16 %v2090, %v2086
    %v3563 = vpack.c.b16 %v2091, %v2087
    %v3564 = vpack.c.b16 %v2092, %v2088
    %v3565 = vpack.c.b16 %v2093, %v2089
    %v3566 = vpack.c.b16 %v2098, %v2094
    %v3567 = vpack.c.b16 %v2099, %v2095
    %v3568 = vpack.c.b16 %v2100, %v2096
    %v3569 = vpack.c.b16 %v2101, %v2097
    %v3570 = vpack.c.b16 %v2106, %v2102
    %v3571 = vpack.c.b16 %v2107, %v2103
    %v3572 = vpack.c.b16 %v2108, %v2104
    %v3573 = vpack.c.b16 %v2109, %v2105
    %v3574 = vpack.c.b16 %v2114, %v2110
    %v3575 = vpack.c.b16 %v2115, %v2111
    %v3576 = vpack.c.b16 %v2116, %v2112
    %v3577 = vpack.c.b16 %v2117, %v2113
    %v3578 = vpack.c.b16 %v2122, %v2118
    %v3579 = vpack.c.b16 %v2123, %v2119
    %v3580 = vpack.c.b16 %v2124, %v2120
    %v3581 = vpack.c.b16 %v2125, %v2121
    %v3582 = vpack.c.b16 %v2130, %v2126
    %v3583 = vpack.c.b16 %v2131, %v2127
    %v3584 = vpack.c.b16 %v2132, %v2128
    %v3585 = vpack.c.b16 %v2133, %v2129
    %v3586 = vpack.c.b16 %v2138, %v2134
    %v3587 = vpack.c.b16 %v2139, %v2135
    %v3588 = vpack.c.b16 %v2140, %v2136
    %v3589 = vpack.c.b16 %v2141, %v2137
    %v3590 = vpack.c.b16 %v2146, %v2142
    %v3591 = vpack.c.b16 %v2147, %v2143
    %v3592 = vpack.c.b16 %v2148, %v2144
    %v3593 = vpack.c.b16 %v2149, %v2145
    %v3594 = vpack.c.b16 %v2154, %v2150
    %v3595 = vpack.c.b16 %v2155, %v2151
    %v3596 = vpack.c.b16 %v2156, %v2152
    %v3597 = vpack.c.b16 %v2157, %v2153
    %v3598 = vpack.c.b16 %v2162, %v2158
    %v3599 = vpack.c.b16 %v2163, %v2159
    %v3600 = vpack.c.b16 %v2164, %v2160
    %v3601 = vpack.c.b16 %v2165, %v2161
    %v3602 = vpack.c.b16 %v2170, %v2166
    %v3603 = vpack.c.b16 %v2171, %v2167
    %v3604 = vpack.c.b16 %v2172, %v2168
    %v3605 = vpack.c.b16 %v2173, %v2169
    %v3606 = vpack.c.b16 %v2178, %v2174
    %v3607 = vpack.c.b16 %v2179, %v2175
    %v3608 = vpack.c.b16 %v2180, %v2176
    %v3609 = vpack.c.b16 %v2181, %v2177
    %v3610 = vpack.c.b16 %v2186, %v2182
    %v3611 = vpack.c.b16 %v2187, %v2183
    %v3612 = vpack.c.b16 %v2188, %v2184
    %v3613 = vpack.c.b16 %v2189, %v2185
    %v3614 = vpack.c.b16 %v2194, %v2190
    %v3615 = vpack.c.b16 %v2195, %v2191
    %v3616 = vpack.c.b16 %v2196, %v2192
    %v3617 = vpack.c.b16 %v2197, %v2193
    %v3618 = vpack.c.b16 %v2202, %v2198
    %v3619 = vpack.c.b16 %v2203, %v2199
    %v3620 = vpack.c.b16 %v2204, %v2200
    %v3621 = vpack.c.b16 %v2205, %v2201
    %v3622 = vpack.c.b16 %v2210, %v2206
    %v3623 = vpack.c.b16 %v2211, %v2207
    %v3624 = vpack.c.b16 %v2212, %v2208
    %v3625 = vpack.c.b16 %v2213, %v2209
    %v3626 = vpack.c.b16 %v2218, %v2214
    %v3627 = vpack.c.b16 %v2219, %v2215
    %v3628 = vpack.c.b16 %v2220, %v2216
    %v3629 = vpack.c.b16 %v2221, %v2217
    %v3630 = vpack.c.b16 %v2226, %v2222
    %v3631 = vpack.c.b16 %v2227, %v2223
    %v3632 = vpack.c.b16 %v2228, %v2224
    %v3633 = vpack.c.b16 %v2229, %v2225
    %v3634 = vpack.c.b16 %v2234, %v2230
    %v3635 = vpack.c.b16 %v2235, %v2231
    %v3636 = vpack.c.b16 %v2236, %v2232
    %v3637 = vpack.c.b16 %v2237, %v2233
    %v3638 = vpack.c.b16 %v2242, %v2238
    %v3639 = vpack.c.b16 %v2243, %v2239
    %v3640 = vpack.c.b16 %v2244, %v2240
    %v3641 = vpack.c.b16 %v2245, %v2241
    %v3642 = vpack.c.b16 %v2250, %v2246
    %v3643 = vpack.c.b16 %v2251, %v2247
    %v3644 = vpack.c.b16 %v2252, %v2248
    %v3645 = vpack.c.b16 %v2253, %v2249
    %v3646 = vpack.c.b16 %v2258, %v2254
    %v3647 = vpack.c.b16 %v2259, %v2255
    %v3648 = vpack.c.b16 %v2260, %v2256
    %v3649 = vpack.c.b16 %v2261, %v2257
    %v3650 = vpack.c.b16 %v2266, %v2262
    %v3651 = vpack.c.b16 %v2267, %v2263
    %v3652 = vpack.c.b16 %v2268, %v2264
    %v3653 = vpack.c.b16 %v2269, %v2265
    %v3654 = vpack.c.b16 %v2274, %v2270
    %v3655 = vpack.c.b16 %v2275, %v2271
    %v3656 = vpack.c.b16 %v2276, %v2272
    %v3657 = vpack.c.b16 %v2277, %v2273
    %v3658 = vpack.c.b16 %v2282, %v2278
    %v3659 = vpack.c.b16 %v2283, %v2279
    %v3660 = vpack.c.b16 %v2284, %v2280
    %v3661 = vpack.c.b16 %v2285, %v2281
    %v3662 = vpack.c.b16 %v2290, %v2286
    %v3663 = vpack.c.b16 %v2291, %v2287
    %v3664 = vpack.c.b16 %v2292, %v2288
    %v3665 = vpack.c.b16 %v2293, %v2289
    %v3666 = vpack.c.b16 %v2298, %v2294
    %v3667 = vpack.c.b16 %v2299, %v2295
    %v3668 = vpack.c.b16 %v2300, %v2296
    %v3669 = vpack.c.b16 %v2301, %v2297
    %v3670 = vpack.c.b16 %v2306, %v2302
    %v3671 = vpack.c.b16 %v2307, %v2303
    %v3672 = vpack.c.b16 %v2308, %v2304
    %v3673 = vpack.c.b16 %v2309, %v2305
    %v3674 = vpack.c.b16 %v2314, %v2310
    %v3675 = vpack.c.b16 %v2315, %v2311
    %v3676 = vpack.c.b16 %v2316, %v2312
    %v3677 = vpack.c.b16 %v2317, %v2313
    %v3678 = vpack.c.b16 %v2322, %v2318
    %v3679 = vpack.c.b16 %v2323, %v2319
    %v3680 = vpack.c.b16 %v2324, %v2320
    %v3681 = vpack.c.b16 %v2325, %v2321
    %v3682 = vpack.c.b16 %v2330, %v2326
    %v3683 = vpack.c.b16 %v2331, %v2327
    %v3684 = vpack.c.b16 %v2332, %v2328
    %v3685 = vpack.c.b16 %v2333, %v2329
    %v3686 = vpack.c.b16 %v2338, %v2334
    %v3687 = vpack.c.b16 %v2339, %v2335
    %v3688 = vpack.c.b16 %v2340, %v2336
    %v3689 = vpack.c.b16 %v2341, %v2337
    %v3690 = vpack.c.b16 %v2346, %v2342
    %v3691 = vpack.c.b16 %v2347, %v2343
    %v3692 = vpack.c.b16 %v2348, %v2344
    %v3693 = vpack.c.b16 %v2349, %v2345
    %v3694 = vpack.c.b16 %v2354, %v2350
    %v3695 = vpack.c.b16 %v2355, %v2351
    %v3696 = vpack.c.b16 %v2356, %v2352
    %v3697 = vpack.c.b16 %v2357, %v2353
    %v3698 = vpack.c.b16 %v2362, %v2358
    %v3699 = vpack.c.b16 %v2363, %v2359
    %v3700 = vpack.c.b16 %v2364, %v2360
    %v3701 = vpack.c.b16 %v2365, %v2361
    %v3702 = vpack.c.b16 %v2370, %v2366
    %v3703 = vpack.c.b16 %v2371, %v2367
    %v3704 = vpack.c.b16 %v2372, %v2368
    %v3705 = vpack.c.b16 %v2373, %v2369
    %v3706 = vpack.c.b16 %v2378, %v2374
    %v3707 = vpack.c.b16 %v2379, %v2375
    %v3708 = vpack.c.b16 %v2380, %v2376
    %v3709 = vpack.c.b16 %v2381, %v2377
    %v3710 = vpack.c.b16 %v2386, %v2382
    %v3711 = vpack.c.b16 %v2387, %v2383
    %v3712 = vpack.c.b16 %v2388, %v2384
    %v3713 = vpack.c.b16 %v2389, %v2385
    %v3714 = vpack.c.b16 %v2394, %v2390
    %v3715 = vpack.c.b16 %v2395, %v2391
    %v3716 = vpack.c.b16 %v2396, %v2392
    %v3717 = vpack.c.b16 %v2397, %v2393
    %v3718 = vpack.c.b16 %v2402, %v2398
    %v3719 = vpack.c.b16 %v2403, %v2399
    %v3720 = vpack.c.b16 %v2404, %v2400
    %v3721 = vpack.c.b16 %v2405, %v2401
    %v3722 = vpack.c.b16 %v2410, %v2406
    %v3723 = vpack.c.b16 %v2411, %v2407
    %v3724 = vpack.c.b16 %v2412, %v2408
    %v3725 = vpack.c.b16 %v2413, %v2409
    %v3726 = vpack.c.b16 %v2418, %v2414
    %v3727 = vpack.c.b16 %v2419, %v2415
    %v3728 = vpack.c.b16 %v2420, %v2416
    %v3729 = vpack.c.b16 %v2421, %v2417
    %v3730 = vpack.c.b16 %v2426, %v2422
    %v3731 = vpack.c.b16 %v2427, %v2423
    %v3732 = vpack.c.b16 %v2428, %v2424
    %v3733 = vpack.c.b16 %v2429, %v2425
    %v3734 = vpack.c.b16 %v2434, %v2430
    %v3735 = vpack.c.b16 %v2435, %v2431
    %v3736 = vpack.c.b16 %v2436, %v2432
    %v3737 = vpack.c.b16 %v2437, %v2433
    %v3738 = vpack.c.b16 %v2442, %v2438
    %v3739 = vpack.c.b16 %v2443, %v2439
    %v3740 = vpack.c.b16 %v2444, %v2440
    %v3741 = vpack.c.b16 %v2445, %v2441
    %v3742 = vpack.c.b16 %v2450, %v2446
    %v3743 = vpack.c.b16 %v2451, %v2447
    %v3744 = vpack.c.b16 %v2452, %v2448
    %v3745 = vpack.c.b16 %v2453, %v2449
    %v3746 = vpack.c.b16 %v2458, %v2454
    %v3747 = vpack.c.b16 %v2459, %v2455
    %v3748 = vpack.c.b16 %v2460, %v2456
    %v3749 = vpack.c.b16 %v2461, %v2457
    %v3750 = vpack.c.b16 %v2466, %v2462
    %v3751 = vpack.c.b16 %v2467, %v2463
    %v3752 = vpack.c.b16 %v2468, %v2464
    %v3753 = vpack.c.b16 %v2469, %v2465
    %v3754 = vpack.c.b16 %v2474, %v2470
    %v3755 = vpack.c.b16 %v2475, %v2471
    %v3756 = vpack.c.b16 %v2476, %v2472
    %v3757 = vpack.c.b16 %v2477, %v2473
    %v3758 = vpack.c.b16 %v2482, %v2478
    %v3759 = vpack.c.b16 %v2483, %v2479
    %v3760 = vpack.c.b16 %v2484, %v2480
    %v3761 = vpack.c.b16 %v2485, %v2481
    %v3762 = vpack.c.b16 %v2490, %v2486
    %v3763 = vpack.c.b16 %v2491, %v2487
    %v3764 = vpack.c.b16 %v2492, %v2488
    %v3765 = vpack.c.b16 %v2493, %v2489
    %v3766 = vpack.c.b16 %v2498, %v2494
    %v3767 = vpack.c.b16 %v2499, %v2495
    %v3768 = vpack.c.b16 %v2500, %v2496
    %v3769 = vpack.c.b16 %v2501, %v2497
    %v3770 = vpack.c.b16 %v2506, %v2502
    %v3771 = vpack.c.b16 %v2507, %v2503
    %v3772 = vpack.c.b16 %v2508, %v2504
    %v3773 = vpack.c.b16 %v2509, %v2505
    %v3774 = vpack.c.b16 %v2514, %v2510
    %v3775 = vpack.c.b16 %v2515, %v2511
    %v3776 = vpack.c.b16 %v2516, %v2512
    %v3777 = vpack.c.b16 %v2517, %v2513
    %v3778 = vpack.c.b16 %v2522, %v2518
    %v3779 = vpack.c.b16 %v2523, %v2519
    %v3780 = vpack.c.b16 %v2524, %v2520
    %v3781 = vpack.c.b16 %v2525, %v2521
    %v3782 = vpack.c.b16 %v2530, %v2526
    %v3783 = vpack.c.b16 %v2531, %v2527
    %v3784 = vpack.c.b16 %v2532, %v2528
    %v3785 = vpack.c.b16 %v2533, %v2529
    %v3786 = vpack.c.b16 %v2538, %v2534
    %v3787 = vpack.c.b16 %v2539, %v2535
    %v3788 = vpack.c.b16 %v2540, %v2536
    %v3789 = vpack.c.b16 %v2541, %v2537
    %v3790 = vpack.c.b16 %v2546, %v2542
    %v3791 = vpack.c.b16 %v2547, %v2543
    %v3792 = vpack.c.b16 %v2548, %v2544
    %v3793 = vpack.c.b16 %v2549, %v2545
    %v3794 = vpack.c.b16 %v2554, %v2550
    %v3795 = vpack.c.b16 %v2555, %v2551
    %v3796 = vpack.c.b16 %v2556, %v2552
    %v3797 = vpack.c.b16 %v2557, %v2553
    %v3798 = vpack.c.b16 %v2562, %v2558
    %v3799 = vpack.c.b16 %v2563, %v2559
    %v3800 = vpack.c.b16 %v2564, %v2560
    %v3801 = vpack.c.b16 %v2565, %v2561
    %v3802 = vpack.c.b16 %v2570, %v2566
    %v3803 = vpack.c.b16 %v2571, %v2567
    %v3804 = vpack.c.b16 %v2572, %v2568
    %v3805 = vpack.c.b16 %v2573, %v2569
    %v3806 = vpack.c.b16 %v2578, %v2574
    %v3807 = vpack.c.b16 %v2579, %v2575
    %v3808 = vpack.c.b16 %v2580, %v2576
    %v3809 = vpack.c.b16 %v2581, %v2577
    %v3810 = vpack.c.b16 %v2586, %v2582
    %v3811 = vpack.c.b16 %v2587, %v2583
    %v3812 = vpack.c.b16 %v2588, %v2584
    %v3813 = vpack.c.b16 %v2589, %v2585
    %v3814 = vpack.c.b16 %v2594, %v2590
    %v3815 = vpack.c.b16 %v2595, %v2591
    %v3816 = vpack.c.b16 %v2596, %v2592
    %v3817 = vpack.c.b16 %v2597, %v2593
    %v3818 = vpack.c.b16 %v2602, %v2598
    %v3819 = vpack.c.b16 %v2603, %v2599
    %v3820 = vpack.c.b16 %v2604, %v2600
    %v3821 = vpack.c.b16 %v2605, %v2601
    %v3822 = vpack.c.b16 %v2610, %v2606
    %v3823 = vpack.c.b16 %v2611, %v2607
    %v3824 = vpack.c.b16 %v2612, %v2608
    %v3825 = vpack.c.b16 %v2613, %v2609
    %v3826 = vpack.c.b16 %v2618, %v2614
    %v3827 = vpack.c.b16 %v2619, %v2615
    %v3828 = vpack.c.b16 %v2620, %v2616
    %v3829 = vpack.c.b16 %v2621, %v2617
    %v3830 = vpack.c.b16 %v2626, %v2622
    %v3831 = vpack.c.b16 %v2627, %v2623
    %v3832 = vpack.c.b16 %v2628, %v2624
    %v3833 = vpack.c.b16 %v2629, %v2625
    %v3834 = vpack.c.b16 %v2634, %v2630
    %v3835 = vpack.c.b16 %v2635, %v2631
    %v3836 = vpack.c.b16 %v2636, %v2632
    %v3837 = vpack.c.b16 %v2637, %v2633
    %v3838 = vpack.c.b16 %v2642, %v2638
    %v3839 = vpack.c.b16 %v2643, %v2639
    %v3840 = vpack.c.b16 %v2644, %v2640
    %v3841 = vpack.c.b16 %v2645, %v2641
    %v3842 = vpack.c.b16 %v2650, %v2646
    %v3843 = vpack.c.b16 %v2651, %v2647
    %v3844 = vpack.c.b16 %v2652, %v2648
    %v3845 = vpack.c.b16 %v2653, %v2649
    %v3846 = vpack.c.b16 %v2658, %v2654
    %v3847 = vpack.c.b16 %v2659, %v2655
    %v3848 = vpack.c.b16 %v2660, %v2656
    %v3849 = vpack.c.b16 %v2661, %v2657
    %v3850 = vpack.c.b16 %v2666, %v2662
    %v3851 = vpack.c.b16 %v2667, %v2663
    %v3852 = vpack.c.b16 %v2668, %v2664
    %v3853 = vpack.c.b16 %v2669, %v2665
    %v3854 = vpack.c.b16 %v2674, %v2670
    %v3855 = vpack.c.b16 %v2675, %v2671
    %v3856 = vpack.c.b16 %v2676, %v2672
    %v3857 = vpack.c.b16 %v2677, %v2673
    %v3858 = vpack.c.b16 %v2682, %v2678
    %v3859 = vpack.c.b16 %v2683, %v2679
    %v3860 = vpack.c.b16 %v2684, %v2680
    %v3861 = vpack.c.b16 %v2685, %v2681
    %v3862 = vpack.c.b16 %v2690, %v2686
    %v3863 = vpack.c.b16 %v2691, %v2687
    %v3864 = vpack.c.b16 %v2692, %v2688
    %v3865 = vpack.c.b16 %v2693, %v2689
    %v3866 = vpack.c.b16 %v2698, %v2694
    %v3867 = vpack.c.b16 %v2699, %v2695
    %v3868 = vpack.c.b16 %v2700, %v2696
    %v3869 = vpack.c.b16 %v2701, %v2697
    %v3870 = vpack.c.b16 %v2706, %v2702
    %v3871 = vpack.c.b16 %v2707, %v2703
    %v3872 = vpack.c.b16 %v2708, %v2704
    %v3873 = vpack.c.b16 %v2709, %v2705
    %v3874 = vpack.c.b16 %v2714, %v2710
    %v3875 = vpack.c.b16 %v2715, %v2711
    %v3876 = vpack.c.b16 %v2716, %v2712
    %v3877 = vpack.c.b16 %v2717, %v2713
    %v3878 = vpack.c.b16 %v2722, %v2718
    %v3879 = vpack.c.b16 %v2723, %v2719
    %v3880 = vpack.c.b16 %v2724, %v2720
    %v3881 = vpack.c.b16 %v2725, %v2721
    %v3882 = vpack.c.b16 %v2730, %v2726
    %v3883 = vpack.c.b16 %v2731, %v2727
    %v3884 = vpack.c.b16 %v2732, %v2728
    %v3885 = vpack.c.b16 %v2733, %v2729
    %v3886 = vpack.c.b16 %v2738, %v2734
    %v3887 = vpack.c.b16 %v2739, %v2735
    %v3888 = vpack.c.b16 %v2740, %v2736
    %v3889 = vpack.c.b16 %v2741, %v2737
    %v3890 = vpack.c.b16 %v2746, %v2742
    %v3891 = vpack.c.b16 %v2747, %v2743
    %v3892 = vpack.c.b16 %v2748, %v2744
    %v3893 = vpack.c.b16 %v2749, %v2745
    %v3894 = vpack.c.b16 %v2754, %v2750
    %v3895 = vpack.c.b16 %v2755, %v2751
    %v3896 = vpack.c.b16 %v2756, %v2752
    %v3897 = vpack.c.b16 %v2757, %v2753
    %v3898 = vpack.c.b16 %v2762, %v2758
    %v3899 = vpack.c.b16 %v2763, %v2759
    %v3900 = vpack.c.b16 %v2764, %v2760
    %v3901 = vpack.c.b16 %v2765, %v2761
    %v3902 = vpack.c.b16 %v2770, %v2766
    %v3903 = vpack.c.b16 %v2771, %v2767
    %v3904 = vpack.c.b16 %v2772, %v2768
    %v3905 = vpack.c.b16 %v2773, %v2769
    %v3906 = vpack.c.b16 %v2778, %v2774
    %v3907 = vpack.c.b16 %v2779, %v2775
    %v3908 = vpack.c.b16 %v2780, %v2776
    %v3909 = vpack.c.b16 %v2781, %v2777
    %v3910 = vpack.c.b16 %v2786, %v2782
    %v3911 = vpack.c.b16 %v2787, %v2783
    %v3912 = vpack.c.b16 %v2788, %v2784
    %v3913 = vpack.c.b16 %v2789, %v2785
    %v3914 = vpack.c.b16 %v2794, %v2790
    %v3915 = vpack.c.b16 %v2795, %v2791
    %v3916 = vpack.c.b16 %v2796, %v2792
    %v3917 = vpack.c.b16 %v2797, %v2793
    %v3918 = vpack.c.b16 %v2802, %v2798
    %v3919 = vpack.c.b16 %v2803, %v2799
    %v3920 = vpack.c.b16 %v2804, %v2800
    %v3921 = vpack.c.b16 %v2805, %v2801
    %v3922 = vpack.c.b16 %v2810, %v2806
    %v3923 = vpack.c.b16 %v2811, %v2807
    %v3924 = vpack.c.b16 %v2812, %v2808
    %v3925 = vpack.c.b16 %v2813, %v2809
    %v3926 = vpack.c.b16 %v2818, %v2814
    %v3927 = vpack.c.b16 %v2819, %v2815
    %v3928 = vpack.c.b16 %v2820, %v2816
    %v3929 = vpack.c.b16 %v2821, %v2817
    %v3930 = vpack.c.b16 %v2826, %v2822
    %v3931 = vpack.c.b16 %v2827, %v2823
    %v3932 = vpack.c.b16 %v2828, %v2824
    %v3933 = vpack.c.b16 %v2829, %v2825
    %v3934 = vpack.c.b16 %v2834, %v2830
    %v3935 = vpack.c.b16 %v2835, %v2831
    %v3936 = vpack.c.b16 %v2836, %v2832
    %v3937 = vpack.c.b16 %v2837, %v2833
    %v3938 = vpack.c.b16 %v2842, %v2838
    %v3939 = vpack.c.b16 %v2843, %v2839
    %v3940 = vpack.c.b16 %v2844, %v2840
    %v3941 = vpack.c.b16 %v2845, %v2841
    %v3942 = vpack.c.b16 %v2850, %v2846
    %v3943 = vpack.c.b16 %v2851, %v2847
    %v3944 = vpack.c.b16 %v2852, %v2848
    %v3945 = vpack.c.b16 %v2853, %v2849
    %v3946 = vpack.c.b16 %v2858, %v2854
    %v3947 = vpack.c.b16 %v2859, %v2855
    %v3948 = vpack.c.b16 %v2860, %v2856
    %v3949 = vpack.c.b16 %v2861, %v2857
    %v3950 = vpack.c.b16 %v2866, %v2862
    %v3951 = vpack.c.b16 %v2867, %v2863
    %v3952 = vpack.c.b16 %v2868, %v2864
    %v3953 = vpack.c.b16 %v2869, %v2865
    %v3954 = vpack.c.b16 %v2874, %v2870
    %v3955 = vpack.c.b16 %v2875, %v2871
    %v3956 = vpack.c.b16 %v2876, %v2872
    %v3957 = vpack.c.b16 %v2877, %v2873
    %v3958 = vpack.c.b16 %v2882, %v2878
    %v3959 = vpack.c.b16 %v2883, %v2879
    %v3960 = vpack.c.b16 %v2884, %v2880
    %v3961 = vpack.c.b16 %v2885, %v2881
    %v3962 = vpack.c.b16 %v2890, %v2886
    %v3963 = vpack.c.b16 %v2891, %v2887
    %v3964 = vpack.c.b16 %v2892, %v2888
    %v3965 = vpack.c.b16 %v2893, %v2889
    %v3966 = vpack.c.b16 %v2898, %v2894
    %v3967 = vpack.c.b16 %v2899, %v2895
    %v3968 = vpack.c.b16 %v2900, %v2896
    %v3969 = vpack.c.b16 %v2901, %v2897
    %v3970 = vpack.c.b16 %v2906, %v2902
    %v3971 = vpack.c.b16 %v2907, %v2903
    %v3972 = vpack.c.b16 %v2908, %v2904
    %v3973 = vpack.c.b16 %v2909, %v2905
    %v3974 = vpack.c.b16 %v2914, %v2910
    %v3975 = vpack.c.b16 %v2915, %v2911
    %v3976 = vpack.c.b16 %v2916, %v2912
    %v3977 = vpack.c.b16 %v2917, %v2913
    %v3978 = vpack.c.b16 %v2922, %v2918
    %v3979 = vpack.c.b16 %v2923, %v2919
    %v3980 = vpack.c.b16 %v2924, %v2920
    %v3981 = vpack.c.b16 %v2925, %v2921
    %v3982 = vpack.c.b16 %v2930, %v2926
    %v3983 = vpack.c.b16 %v2931, %v2927
    %v3984 = vpack.c.b16 %v2932, %v2928
    %v3985 = vpack.c.b16 %v2933, %v2929
    %v3986 = vpack.c.b16 %v2938, %v2934
    %v3987 = vpack.c.b16 %v2939, %v2935
    %v3988 = vpack.c.b16 %v2940, %v2936
    %v3989 = vpack.c.b16 %v2941, %v2937
    %v3990 = vpack.c.b16 %v2946, %v2942
    %v3991 = vpack.c.b16 %v2947, %v2943
    %v3992 = vpack.c.b16 %v2948, %v2944
    %v3993 = vpack.c.b16 %v2949, %v2945
    %v3994 = vpack.c.b16 %v2954, %v2950
    %v3995 = vpack.c.b16 %v2955, %v2951
    %v3996 = vpack.c.b16 %v2956, %v2952
    %v3997 = vpack.c.b16 %v2957, %v2953
    %v3998 = vpack.c.b16 %v2962, %v2958
    %v3999 = vpack.c.b16 %v2963, %v2959
    %v4000 = vpack.c.b16 %v2964, %v2960
    %v4001 = vpack.c.b16 %v2965, %v2961
    %v4002 = vpack.c.b16 %v2970, %v2966
    %v4003 = vpack.c.b16 %v2971, %v2967
    %v4004 = vpack.c.b16 %v2972, %v2968
    %v4005 = vpack.c.b16 %v2973, %v2969
    %v4006 = vpack.c.b16 %v2978, %v2974
    %v4007 = vpack.c.b16 %v2979, %v2975
    %v4008 = vpack.c.b16 %v2980, %v2976
    %v4009 = vpack.c.b16 %v2981, %v2977
    %v4010 = vpack.c.b16 %v2986, %v2982
    %v4011 = vpack.c.b16 %v2987, %v2983
    %v4012 = vpack.c.b16 %v2988, %v2984
    %v4013 = vpack.c.b16 %v2989, %v2985
    %v4014 = vpack.c.b16 %v2994, %v2990
    %v4015 = vpack.c.b16 %v2995, %v2991
    %v4016 = vpack.c.b16 %v2996, %v2992
    %v4017 = vpack.c.b16 %v2997, %v2993
    %v4018 = vpack.c.b16 %v3002, %v2998
    %v4019 = vpack.c.b16 %v3003, %v2999
    %v4020 = vpack.c.b16 %v3004, %v3000
    %v4021 = vpack.c.b16 %v3005, %v3001
    %v4022 = vpack.c.b16 %v3010, %v3006
    %v4023 = vpack.c.b16 %v3011, %v3007
    %v4024 = vpack.c.b16 %v3012, %v3008
    %v4025 = vpack.c.b16 %v3013, %v3009
    %v4026 = vpack.c.b16 %v3018, %v3014
    %v4027 = vpack.c.b16 %v3019, %v3015
    %v4028 = vpack.c.b16 %v3020, %v3016
    %v4029 = vpack.c.b16 %v3021, %v3017
    %v4030 = vpack.c.b16 %v3026, %v3022
    %v4031 = vpack.c.b16 %v3027, %v3023
    %v4032 = vpack.c.b16 %v3028, %v3024
    %v4033 = vpack.c.b16 %v3029, %v3025
    %v4034 = vpack.c.b16 %v3034, %v3030
    %v4035 = vpack.c.b16 %v3035, %v3031
    %v4036 = vpack.c.b16 %v3036, %v3032
    %v4037 = vpack.c.b16 %v3037, %v3033
    %v4038 = vpack.c.b16 %v3042, %v3038
    %v4039 = vpack.c.b16 %v3043, %v3039
    %v4040 = vpack.c.b16 %v3044, %v3040
    %v4041 = vpack.c.b16 %v3045, %v3041
    %v4042 = vpack.c.b16 %v3050, %v3046
    %v4043 = vpack.c.b16 %v3051, %v3047
    %v4044 = vpack.c.b16 %v3052, %v3048
    %v4045 = vpack.c.b16 %v3053, %v3049
    %v4046 = vpack.c.b16 %v3058, %v3054
    %v4047 = vpack.c.b16 %v3059, %v3055
    %v4048 = vpack.c.b16 %v3060, %v3056
    %v4049 = vpack.c.b16 %v3061, %v3057
    %v4050 = vpack.c.b16 %v3066, %v3062
    %v4051 = vpack.c.b16 %v3067, %v3063
    %v4052 = vpack.c.b16 %v3068, %v3064
    %v4053 = vpack.c.b16 %v3069, %v3065
    %v4054 = vpack.c.b16 %v3074, %v3070
    %v4055 = vpack.c.b16 %v3075, %v3071
    %v4056 = vpack.c.b16 %v3076, %v3072
    %v4057 = vpack.c.b16 %v3077, %v3073
    %v4058 = vpack.c.b16 %v3082, %v3078
    %v4059 = vpack.c.b16 %v3083, %v3079
    %v4060 = vpack.c.b16 %v3084, %v3080
    %v4061 = vpack.c.b16 %v3085, %v3081
    %v4062 = vpack.c.b16 %v3090, %v3086
    %v4063 = vpack.c.b16 %v3091, %v3087
    %v4064 = vpack.c.b16 %v3092, %v3088
    %v4065 = vpack.c.b16 %v3093, %v3089
    %v4066 = vpack.c.b16 %v3098, %v3094
    %v4067 = vpack.c.b16 %v3099, %v3095
    %v4068 = vpack.c.b16 %v3100, %v3096
    %v4069 = vpack.c.b16 %v3101, %v3097
    %v4070 = vpack.c.b16 %v3106, %v3102
    %v4071 = vpack.c.b16 %v3107, %v3103
    %v4072 = vpack.c.b16 %v3108, %v3104
    %v4073 = vpack.c.b16 %v3109, %v3105
    %v4074 = vpack.c.b16 %v3114, %v3110
    %v4075 = vpack.c.b16 %v3115, %v3111
    %v4076 = vpack.c.b16 %v3116, %v3112
    %v4077 = vpack.c.b16 %v3117, %v3113
    %v4078 = vpack.c.b16 %v3122, %v3118
    %v4079 = vpack.c.b16 %v3123, %v3119
    %v4080 = vpack.c.b16 %v3124, %v3120
    %v4081 = vpack.c.b16 %v3125, %v3121
    %v4082 = vpack.c.b16 %v3130, %v3126
    %v4083 = vpack.c.b16 %v3131, %v3127
    %v4084 = vpack.c.b16 %v3132, %v3128
    %v4085 = vpack.c.b16 %v3133, %v3129
    %v4086 = vpack.c.b16 %v3138, %v3134
    %v4087 = vpack.c.b16 %v3139, %v3135
    %v4088 = vpack.c.b16 %v3140, %v3136
    %v4089 = vpack.c.b16 %v3141, %v3137
    %v4090 = vpack.c.b16 %v3146, %v3142
    %v4091 = vpack.c.b16 %v3147, %v3143
    %v4092 = vpack.c.b16 %v3148, %v3144
    %v4093 = vpack.c.b16 %v3149, %v3145
    %v4094 = vpack.c.b16 %v3154, %v3150
    %v4095 = vpack.c.b16 %v3155, %v3151
    %v4096 = vpack.c.b16 %v3156, %v3152
    %v4097 = vpack.c.b16 %v3157, %v3153
    %v4098 = vpack.c.b16 %v3162, %v3158
    %v4099 = vpack.c.b16 %v3163, %v3159
    %v4100 = vpack.c.b16 %v3164, %v3160
    %v4101 = vpack.c.b16 %v3165, %v3161
    %v4102 = vpack.c.b16 %v3170, %v3166
    %v4103 = vpack.c.b16 %v3171, %v3167
    %v4104 = vpack.c.b16 %v3172, %v3168
    %v4105 = vpack.c.b16 %v3173, %v3169
    %v4106 = vpack.c.b16 %v3178, %v3174
    %v4107 = vpack.c.b16 %v3179, %v3175
    %v4108 = vpack.c.b16 %v3180, %v3176
    %v4109 = vpack.c.b16 %v3181, %v3177
    %v4110 = vpack.c.b16 %v3186, %v3182
    %v4111 = vpack.c.b16 %v3187, %v3183
    %v4112 = vpack.c.b16 %v3188, %v3184
    %v4113 = vpack.c.b16 %v3189, %v3185
    %v4114 = vpack.c.b16 %v3194, %v3190
    %v4115 = vpack.c.b16 %v3195, %v3191
    %v4116 = vpack.c.b16 %v3196, %v3192
    %v4117 = vpack.c.b16 %v3197, %v3193
    %v4118 = vpack.c.b16 %v3202, %v3198
    %v4119 = vpack.c.b16 %v3203, %v3199
    %v4120 = vpack.c.b16 %v3204, %v3200
    %v4121 = vpack.c.b16 %v3205, %v3201
    %v4122 = vpack.c.b16 %v3210, %v3206
    %v4123 = vpack.c.b16 %v3211, %v3207
    %v4124 = vpack.c.b16 %v3212, %v3208
    %v4125 = vpack.c.b16 %v3213, %v3209
    %v4126 = vpack.c.b16 %v3218, %v3214
    %v4127 = vpack.c.b16 %v3219, %v3215
    %v4128 = vpack.c.b16 %v3220, %v3216
    %v4129 = vpack.c.b16 %v3221, %v3217
    %v4130 = vpack.c.b16 %v3226, %v3222
    %v4131 = vpack.c.b16 %v3227, %v3223
    %v4132 = vpack.c.b16 %v3228, %v3224
    %v4133 = vpack.c.b16 %v3229, %v3225
    %v4134 = vpack.c.b16 %v3234, %v3230
    %v4135 = vpack.c.b16 %v3235, %v3231
    %v4136 = vpack.c.b16 %v3236, %v3232
    %v4137 = vpack.c.b16 %v3237, %v3233
    %v4138 = vpack.c.b16 %v3242, %v3238
    %v4139 = vpack.c.b16 %v3243, %v3239
    %v4140 = vpack.c.b16 %v3244, %v3240
    %v4141 = vpack.c.b16 %v3245, %v3241
    %v4142 = vpack.c.b16 %v3250, %v3246
    %v4143 = vpack.c.b16 %v3251, %v3247
    %v4144 = vpack.c.b16 %v3252, %v3248
    %v4145 = vpack.c.b16 %v3253, %v3249
    %v4146 = vpack.c.b16 %v3258, %v3254
    %v4147 = vpack.c.b16 %v3259, %v3255
    %v4148 = vpack.c.b16 %v3260, %v3256
    %v4149 = vpack.c.b16 %v3261, %v3257
    %v4150 = vpack.c.b16 %v3266, %v3262
    %v4151 = vpack.c.b16 %v3267, %v3263
    %v4152 = vpack.c.b16 %v3268, %v3264
    %v4153 = vpack.c.b16 %v3269, %v3265
    %v4154 = vpack.c.b16 %v3274, %v3270
    %v4155 = vpack.c.b16 %v3275, %v3271
    %v4156 = vpack.c.b16 %v3276, %v3272
    %v4157 = vpack.c.b16 %v3277, %v3273
    %v4158 = vpack.c.b16 %v3282, %v3278
    %v4159 = vpack.c.b16 %v3283, %v3279
    %v4160 = vpack.c.b16 %v3284, %v3280
    %v4161 = vpack.c.b16 %v3285, %v3281
    %v4162 = vpack.c.b16 %v3290, %v3286
    %v4163 = vpack.c.b16 %v3291, %v3287
    %v4164 = vpack.c.b16 %v3292, %v3288
    %v4165 = vpack.c.b16 %v3293, %v3289
    %v4166 = vpack.c.b16 %v3298, %v3294
    %v4167 = vpack.c.b16 %v3299, %v3295
    %v4168 = vpack.c.b16 %v3300, %v3296
    %v4169 = vpack.c.b16 %v3301, %v3297
    %v4170 = vpack.c.b16 %v3306, %v3302
    %v4171 = vpack.c.b16 %v3307, %v3303
    %v4172 = vpack.c.b16 %v3308, %v3304
    %v4173 = vpack.c.b16 %v3309, %v3305
    %v4174 = vpack.c.b16 %v3314, %v3310
    %v4175 = vpack.c.b16 %v3315, %v3311
    %v4176 = vpack.c.b16 %v3316, %v3312
    %v4177 = vpack.c.b16 %v3317, %v3313
    %v4178 = vpack.c.b16 %v3322, %v3318
    %v4179 = vpack.c.b16 %v3323, %v3319
    %v4180 = vpack.c.b16 %v3324, %v3320
    %v4181 = vpack.c.b16 %v3325, %v3321
    %v4182 = vpack.c.b16 %v3330, %v3326
    %v4183 = vpack.c.b16 %v3331, %v3327
    %v4184 = vpack.c.b16 %v3332, %v3328
    %v4185 = vpack.c.b16 %v3333, %v3329
    %v4186 = vpack.c.b16 %v3338, %v3334
    %v4187 = vpack.c.b16 %v3339, %v3335
    %v4188 = vpack.c.b16 %v3340, %v3336
    %v4189 = vpack.c.b16 %v3341, %v3337
    %v4190 = vpack.c.b16 %v3346, %v3342
    %v4191 = vpack.c.b16 %v3347, %v3343
    %v4192 = vpack.c.b16 %v3348, %v3344
    %v4193 = vpack.c.b16 %v3349, %v3345
    %v4194 = vpack.c.b16 %v3354, %v3350
    %v4195 = vpack.c.b16 %v3355, %v3351
    %v4196 = vpack.c.b16 %v3356, %v3352
    %v4197 = vpack.c.b16 %v3357, %v3353
    %v4198 = vpack.c.b16 %v3362, %v3358
    %v4199 = vpack.c.b16 %v3363, %v3359
    %v4200 = vpack.c.b16 %v3364, %v3360
    %v4201 = vpack.c.b16 %v3365, %v3361
    %v4202 = vpack.c.b16 %v3370, %v3366
    %v4203 = vpack.c.b16 %v3371, %v3367
    %v4204 = vpack.c.b16 %v3372, %v3368
    %v4205 = vpack.c.b16 %v3373, %v3369
    %v4206 = vpack.c.b16 %v3378, %v3374
    %v4207 = vpack.c.b16 %v3379, %v3375
    %v4208 = vpack.c.b16 %v3380, %v3376
    %v4209 = vpack.c.b16 %v3381, %v3377
    %v4210 = vpack.c.b16 %v3386, %v3382
    %v4211 = vpack.c.b16 %v3387, %v3383
    %v4212 = vpack.c.b16 %v3388, %v3384
    %v4213 = vpack.c.b16 %v3389, %v3385
    %v4214 = vpack.c.b16 %v3394, %v3390
    %v4215 = vpack.c.b16 %v3395, %v3391
    %v4216 = vpack.c.b16 %v3396, %v3392
    %v4217 = vpack.c.b16 %v3397, %v3393
    %v4218 = vpack.c.b16 %v3402, %v3398
    %v4219 = vpack.c.b16 %v3403, %v3399
    %v4220 = vpack.c.b16 %v3404, %v3400
    %v4221 = vpack.c.b16 %v3405, %v3401
    %v4222 = vpack.c.b16 %v3410, %v3406
    %v4223 = vpack.c.b16 %v3411, %v3407
    %v4224 = vpack.c.b16 %v3412, %v3408
    %v4225 = vpack.c.b16 %v3413, %v3409
    %v4226 = vpack.c.b16 %v3418, %v3414
    %v4227 = vpack.c.b16 %v3419, %v3415
    %v4228 = vpack.c.b16 %v3420, %v3416
    %v4229 = vpack.c.b16 %v3421, %v3417
    %v4230 = vpack.c.b16 %v3426, %v3422
    %v4231 = vpack.c.b16 %v3427, %v3423
    %v4232 = vpack.c.b16 %v3428, %v3424
    %v4233 = vpack.c.b16 %v3429, %v3425
    %v4234 = vpack.c.b16 %v3434, %v3430
    %v4235 = vpack.c.b16 %v3435, %v3431
    %v4236 = vpack.c.b16 %v3436, %v3432
    %v4237 = vpack.c.b16 %v3437, %v3433
    %5038 = vmatprep.subr.bf16.mxu0 %v3439
    %5039 = vmatpush1.bf16.msra.mxu0 %v3438
    %5040 = vmatprep.subr.bf16.mxu0 %v3443
    %5041 = vmatpush1.bf16.msra.mxu0 %v3442
    %5042 = vmatprep.subr.bf16.mxu0 %v3447
    %5043 = vmatpush1.bf16.msra.mxu0 %v3446
    %5044 = vmatprep.subr.bf16.mxu0 %v3451
    %5045 = vmatpush1.bf16.msra.mxu0 %v3450
    %5046 = vmatprep.subr.bf16.mxu0 %v3455
    %5047 = vmatpush1.bf16.msra.mxu0 %v3454
    %5048 = vmatprep.subr.bf16.mxu0 %v3459
    %5049 = vmatpush1.bf16.msra.mxu0 %v3458
    %5050 = vmatprep.subr.bf16.mxu0 %v3463
    %5051 = vmatpush1.bf16.msra.mxu0 %v3462
    %5052 = vmatprep.subr.bf16.mxu0 %v3467
    %5053 = vmatpush1.bf16.msra.mxu0 %v3466
    %5054 = vmatprep.subr.bf16.mxu0 %v3471
    %5055 = vmatpush1.bf16.msra.mxu0 %v3470
    %5056 = vmatprep.subr.bf16.mxu0 %v3475
    %5057 = vmatpush1.bf16.msra.mxu0 %v3474
    %5058 = vmatprep.subr.bf16.mxu0 %v3479
    %5059 = vmatpush1.bf16.msra.mxu0 %v3478
    %5060 = vmatprep.subr.bf16.mxu0 %v3483
    %5061 = vmatpush1.bf16.msra.mxu0 %v3482
    %5062 = vmatprep.subr.bf16.mxu0 %v3487
    %5063 = vmatpush1.bf16.msra.mxu0 %v3486
    %5064 = vmatprep.subr.bf16.mxu0 %v3491
    %5065 = vmatpush1.bf16.msra.mxu0 %v3490
    %5066 = vmatprep.subr.bf16.mxu0 %v3495
    %5067 = vmatpush1.bf16.msra.mxu0 %v3494
    %5068 = vmatprep.subr.bf16.mxu0 %v3499
    %5069 = vmatpush1.bf16.msra.mxu0 %v3498
    %5070 = vmatprep.mubr.bf16.mxu0 %v889
    %5071 = vmatmul.mubr.bf16.gmra.mrb[0].mxu0 %v875
    %v5072 = vpop.f32.mrb[0].mxu0
    %v5073 = vadd.f32 %v831, %v5072
    %v5074 = vpop.f32.mrb[0].mxu0
    %v5075 = vadd.f32 %v835, %v5074
    %v5076 = vpop.f32.mrb[0].mxu0
    %v5077 = vpop.f32.mrb[0].mxu0
    %5078 = vdwg.mxu0
    %5079 = vmatprep.subr.bf16.mxu0 %v3503
    %5080 = vmatpush1.bf16.msra.mxu0 %v3502
    %5081 = vmatprep.subr.bf16.mxu0 %v3507
    %5082 = vmatpush1.bf16.msra.mxu0 %v3506
    %5083 = vmatprep.subr.bf16.mxu0 %v3511
    %5084 = vmatpush1.bf16.msra.mxu0 %v3510
    %5085 = vmatprep.subr.bf16.mxu0 %v3515
    %5086 = vmatpush1.bf16.msra.mxu0 %v3514
    %5087 = vmatprep.subr.bf16.mxu0 %v3519
    %5088 = vmatpush1.bf16.msra.mxu0 %v3518
    %5089 = vmatprep.subr.bf16.mxu0 %v3523
    %5090 = vmatpush1.bf16.msra.mxu0 %v3522
    %5091 = vmatprep.subr.bf16.mxu0 %v3527
    %5092 = vmatpush1.bf16.msra.mxu0 %v3526
    %5093 = vmatprep.subr.bf16.mxu0 %v3531
    %5094 = vmatpush1.bf16.msra.mxu0 %v3530
    %5095 = vmatprep.subr.bf16.mxu0 %v3535
    %5096 = vmatpush1.bf16.msra.mxu0 %v3534
    %5097 = vmatprep.subr.bf16.mxu0 %v3539
    %5098 = vmatpush1.bf16.msra.mxu0 %v3538
    %5099 = vmatprep.subr.bf16.mxu0 %v3543
    %5100 = vmatpush1.bf16.msra.mxu0 %v3542
    %5101 = vmatprep.subr.bf16.mxu0 %v3547
    %5102 = vmatpush1.bf16.msra.mxu0 %v3546
    %5103 = vmatprep.subr.bf16.mxu0 %v3551
    %5104 = vmatpush1.bf16.msra.mxu0 %v3550
    %5105 = vmatprep.subr.bf16.mxu0 %v3555
    %5106 = vmatpush1.bf16.msra.mxu0 %v3554
    %5107 = vmatprep.subr.bf16.mxu0 %v3559
    %5108 = vmatpush1.bf16.msra.mxu0 %v3558
    %5109 = vmatprep.subr.bf16.mxu0 %v3563
    %5110 = vmatpush1.bf16.msra.mxu0 %v3562
    %5111 = vmatprep.mubr.bf16.mxu0 %v899
    %5112 = vmatmul.mubr.bf16.gmra.mrb[0].mxu0 %v897
    %v5113 = vpop.f32.mrb[0].mxu0
    %v5114 = vadd.f32 %v5073, %v5113
    %v5115 = vpop.f32.mrb[0].mxu0
    %v5116 = vadd.f32 %v5075, %v5115
    %v5117 = vpop.f32.mrb[0].mxu0
    %v5118 = vpop.f32.mrb[0].mxu0
    %5119 = vdwg.mxu0
    %5120 = vmatprep.subr.bf16.mxu0 %v3567
    %5121 = vmatpush1.bf16.msra.mxu0 %v3566
    %5122 = vmatprep.subr.bf16.mxu0 %v3571
    %5123 = vmatpush1.bf16.msra.mxu0 %v3570
    %5124 = vmatprep.subr.bf16.mxu0 %v3575
    %5125 = vmatpush1.bf16.msra.mxu0 %v3574
    %5126 = vmatprep.subr.bf16.mxu0 %v3579
    %5127 = vmatpush1.bf16.msra.mxu0 %v3578
    %5128 = vmatprep.subr.bf16.mxu0 %v3583
    %5129 = vmatpush1.bf16.msra.mxu0 %v3582
    %5130 = vmatprep.subr.bf16.mxu0 %v3587
    %5131 = vmatpush1.bf16.msra.mxu0 %v3586
    %5132 = vmatprep.subr.bf16.mxu0 %v3591
    %5133 = vmatpush1.bf16.msra.mxu0 %v3590
    %5134 = vmatprep.subr.bf16.mxu0 %v3595
    %5135 = vmatpush1.bf16.msra.mxu0 %v3594
    %5136 = vmatprep.subr.bf16.mxu0 %v3599
    %5137 = vmatpush1.bf16.msra.mxu0 %v3598
    %5138 = vmatprep.subr.bf16.mxu0 %v3603
    %5139 = vmatpush1.bf16.msra.mxu0 %v3602
    %5140 = vmatprep.subr.bf16.mxu0 %v3607
    %5141 = vmatpush1.bf16.msra.mxu0 %v3606
    %5142 = vmatprep.subr.bf16.mxu0 %v3611
    %5143 = vmatpush1.bf16.msra.mxu0 %v3610
    %5144 = vmatprep.subr.bf16.mxu0 %v3615
    %5145 = vmatpush1.bf16.msra.mxu0 %v3614
    %5146 = vmatprep.subr.bf16.mxu0 %v3619
    %5147 = vmatpush1.bf16.msra.mxu0 %v3618
    %5148 = vmatprep.subr.bf16.mxu0 %v3623
    %5149 = vmatpush1.bf16.msra.mxu0 %v3622
    %5150 = vmatprep.subr.bf16.mxu0 %v3627
    %5151 = vmatpush1.bf16.msra.mxu0 %v3626
    %5152 = vmatprep.mubr.bf16.mxu0 %v896
    %5153 = vmatmul.mubr.bf16.gmra.mrb[0].mxu0 %v882
    %v5154 = vpop.f32.mrb[0].mxu0
    %v5155 = vadd.f32 %v5114, %v5154
    %v5156 = vpop.f32.mrb[0].mxu0
    %v5157 = vadd.f32 %v5116, %v5156
    %v5158 = vpop.f32.mrb[0].mxu0
    %v5159 = vpop.f32.mrb[0].mxu0
    %5160 = vdwg.mxu0
    %5161 = vmatprep.subr.bf16.mxu0 %v3631
    %5162 = vmatpush1.bf16.msra.mxu0 %v3630
    %5163 = vmatprep.subr.bf16.mxu0 %v3635
    %5164 = vmatpush1.bf16.msra.mxu0 %v3634
    %5165 = vmatprep.subr.bf16.mxu0 %v3639
    %5166 = vmatpush1.bf16.msra.mxu0 %v3638
    %5167 = vmatprep.subr.bf16.mxu0 %v3643
    %5168 = vmatpush1.bf16.msra.mxu0 %v3642
    %5169 = vmatprep.subr.bf16.mxu0 %v3647
    %5170 = vmatpush1.bf16.msra.mxu0 %v3646
    %5171 = vmatprep.subr.bf16.mxu0 %v3651
    %5172 = vmatpush1.bf16.msra.mxu0 %v3650
    %5173 = vmatprep.subr.bf16.mxu0 %v3655
    %5174 = vmatpush1.bf16.msra.mxu0 %v3654
    %5175 = vmatprep.subr.bf16.mxu0 %v3659
    %5176 = vmatpush1.bf16.msra.mxu0 %v3658
    %5177 = vmatprep.subr.bf16.mxu0 %v3663
    %5178 = vmatpush1.bf16.msra.mxu0 %v3662
    %5179 = vmatprep.subr.bf16.mxu0 %v3667
    %5180 = vmatpush1.bf16.msra.mxu0 %v3666
    %5181 = vmatprep.subr.bf16.mxu0 %v3671
    %5182 = vmatpush1.bf16.msra.mxu0 %v3670
    %5183 = vmatprep.subr.bf16.mxu0 %v3675
    %5184 = vmatpush1.bf16.msra.mxu0 %v3674
    %5185 = vmatprep.subr.bf16.mxu0 %v3679
    %5186 = vmatpush1.bf16.msra.mxu0 %v3678
    %5187 = vmatprep.subr.bf16.mxu0 %v3683
    %5188 = vmatpush1.bf16.msra.mxu0 %v3682
    %5189 = vmatprep.subr.bf16.mxu0 %v3687
    %5190 = vmatpush1.bf16.msra.mxu0 %v3686
    %5191 = vmatprep.subr.bf16.mxu0 %v3691
    %5192 = vmatpush1.bf16.msra.mxu0 %v3690
    %5193 = vmatprep.mubr.bf16.mxu0 %v900
    %5194 = vmatmul.mubr.bf16.gmra.mrb[0].mxu0 %v898
    %v5195 = vpop.f32.mrb[0].mxu0
    %v5196 = vadd.f32 %v5155, %v5195
    %v5197 = vpop.f32.mrb[0].mxu0
    %v5198 = vadd.f32 %v5157, %v5197
    %v5199 = vpop.f32.mrb[0].mxu0
    %v5200 = vpop.f32.mrb[0].mxu0
    %5201 = vdwg.mxu0
    %5202 = vmatprep.subr.bf16.mxu0 %v3695
    %5203 = vmatpush1.bf16.msra.mxu0 %v3694
    %5204 = vmatprep.subr.bf16.mxu0 %v3699
    %5205 = vmatpush1.bf16.msra.mxu0 %v3698
    %5206 = vmatprep.subr.bf16.mxu0 %v3703
    %5207 = vmatpush1.bf16.msra.mxu0 %v3702
    %5208 = vmatprep.subr.bf16.mxu0 %v3707
    %5209 = vmatpush1.bf16.msra.mxu0 %v3706
    %5210 = vmatprep.subr.bf16.mxu0 %v3711
    %5211 = vmatpush1.bf16.msra.mxu0 %v3710
    %5212 = vmatprep.subr.bf16.mxu0 %v3715
    %5213 = vmatpush1.bf16.msra.mxu0 %v3714
    %5214 = vmatprep.subr.bf16.mxu0 %v3719
    %5215 = vmatpush1.bf16.msra.mxu0 %v3718
    %5216 = vmatprep.subr.bf16.mxu0 %v3723
    %5217 = vmatpush1.bf16.msra.mxu0 %v3722
    %5218 = vmatprep.subr.bf16.mxu0 %v3727
    %5219 = vmatpush1.bf16.msra.mxu0 %v3726
    %5220 = vmatprep.subr.bf16.mxu0 %v3731
    %5221 = vmatpush1.bf16.msra.mxu0 %v3730
    %5222 = vmatprep.subr.bf16.mxu0 %v3735
    %5223 = vmatpush1.bf16.msra.mxu0 %v3734
    %5224 = vmatprep.subr.bf16.mxu0 %v3739
    %5225 = vmatpush1.bf16.msra.mxu0 %v3738
    %5226 = vmatprep.subr.bf16.mxu0 %v3743
    %5227 = vmatpush1.bf16.msra.mxu0 %v3742
    %5228 = vmatprep.subr.bf16.mxu0 %v3747
    %5229 = vmatpush1.bf16.msra.mxu0 %v3746
    %5230 = vmatprep.subr.bf16.mxu0 %v3751
    %5231 = vmatpush1.bf16.msra.mxu0 %v3750
    %5232 = vmatprep.subr.bf16.mxu0 %v3755
    %5233 = vmatpush1.bf16.msra.mxu0 %v3754
    %5234 = vmatprep.mubr.bf16.mxu0 %v938
    %5235 = vmatmul.mubr.bf16.gmra.mrb[0].mxu0 %v924
    %v5236 = vpop.f32.mrb[0].mxu0
    %v5237 = vadd.f32 %v5196, %v5236
    %v5238 = vpop.f32.mrb[0].mxu0
    %v5239 = vadd.f32 %v5198, %v5238
    %v5240 = vpop.f32.mrb[0].mxu0
    %v5241 = vpop.f32.mrb[0].mxu0
    %5242 = vdwg.mxu0
    %5243 = vmatprep.subr.bf16.mxu0 %v3759
    %5244 = vmatpush1.bf16.msra.mxu0 %v3758
    %5245 = vmatprep.subr.bf16.mxu0 %v3763
    %5246 = vmatpush1.bf16.msra.mxu0 %v3762
    %5247 = vmatprep.subr.bf16.mxu0 %v3767
    %5248 = vmatpush1.bf16.msra.mxu0 %v3766
    %5249 = vmatprep.subr.bf16.mxu0 %v3771
    %5250 = vmatpush1.bf16.msra.mxu0 %v3770
    %5251 = vmatprep.subr.bf16.mxu0 %v3775
    %5252 = vmatpush1.bf16.msra.mxu0 %v3774
    %5253 = vmatprep.subr.bf16.mxu0 %v3779
    %5254 = vmatpush1.bf16.msra.mxu0 %v3778
    %5255 = vmatprep.subr.bf16.mxu0 %v3783
    %5256 = vmatpush1.bf16.msra.mxu0 %v3782
    %5257 = vmatprep.subr.bf16.mxu0 %v3787
    %5258 = vmatpush1.bf16.msra.mxu0 %v3786
    %5259 = vmatprep.subr.bf16.mxu0 %v3791
    %5260 = vmatpush1.bf16.msra.mxu0 %v3790
    %5261 = vmatprep.subr.bf16.mxu0 %v3795
    %5262 = vmatpush1.bf16.msra.mxu0 %v3794
    %5263 = vmatprep.subr.bf16.mxu0 %v3799
    %5264 = vmatpush1.bf16.msra.mxu0 %v3798
    %5265 = vmatprep.subr.bf16.mxu0 %v3803
    %5266 = vmatpush1.bf16.msra.mxu0 %v3802
    %5267 = vmatprep.subr.bf16.mxu0 %v3807
    %5268 = vmatpush1.bf16.msra.mxu0 %v3806
    %5269 = vmatprep.subr.bf16.mxu0 %v3811
    %5270 = vmatpush1.bf16.msra.mxu0 %v3810
    %5271 = vmatprep.subr.bf16.mxu0 %v3815
    %5272 = vmatpush1.bf16.msra.mxu0 %v3814
    %5273 = vmatprep.subr.bf16.mxu0 %v3819
    %5274 = vmatpush1.bf16.msra.mxu0 %v3818
    %5275 = vmatprep.mubr.bf16.mxu0 %v948
    %5276 = vmatmul.mubr.bf16.gmra.mrb[0].mxu0 %v946
    %v5277 = vpop.f32.mrb[0].mxu0
    %v5278 = vadd.f32 %v5237, %v5277
    %v5279 = vpop.f32.mrb[0].mxu0
    %v5280 = vadd.f32 %v5239, %v5279
    %v5281 = vpop.f32.mrb[0].mxu0
    %v5282 = vpop.f32.mrb[0].mxu0
    %5283 = vdwg.mxu0
    %5284 = vmatprep.subr.bf16.mxu0 %v3823
    %5285 = vmatpush1.bf16.msra.mxu0 %v3822
    %5286 = vmatprep.subr.bf16.mxu0 %v3827
    %5287 = vmatpush1.bf16.msra.mxu0 %v3826
    %5288 = vmatprep.subr.bf16.mxu0 %v3831
    %5289 = vmatpush1.bf16.msra.mxu0 %v3830
    %5290 = vmatprep.subr.bf16.mxu0 %v3835
    %5291 = vmatpush1.bf16.msra.mxu0 %v3834
    %5292 = vmatprep.subr.bf16.mxu0 %v3839
    %5293 = vmatpush1.bf16.msra.mxu0 %v3838
    %5294 = vmatprep.subr.bf16.mxu0 %v3843
    %5295 = vmatpush1.bf16.msra.mxu0 %v3842
    %5296 = vmatprep.subr.bf16.mxu0 %v3847
    %5297 = vmatpush1.bf16.msra.mxu0 %v3846
    %5298 = vmatprep.subr.bf16.mxu0 %v3851
    %5299 = vmatpush1.bf16.msra.mxu0 %v3850
    %5300 = vmatprep.subr.bf16.mxu0 %v3855
    %5301 = vmatpush1.bf16.msra.mxu0 %v3854
    %5302 = vmatprep.subr.bf16.mxu0 %v3859
    %5303 = vmatpush1.bf16.msra.mxu0 %v3858
    %5304 = vmatprep.subr.bf16.mxu0 %v3863
    %5305 = vmatpush1.bf16.msra.mxu0 %v3862
    %5306 = vmatprep.subr.bf16.mxu0 %v3867
    %5307 = vmatpush1.bf16.msra.mxu0 %v3866
    %5308 = vmatprep.subr.bf16.mxu0 %v3871
    %5309 = vmatpush1.bf16.msra.mxu0 %v3870
    %5310 = vmatprep.subr.bf16.mxu0 %v3875
    %5311 = vmatpush1.bf16.msra.mxu0 %v3874
    %5312 = vmatprep.subr.bf16.mxu0 %v3879
    %5313 = vmatpush1.bf16.msra.mxu0 %v3878
    %5314 = vmatprep.subr.bf16.mxu0 %v3883
    %5315 = vmatpush1.bf16.msra.mxu0 %v3882
    %5316 = vmatprep.mubr.bf16.mxu0 %v945
    %5317 = vmatmul.mubr.bf16.gmra.mrb[0].mxu0 %v931
    %v5318 = vpop.f32.mrb[0].mxu0
    %v5319 = vadd.f32 %v5278, %v5318
    %v5320 = vpop.f32.mrb[0].mxu0
    %v5321 = vadd.f32 %v5280, %v5320
    %v5322 = vpop.f32.mrb[0].mxu0
    %v5323 = vpop.f32.mrb[0].mxu0
    %5324 = vdwg.mxu0
    %5325 = vmatprep.subr.bf16.mxu0 %v3887
    %5326 = vmatpush1.bf16.msra.mxu0 %v3886
    %5327 = vmatprep.subr.bf16.mxu0 %v3891
    %5328 = vmatpush1.bf16.msra.mxu0 %v3890
    %5329 = vmatprep.subr.bf16.mxu0 %v3895
    %5330 = vmatpush1.bf16.msra.mxu0 %v3894
    %5331 = vmatprep.subr.bf16.mxu0 %v3899
    %5332 = vmatpush1.bf16.msra.mxu0 %v3898
    %5333 = vmatprep.subr.bf16.mxu0 %v3903
    %5334 = vmatpush1.bf16.msra.mxu0 %v3902
    %5335 = vmatprep.subr.bf16.mxu0 %v3907
    %5336 = vmatpush1.bf16.msra.mxu0 %v3906
    %5337 = vmatprep.subr.bf16.mxu0 %v3911
    %5338 = vmatpush1.bf16.msra.mxu0 %v3910
    %5339 = vmatprep.subr.bf16.mxu0 %v3915
    %5340 = vmatpush1.bf16.msra.mxu0 %v3914
    %5341 = vmatprep.subr.bf16.mxu0 %v3919
    %5342 = vmatpush1.bf16.msra.mxu0 %v3918
    %5343 = vmatprep.subr.bf16.mxu0 %v3923
    %5344 = vmatpush1.bf16.msra.mxu0 %v3922
    %5345 = vmatprep.subr.bf16.mxu0 %v3927
    %5346 = vmatpush1.bf16.msra.mxu0 %v3926
    %5347 = vmatprep.subr.bf16.mxu0 %v3931
    %5348 = vmatpush1.bf16.msra.mxu0 %v3930
    %5349 = vmatprep.subr.bf16.mxu0 %v3935
    %5350 = vmatpush1.bf16.msra.mxu0 %v3934
    %5351 = vmatprep.subr.bf16.mxu0 %v3939
    %5352 = vmatpush1.bf16.msra.mxu0 %v3938
    %5353 = vmatprep.subr.bf16.mxu0 %v3943
    %5354 = vmatpush1.bf16.msra.mxu0 %v3942
    %5355 = vmatprep.subr.bf16.mxu0 %v3947
    %5356 = vmatpush1.bf16.msra.mxu0 %v3946
    %5357 = vmatprep.mubr.bf16.mxu0 %v949
    %5358 = vmatmul.mubr.bf16.gmra.mrb[0].mxu0 %v947
    %v5359 = vpop.f32.mrb[0].mxu0
    %v5360 = vadd.f32 %v5319, %v5359
    %v5361 = vpop.f32.mrb[0].mxu0
    %v5362 = vadd.f32 %v5321, %v5361
    %v5363 = vpop.f32.mrb[0].mxu0
    %v5364 = vpop.f32.mrb[0].mxu0
    %5365 = vdwg.mxu0
    %5366 = vmatprep.subr.bf16.mxu0 %v3951
    %5367 = vmatpush1.bf16.msra.mxu0 %v3950
    %5368 = vmatprep.subr.bf16.mxu0 %v3955
    %5369 = vmatpush1.bf16.msra.mxu0 %v3954
    %5370 = vmatprep.subr.bf16.mxu0 %v3959
    %5371 = vmatpush1.bf16.msra.mxu0 %v3958
    %5372 = vmatprep.subr.bf16.mxu0 %v3963
    %5373 = vmatpush1.bf16.msra.mxu0 %v3962
    %5374 = vmatprep.subr.bf16.mxu0 %v3967
    %5375 = vmatpush1.bf16.msra.mxu0 %v3966
    %5376 = vmatprep.subr.bf16.mxu0 %v3971
    %5377 = vmatpush1.bf16.msra.mxu0 %v3970
    %5378 = vmatprep.subr.bf16.mxu0 %v3975
    %5379 = vmatpush1.bf16.msra.mxu0 %v3974
    %5380 = vmatprep.subr.bf16.mxu0 %v3979
    %5381 = vmatpush1.bf16.msra.mxu0 %v3978
    %5382 = vmatprep.subr.bf16.mxu0 %v3983
    %5383 = vmatpush1.bf16.msra.mxu0 %v3982
    %5384 = vmatprep.subr.bf16.mxu0 %v3987
    %5385 = vmatpush1.bf16.msra.mxu0 %v3986
    %5386 = vmatprep.subr.bf16.mxu0 %v3991
    %5387 = vmatpush1.bf16.msra.mxu0 %v3990
    %5388 = vmatprep.subr.bf16.mxu0 %v3995
    %5389 = vmatpush1.bf16.msra.mxu0 %v3994
    %5390 = vmatprep.subr.bf16.mxu0 %v3999
    %5391 = vmatpush1.bf16.msra.mxu0 %v3998
    %5392 = vmatprep.subr.bf16.mxu0 %v4003
    %5393 = vmatpush1.bf16.msra.mxu0 %v4002
    %5394 = vmatprep.subr.bf16.mxu0 %v4007
    %5395 = vmatpush1.bf16.msra.mxu0 %v4006
    %5396 = vmatprep.subr.bf16.mxu0 %v4011
    %5397 = vmatpush1.bf16.msra.mxu0 %v4010
    %5398 = vmatprep.mubr.bf16.mxu0 %v987
    %5399 = vmatmul.mubr.bf16.gmra.mrb[0].mxu0 %v973
    %v5400 = vpop.f32.mrb[0].mxu0
    %v5401 = vadd.f32 %v5360, %v5400
    %v5402 = vpop.f32.mrb[0].mxu0
    %v5403 = vadd.f32 %v5362, %v5402
    %v5404 = vpop.f32.mrb[0].mxu0
    %v5405 = vpop.f32.mrb[0].mxu0
    %5406 = vdwg.mxu0
    %5407 = vmatprep.subr.bf16.mxu0 %v4015
    %5408 = vmatpush1.bf16.msra.mxu0 %v4014
    %5409 = vmatprep.subr.bf16.mxu0 %v4019
    %5410 = vmatpush1.bf16.msra.mxu0 %v4018
    %5411 = vmatprep.subr.bf16.mxu0 %v4023
    %5412 = vmatpush1.bf16.msra.mxu0 %v4022
    %5413 = vmatprep.subr.bf16.mxu0 %v4027
    %5414 = vmatpush1.bf16.msra.mxu0 %v4026
    %5415 = vmatprep.subr.bf16.mxu0 %v4031
    %5416 = vmatpush1.bf16.msra.mxu0 %v4030
    %5417 = vmatprep.subr.bf16.mxu0 %v4035
    %5418 = vmatpush1.bf16.msra.mxu0 %v4034
    %5419 = vmatprep.subr.bf16.mxu0 %v4039
    %5420 = vmatpush1.bf16.msra.mxu0 %v4038
    %5421 = vmatprep.subr.bf16.mxu0 %v4043
    %5422 = vmatpush1.bf16.msra.mxu0 %v4042
    %5423 = vmatprep.subr.bf16.mxu0 %v4047
    %5424 = vmatpush1.bf16.msra.mxu0 %v4046
    %5425 = vmatprep.subr.bf16.mxu0 %v4051
    %5426 = vmatpush1.bf16.msra.mxu0 %v4050
    %5427 = vmatprep.subr.bf16.mxu0 %v4055
    %5428 = vmatpush1.bf16.msra.mxu0 %v4054
    %5429 = vmatprep.subr.bf16.mxu0 %v4059
    %5430 = vmatpush1.bf16.msra.mxu0 %v4058
    %5431 = vmatprep.subr.bf16.mxu0 %v4063
    %5432 = vmatpush1.bf16.msra.mxu0 %v4062
    %5433 = vmatprep.subr.bf16.mxu0 %v4067
    %5434 = vmatpush1.bf16.msra.mxu0 %v4066
    %5435 = vmatprep.subr.bf16.mxu0 %v4071
    %5436 = vmatpush1.bf16.msra.mxu0 %v4070
    %5437 = vmatprep.subr.bf16.mxu0 %v4075
    %5438 = vmatpush1.bf16.msra.mxu0 %v4074
    %5439 = vmatprep.mubr.bf16.mxu0 %v997
    %5440 = vmatmul.mubr.bf16.gmra.mrb[0].mxu0 %v995
    %v5441 = vpop.f32.mrb[0].mxu0
    %v5442 = vadd.f32 %v5401, %v5441
    %v5443 = vpop.f32.mrb[0].mxu0
    %v5444 = vadd.f32 %v5403, %v5443
    %v5445 = vpop.f32.mrb[0].mxu0
    %v5446 = vpop.f32.mrb[0].mxu0
    %5447 = vdwg.mxu0
    %5448 = vmatprep.subr.bf16.mxu0 %v4079
    %5449 = vmatpush1.bf16.msra.mxu0 %v4078
    %5450 = vmatprep.subr.bf16.mxu0 %v4083
    %5451 = vmatpush1.bf16.msra.mxu0 %v4082
    %5452 = vmatprep.subr.bf16.mxu0 %v4087
    %5453 = vmatpush1.bf16.msra.mxu0 %v4086
    %5454 = vmatprep.subr.bf16.mxu0 %v4091
    %5455 = vmatpush1.bf16.msra.mxu0 %v4090
    %5456 = vmatprep.subr.bf16.mxu0 %v4095
    %5457 = vmatpush1.bf16.msra.mxu0 %v4094
    %5458 = vmatprep.subr.bf16.mxu0 %v4099
    %5459 = vmatpush1.bf16.msra.mxu0 %v4098
    %5460 = vmatprep.subr.bf16.mxu0 %v4103
    %5461 = vmatpush1.bf16.msra.mxu0 %v4102
    %5462 = vmatprep.subr.bf16.mxu0 %v4107
    %5463 = vmatpush1.bf16.msra.mxu0 %v4106
    %5464 = vmatprep.subr.bf16.mxu0 %v4111
    %5465 = vmatpush1.bf16.msra.mxu0 %v4110
    %5466 = vmatprep.subr.bf16.mxu0 %v4115
    %5467 = vmatpush1.bf16.msra.mxu0 %v4114
    %5468 = vmatprep.subr.bf16.mxu0 %v4119
    %5469 = vmatpush1.bf16.msra.mxu0 %v4118
    %5470 = vmatprep.subr.bf16.mxu0 %v4123
    %5471 = vmatpush1.bf16.msra.mxu0 %v4122
    %5472 = vmatprep.subr.bf16.mxu0 %v4127
    %5473 = vmatpush1.bf16.msra.mxu0 %v4126
    %5474 = vmatprep.subr.bf16.mxu0 %v4131
    %5475 = vmatpush1.bf16.msra.mxu0 %v4130
    %5476 = vmatprep.subr.bf16.mxu0 %v4135
    %5477 = vmatpush1.bf16.msra.mxu0 %v4134
    %5478 = vmatprep.subr.bf16.mxu0 %v4139
    %5479 = vmatpush1.bf16.msra.mxu0 %v4138
    %5480 = vmatprep.mubr.bf16.mxu0 %v994
    %5481 = vmatmul.mubr.bf16.gmra.mrb[0].mxu0 %v980
    %v5482 = vpop.f32.mrb[0].mxu0
    %v5483 = vadd.f32 %v5442, %v5482
    %v5484 = vpop.f32.mrb[0].mxu0
    %v5485 = vadd.f32 %v5444, %v5484
    %v5486 = vpop.f32.mrb[0].mxu0
    %v5487 = vpop.f32.mrb[0].mxu0
    %5488 = vdwg.mxu0
    %5489 = vmatprep.subr.bf16.mxu0 %v4143
    %5490 = vmatpush1.bf16.msra.mxu0 %v4142
    %5491 = vmatprep.subr.bf16.mxu0 %v4147
    %5492 = vmatpush1.bf16.msra.mxu0 %v4146
    %5493 = vmatprep.subr.bf16.mxu0 %v4151
    %5494 = vmatpush1.bf16.msra.mxu0 %v4150
    %5495 = vmatprep.subr.bf16.mxu0 %v4155
    %5496 = vmatpush1.bf16.msra.mxu0 %v4154
    %5497 = vmatprep.subr.bf16.mxu0 %v4159
    %5498 = vmatpush1.bf16.msra.mxu0 %v4158
    %5499 = vmatprep.subr.bf16.mxu0 %v4163
    %5500 = vmatpush1.bf16.msra.mxu0 %v4162
    %5501 = vmatprep.subr.bf16.mxu0 %v4167
    %5502 = vmatpush1.bf16.msra.mxu0 %v4166
    %5503 = vmatprep.subr.bf16.mxu0 %v4171
    %5504 = vmatpush1.bf16.msra.mxu0 %v4170
    %5505 = vmatprep.subr.bf16.mxu0 %v4175
    %5506 = vmatpush1.bf16.msra.mxu0 %v4174
    %5507 = vmatprep.subr.bf16.mxu0 %v4179
    %5508 = vmatpush1.bf16.msra.mxu0 %v4178
    %5509 = vmatprep.subr.bf16.mxu0 %v4183
    %5510 = vmatpush1.bf16.msra.mxu0 %v4182
    %5511 = vmatprep.subr.bf16.mxu0 %v4187
    %5512 = vmatpush1.bf16.msra.mxu0 %v4186
    %5513 = vmatprep.subr.bf16.mxu0 %v4191
    %5514 = vmatpush1.bf16.msra.mxu0 %v4190
    %5515 = vmatprep.subr.bf16.mxu0 %v4195
    %5516 = vmatpush1.bf16.msra.mxu0 %v4194
    %5517 = vmatprep.subr.bf16.mxu0 %v4199
    %5518 = vmatpush1.bf16.msra.mxu0 %v4198
    %5519 = vmatprep.subr.bf16.mxu0 %v4203
    %5520 = vmatpush1.bf16.msra.mxu0 %v4202
    %5521 = vmatprep.mubr.bf16.mxu0 %v998
    %5522 = vmatmul.mubr.bf16.gmra.mrb[0].mxu0 %v996
    %v5523 = vpop.f32.mrb[0].mxu0
    %v5524 = vadd.f32 %v5483, %v5523
    %v5525 = vpop.f32.mrb[0].mxu0
    %v5526 = vadd.f32 %v5485, %v5525
    %v5527 = vpop.f32.mrb[0].mxu0
    %v5528 = vpop.f32.mrb[0].mxu0
    %5529 = vdwg.mxu0
    %5530 = vmatprep.subr.bf16.mxu0 %v4207
    %5531 = vmatpush1.bf16.msra.mxu0 %v4206
    %5532 = vmatprep.subr.bf16.mxu0 %v4211
    %5533 = vmatpush1.bf16.msra.mxu0 %v4210
    %5534 = vmatprep.subr.bf16.mxu0 %v4215
    %5535 = vmatpush1.bf16.msra.mxu0 %v4214
    %5536 = vmatprep.subr.bf16.mxu0 %v4219
    %5537 = vmatpush1.bf16.msra.mxu0 %v4218
    %5538 = vmatprep.subr.bf16.mxu0 %v4223
    %5539 = vmatpush1.bf16.msra.mxu0 %v4222
    %5540 = vmatprep.subr.bf16.mxu0 %v4227
    %5541 = vmatpush1.bf16.msra.mxu0 %v4226
    %5542 = vmatprep.subr.bf16.mxu0 %v4231
    %5543 = vmatpush1.bf16.msra.mxu0 %v4230
    %5544 = vmatprep.subr.bf16.mxu0 %v4235
    %5545 = vmatpush1.bf16.msra.mxu0 %v4234
    %5546 = vmatprep.subr.bf16.mxu0 0
    %5547 = vmatpush1.bf16.msra.mxu0 0
    %5548 = vmatprep.subr.bf16.mxu0 0
    %5549 = vmatpush1.bf16.msra.mxu0 0
    %5550 = vmatprep.subr.bf16.mxu0 0
    %5551 = vmatpush1.bf16.msra.mxu0 0
    %5552 = vmatprep.subr.bf16.mxu0 0
    %5553 = vmatpush1.bf16.msra.mxu0 0
    %5554 = vmatprep.subr.bf16.mxu0 0
    %5555 = vmatpush1.bf16.msra.mxu0 0
    %5556 = vmatprep.subr.bf16.mxu0 0
    %5557 = vmatpush1.bf16.msra.mxu0 0
    %5558 = vmatprep.subr.bf16.mxu0 0
    %5559 = vmatpush1.bf16.msra.mxu0 0
    %5560 = vmatprep.subr.bf16.mxu0 0
    %5561 = vmatpush1.bf16.msra.mxu0 0
    %5562 = vmatprep.mubr.bf16.mxu0 0
    %5563 = vmatmul.mubr.bf16.gmra.mrb[0].mxu0 %v1012
    %v5564 = vpop.f32.mrb[0].mxu0
    %v5565 = vadd.f32 %v5524, %v5564
    %v5566 = vpop.f32.mrb[0].mxu0
    %v5567 = vadd.f32 %v5526, %v5566
    %v5568 = vpop.f32.mrb[0].mxu0
    %v5569 = vpop.f32.mrb[0].mxu0
    %5570 = vdwg.mxu0
    %5571 = vmatprep.subr.bf16.mxu0 %v3441
    %5572 = vmatpush1.bf16.msra.mxu0 %v3440
    %5573 = vmatprep.subr.bf16.mxu0 %v3445
    %5574 = vmatpush1.bf16.msra.mxu0 %v3444
    %5575 = vmatprep.subr.bf16.mxu0 %v3449
    %5576 = vmatpush1.bf16.msra.mxu0 %v3448
    %5577 = vmatprep.subr.bf16.mxu0 %v3453
    %5578 = vmatpush1.bf16.msra.mxu0 %v3452
    %5579 = vmatprep.subr.bf16.mxu0 %v3457
    %5580 = vmatpush1.bf16.msra.mxu0 %v3456
    %5581 = vmatprep.subr.bf16.mxu0 %v3461
    %5582 = vmatpush1.bf16.msra.mxu0 %v3460
    %5583 = vmatprep.subr.bf16.mxu0 %v3465
    %5584 = vmatpush1.bf16.msra.mxu0 %v3464
    %5585 = vmatprep.subr.bf16.mxu0 %v3469
    %5586 = vmatpush1.bf16.msra.mxu0 %v3468
    %5587 = vmatprep.subr.bf16.mxu0 %v3473
    %5588 = vmatpush1.bf16.msra.mxu0 %v3472
    %5589 = vmatprep.subr.bf16.mxu0 %v3477
    %5590 = vmatpush1.bf16.msra.mxu0 %v3476
    %5591 = vmatprep.subr.bf16.mxu0 %v3481
    %5592 = vmatpush1.bf16.msra.mxu0 %v3480
    %5593 = vmatprep.subr.bf16.mxu0 %v3485
    %5594 = vmatpush1.bf16.msra.mxu0 %v3484
    %5595 = vmatprep.subr.bf16.mxu0 %v3489
    %5596 = vmatpush1.bf16.msra.mxu0 %v3488
    %5597 = vmatprep.subr.bf16.mxu0 %v3493
    %5598 = vmatpush1.bf16.msra.mxu0 %v3492
    %5599 = vmatprep.subr.bf16.mxu0 %v3497
    %5600 = vmatpush1.bf16.msra.mxu0 %v3496
    %5601 = vmatprep.subr.bf16.mxu0 %v3501
    %5602 = vmatpush1.bf16.msra.mxu0 %v3500
    %5603 = vmatprep.mubr.bf16.mxu0 %v889
    %5604 = vmatmul.mubr.bf16.gmra.mrb[0].mxu0 %v875
    %v5605 = vpop.f32.mrb[0].mxu0
    %v5606 = vadd.f32 %v839, %v5605
    %v5607 = vpop.f32.mrb[0].mxu0
    %v5608 = vadd.f32 %v843, %v5607
    %v5609 = vpop.f32.mrb[0].mxu0
    %v5610 = vpop.f32.mrb[0].mxu0
    %5611 = vdwg.mxu0
    %5612 = vmatprep.subr.bf16.mxu0 %v3505
    %5613 = vmatpush1.bf16.msra.mxu0 %v3504
    %5614 = vmatprep.subr.bf16.mxu0 %v3509
    %5615 = vmatpush1.bf16.msra.mxu0 %v3508
    %5616 = vmatprep.subr.bf16.mxu0 %v3513
    %5617 = vmatpush1.bf16.msra.mxu0 %v3512
    %5618 = vmatprep.subr.bf16.mxu0 %v3517
    %5619 = vmatpush1.bf16.msra.mxu0 %v3516
    %5620 = vmatprep.subr.bf16.mxu0 %v3521
    %5621 = vmatpush1.bf16.msra.mxu0 %v3520
    %5622 = vmatprep.subr.bf16.mxu0 %v3525
    %5623 = vmatpush1.bf16.msra.mxu0 %v3524
    %5624 = vmatprep.subr.bf16.mxu0 %v3529
    %5625 = vmatpush1.bf16.msra.mxu0 %v3528
    %5626 = vmatprep.subr.bf16.mxu0 %v3533
    %5627 = vmatpush1.bf16.msra.mxu0 %v3532
    %5628 = vmatprep.subr.bf16.mxu0 %v3537
    %5629 = vmatpush1.bf16.msra.mxu0 %v3536
    %5630 = vmatprep.subr.bf16.mxu0 %v3541
    %5631 = vmatpush1.bf16.msra.mxu0 %v3540
    %5632 = vmatprep.subr.bf16.mxu0 %v3545
    %5633 = vmatpush1.bf16.msra.mxu0 %v3544
    %5634 = vmatprep.subr.bf16.mxu0 %v3549
    %5635 = vmatpush1.bf16.msra.mxu0 %v3548
    %5636 = vmatprep.subr.bf16.mxu0 %v3553
    %5637 = vmatpush1.bf16.msra.mxu0 %v3552
    %5638 = vmatprep.subr.bf16.mxu0 %v3557
    %5639 = vmatpush1.bf16.msra.mxu0 %v3556
    %5640 = vmatprep.subr.bf16.mxu0 %v3561
    %5641 = vmatpush1.bf16.msra.mxu0 %v3560
    %5642 = vmatprep.subr.bf16.mxu0 %v3565
    %5643 = vmatpush1.bf16.msra.mxu0 %v3564
    %5644 = vmatprep.mubr.bf16.mxu0 %v899
    %5645 = vmatmul.mubr.bf16.gmra.mrb[0].mxu0 %v897
    %v5646 = vpop.f32.mrb[0].mxu0
    %v5647 = vadd.f32 %v5606, %v5646
    %v5648 = vpop.f32.mrb[0].mxu0
    %v5649 = vadd.f32 %v5608, %v5648
    %v5650 = vpop.f32.mrb[0].mxu0
    %v5651 = vpop.f32.mrb[0].mxu0
    %5652 = vdwg.mxu0
    %5653 = vmatprep.subr.bf16.mxu0 %v3569
    %5654 = vmatpush1.bf16.msra.mxu0 %v3568
    %5655 = vmatprep.subr.bf16.mxu0 %v3573
    %5656 = vmatpush1.bf16.msra.mxu0 %v3572
    %5657 = vmatprep.subr.bf16.mxu0 %v3577
    %5658 = vmatpush1.bf16.msra.mxu0 %v3576
    %5659 = vmatprep.subr.bf16.mxu0 %v3581
    %5660 = vmatpush1.bf16.msra.mxu0 %v3580
    %5661 = vmatprep.subr.bf16.mxu0 %v3585
    %5662 = vmatpush1.bf16.msra.mxu0 %v3584
    %5663 = vmatprep.subr.bf16.mxu0 %v3589
    %5664 = vmatpush1.bf16.msra.mxu0 %v3588
    %5665 = vmatprep.subr.bf16.mxu0 %v3593
    %5666 = vmatpush1.bf16.msra.mxu0 %v3592
    %5667 = vmatprep.subr.bf16.mxu0 %v3597
    %5668 = vmatpush1.bf16.msra.mxu0 %v3596
    %5669 = vmatprep.subr.bf16.mxu0 %v3601
    %5670 = vmatpush1.bf16.msra.mxu0 %v3600
    %5671 = vmatprep.subr.bf16.mxu0 %v3605
    %5672 = vmatpush1.bf16.msra.mxu0 %v3604
    %5673 = vmatprep.subr.bf16.mxu0 %v3609
    %5674 = vmatpush1.bf16.msra.mxu0 %v3608
    %5675 = vmatprep.subr.bf16.mxu0 %v3613
    %5676 = vmatpush1.bf16.msra.mxu0 %v3612
    %5677 = vmatprep.subr.bf16.mxu0 %v3617
    %5678 = vmatpush1.bf16.msra.mxu0 %v3616
    %5679 = vmatprep.subr.bf16.mxu0 %v3621
    %5680 = vmatpush1.bf16.msra.mxu0 %v3620
    %5681 = vmatprep.subr.bf16.mxu0 %v3625
    %5682 = vmatpush1.bf16.msra.mxu0 %v3624
    %5683 = vmatprep.subr.bf16.mxu0 %v3629
    %5684 = vmatpush1.bf16.msra.mxu0 %v3628
    %5685 = vmatprep.mubr.bf16.mxu0 %v896
    %5686 = vmatmul.mubr.bf16.gmra.mrb[0].mxu0 %v882
    %v5687 = vpop.f32.mrb[0].mxu0
    %v5688 = vadd.f32 %v5647, %v5687
    %v5689 = vpop.f32.mrb[0].mxu0
    %v5690 = vadd.f32 %v5649, %v5689
    %v5691 = vpop.f32.mrb[0].mxu0
    %v5692 = vpop.f32.mrb[0].mxu0
    %5693 = vdwg.mxu0
    %5694 = vmatprep.subr.bf16.mxu0 %v3633
    %5695 = vmatpush1.bf16.msra.mxu0 %v3632
    %5696 = vmatprep.subr.bf16.mxu0 %v3637
    %5697 = vmatpush1.bf16.msra.mxu0 %v3636
    %5698 = vmatprep.subr.bf16.mxu0 %v3641
    %5699 = vmatpush1.bf16.msra.mxu0 %v3640
    %5700 = vmatprep.subr.bf16.mxu0 %v3645
    %5701 = vmatpush1.bf16.msra.mxu0 %v3644
    %5702 = vmatprep.subr.bf16.mxu0 %v3649
    %5703 = vmatpush1.bf16.msra.mxu0 %v3648
    %5704 = vmatprep.subr.bf16.mxu0 %v3653
    %5705 = vmatpush1.bf16.msra.mxu0 %v3652
    %5706 = vmatprep.subr.bf16.mxu0 %v3657
    %5707 = vmatpush1.bf16.msra.mxu0 %v3656
    %5708 = vmatprep.subr.bf16.mxu0 %v3661
    %5709 = vmatpush1.bf16.msra.mxu0 %v3660
    %5710 = vmatprep.subr.bf16.mxu0 %v3665
    %5711 = vmatpush1.bf16.msra.mxu0 %v3664
    %5712 = vmatprep.subr.bf16.mxu0 %v3669
    %5713 = vmatpush1.bf16.msra.mxu0 %v3668
    %5714 = vmatprep.subr.bf16.mxu0 %v3673
    %5715 = vmatpush1.bf16.msra.mxu0 %v3672
    %5716 = vmatprep.subr.bf16.mxu0 %v3677
    %5717 = vmatpush1.bf16.msra.mxu0 %v3676
    %5718 = vmatprep.subr.bf16.mxu0 %v3681
    %5719 = vmatpush1.bf16.msra.mxu0 %v3680
    %5720 = vmatprep.subr.bf16.mxu0 %v3685
    %5721 = vmatpush1.bf16.msra.mxu0 %v3684
    %5722 = vmatprep.subr.bf16.mxu0 %v3689
    %5723 = vmatpush1.bf16.msra.mxu0 %v3688
    %5724 = vmatprep.subr.bf16.mxu0 %v3693
    %5725 = vmatpush1.bf16.msra.mxu0 %v3692
    %5726 = vmatprep.mubr.bf16.mxu0 %v900
    %5727 = vmatmul.mubr.bf16.gmra.mrb[0].mxu0 %v898
    %v5728 = vpop.f32.mrb[0].mxu0
    %v5729 = vadd.f32 %v5688, %v5728
    %v5730 = vpop.f32.mrb[0].mxu0
    %v5731 = vadd.f32 %v5690, %v5730
    %v5732 = vpop.f32.mrb[0].mxu0
    %v5733 = vpop.f32.mrb[0].mxu0
    %5734 = vdwg.mxu0
    %5735 = vmatprep.subr.bf16.mxu0 %v3697
    %5736 = vmatpush1.bf16.msra.mxu0 %v3696
    %5737 = vmatprep.subr.bf16.mxu0 %v3701
    %5738 = vmatpush1.bf16.msra.mxu0 %v3700
    %5739 = vmatprep.subr.bf16.mxu0 %v3705
    %5740 = vmatpush1.bf16.msra.mxu0 %v3704
    %5741 = vmatprep.subr.bf16.mxu0 %v3709
    %5742 = vmatpush1.bf16.msra.mxu0 %v3708
    %5743 = vmatprep.subr.bf16.mxu0 %v3713
    %5744 = vmatpush1.bf16.msra.mxu0 %v3712
    %5745 = vmatprep.subr.bf16.mxu0 %v3717
    %5746 = vmatpush1.bf16.msra.mxu0 %v3716
    %5747 = vmatprep.subr.bf16.mxu0 %v3721
    %5748 = vmatpush1.bf16.msra.mxu0 %v3720
    %5749 = vmatprep.subr.bf16.mxu0 %v3725
    %5750 = vmatpush1.bf16.msra.mxu0 %v3724
    %5751 = vmatprep.subr.bf16.mxu0 %v3729
    %5752 = vmatpush1.bf16.msra.mxu0 %v3728
    %5753 = vmatprep.subr.bf16.mxu0 %v3733
    %5754 = vmatpush1.bf16.msra.mxu0 %v3732
    %5755 = vmatprep.subr.bf16.mxu0 %v3737
    %5756 = vmatpush1.bf16.msra.mxu0 %v3736
    %5757 = vmatprep.subr.bf16.mxu0 %v3741
    %5758 = vmatpush1.bf16.msra.mxu0 %v3740
    %5759 = vmatprep.subr.bf16.mxu0 %v3745
    %5760 = vmatpush1.bf16.msra.mxu0 %v3744
    %5761 = vmatprep.subr.bf16.mxu0 %v3749
    %5762 = vmatpush1.bf16.msra.mxu0 %v3748
    %5763 = vmatprep.subr.bf16.mxu0 %v3753
    %5764 = vmatpush1.bf16.msra.mxu0 %v3752
    %5765 = vmatprep.subr.bf16.mxu0 %v3757
    %5766 = vmatpush1.bf16.msra.mxu0 %v3756
    %5767 = vmatprep.mubr.bf16.mxu0 %v938
    %5768 = vmatmul.mubr.bf16.gmra.mrb[0].mxu0 %v924
    %v5769 = vpop.f32.mrb[0].mxu0
    %v5770 = vadd.f32 %v5729, %v5769
    %v5771 = vpop.f32.mrb[0].mxu0
    %v5772 = vadd.f32 %v5731, %v5771
    %v5773 = vpop.f32.mrb[0].mxu0
    %v5774 = vpop.f32.mrb[0].mxu0
    %5775 = vdwg.mxu0
    %5776 = vmatprep.subr.bf16.mxu0 %v3761
    %5777 = vmatpush1.bf16.msra.mxu0 %v3760
    %5778 = vmatprep.subr.bf16.mxu0 %v3765
    %5779 = vmatpush1.bf16.msra.mxu0 %v3764
    %5780 = vmatprep.subr.bf16.mxu0 %v3769
    %5781 = vmatpush1.bf16.msra.mxu0 %v3768
    %5782 = vmatprep.subr.bf16.mxu0 %v3773
    %5783 = vmatpush1.bf16.msra.mxu0 %v3772
    %5784 = vmatprep.subr.bf16.mxu0 %v3777
    %5785 = vmatpush1.bf16.msra.mxu0 %v3776
    %5786 = vmatprep.subr.bf16.mxu0 %v3781
    %5787 = vmatpush1.bf16.msra.mxu0 %v3780
    %5788 = vmatprep.subr.bf16.mxu0 %v3785
    %5789 = vmatpush1.bf16.msra.mxu0 %v3784
    %5790 = vmatprep.subr.bf16.mxu0 %v3789
    %5791 = vmatpush1.bf16.msra.mxu0 %v3788
    %5792 = vmatprep.subr.bf16.mxu0 %v3793
    %5793 = vmatpush1.bf16.msra.mxu0 %v3792
    %5794 = vmatprep.subr.bf16.mxu0 %v3797
    %5795 = vmatpush1.bf16.msra.mxu0 %v3796
    %5796 = vmatprep.subr.bf16.mxu0 %v3801
    %5797 = vmatpush1.bf16.msra.mxu0 %v3800
    %5798 = vmatprep.subr.bf16.mxu0 %v3805
    %5799 = vmatpush1.bf16.msra.mxu0 %v3804
    %5800 = vmatprep.subr.bf16.mxu0 %v3809
    %5801 = vmatpush1.bf16.msra.mxu0 %v3808
    %5802 = vmatprep.subr.bf16.mxu0 %v3813
    %5803 = vmatpush1.bf16.msra.mxu0 %v3812
    %5804 = vmatprep.subr.bf16.mxu0 %v3817
    %5805 = vmatpush1.bf16.msra.mxu0 %v3816
    %5806 = vmatprep.subr.bf16.mxu0 %v3821
    %5807 = vmatpush1.bf16.msra.mxu0 %v3820
    %5808 = vmatprep.mubr.bf16.mxu0 %v948
    %5809 = vmatmul.mubr.bf16.gmra.mrb[0].mxu0 %v946
    %v5810 = vpop.f32.mrb[0].mxu0
    %v5811 = vadd.f32 %v5770, %v5810
    %v5812 = vpop.f32.mrb[0].mxu0
    %v5813 = vadd.f32 %v5772, %v5812
    %v5814 = vpop.f32.mrb[0].mxu0
    %v5815 = vpop.f32.mrb[0].mxu0
    %5816 = vdwg.mxu0
    %5817 = vmatprep.subr.bf16.mxu0 %v3825
    %5818 = vmatpush1.bf16.msra.mxu0 %v3824
    %5819 = vmatprep.subr.bf16.mxu0 %v3829
    %5820 = vmatpush1.bf16.msra.mxu0 %v3828
    %5821 = vmatprep.subr.bf16.mxu0 %v3833
    %5822 = vmatpush1.bf16.msra.mxu0 %v3832
    %5823 = vmatprep.subr.bf16.mxu0 %v3837
    %5824 = vmatpush1.bf16.msra.mxu0 %v3836
    %5825 = vmatprep.subr.bf16.mxu0 %v3841
    %5826 = vmatpush1.bf16.msra.mxu0 %v3840
    %5827 = vmatprep.subr.bf16.mxu0 %v3845
    %5828 = vmatpush1.bf16.msra.mxu0 %v3844
    %5829 = vmatprep.subr.bf16.mxu0 %v3849
    %5830 = vmatpush1.bf16.msra.mxu0 %v3848
    %5831 = vmatprep.subr.bf16.mxu0 %v3853
    %5832 = vmatpush1.bf16.msra.mxu0 %v3852
    %5833 = vmatprep.subr.bf16.mxu0 %v3857
    %5834 = vmatpush1.bf16.msra.mxu0 %v3856
    %5835 = vmatprep.subr.bf16.mxu0 %v3861
    %5836 = vmatpush1.bf16.msra.mxu0 %v3860
    %5837 = vmatprep.subr.bf16.mxu0 %v3865
    %5838 = vmatpush1.bf16.msra.mxu0 %v3864
    %5839 = vmatprep.subr.bf16.mxu0 %v3869
    %5840 = vmatpush1.bf16.msra.mxu0 %v3868
    %5841 = vmatprep.subr.bf16.mxu0 %v3873
    %5842 = vmatpush1.bf16.msra.mxu0 %v3872
    %5843 = vmatprep.subr.bf16.mxu0 %v3877
    %5844 = vmatpush1.bf16.msra.mxu0 %v3876
    %5845 = vmatprep.subr.bf16.mxu0 %v3881
    %5846 = vmatpush1.bf16.msra.mxu0 %v3880
    %5847 = vmatprep.subr.bf16.mxu0 %v3885
    %5848 = vmatpush1.bf16.msra.mxu0 %v3884
    %5849 = vmatprep.mubr.bf16.mxu0 %v945
    %5850 = vmatmul.mubr.bf16.gmra.mrb[0].mxu0 %v931
    %v5851 = vpop.f32.mrb[0].mxu0
    %v5852 = vadd.f32 %v5811, %v5851
    %v5853 = vpop.f32.mrb[0].mxu0
    %v5854 = vadd.f32 %v5813, %v5853
    %v5855 = vpop.f32.mrb[0].mxu0
    %v5856 = vpop.f32.mrb[0].mxu0
    %5857 = vdwg.mxu0
    %5858 = vmatprep.subr.bf16.mxu0 %v3889
    %5859 = vmatpush1.bf16.msra.mxu0 %v3888
    %5860 = vmatprep.subr.bf16.mxu0 %v3893
    %5861 = vmatpush1.bf16.msra.mxu0 %v3892
    %5862 = vmatprep.subr.bf16.mxu0 %v3897
    %5863 = vmatpush1.bf16.msra.mxu0 %v3896
    %5864 = vmatprep.subr.bf16.mxu0 %v3901
    %5865 = vmatpush1.bf16.msra.mxu0 %v3900
    %5866 = vmatprep.subr.bf16.mxu0 %v3905
    %5867 = vmatpush1.bf16.msra.mxu0 %v3904
    %5868 = vmatprep.subr.bf16.mxu0 %v3909
    %5869 = vmatpush1.bf16.msra.mxu0 %v3908
    %5870 = vmatprep.subr.bf16.mxu0 %v3913
    %5871 = vmatpush1.bf16.msra.mxu0 %v3912
    %5872 = vmatprep.subr.bf16.mxu0 %v3917
    %5873 = vmatpush1.bf16.msra.mxu0 %v3916
    %5874 = vmatprep.subr.bf16.mxu0 %v3921
    %5875 = vmatpush1.bf16.msra.mxu0 %v3920
    %5876 = vmatprep.subr.bf16.mxu0 %v3925
    %5877 = vmatpush1.bf16.msra.mxu0 %v3924
    %5878 = vmatprep.subr.bf16.mxu0 %v3929
    %5879 = vmatpush1.bf16.msra.mxu0 %v3928
    %5880 = vmatprep.subr.bf16.mxu0 %v3933
    %5881 = vmatpush1.bf16.msra.mxu0 %v3932
    %5882 = vmatprep.subr.bf16.mxu0 %v3937
    %5883 = vmatpush1.bf16.msra.mxu0 %v3936
    %5884 = vmatprep.subr.bf16.mxu0 %v3941
    %5885 = vmatpush1.bf16.msra.mxu0 %v3940
    %5886 = vmatprep.subr.bf16.mxu0 %v3945
    %5887 = vmatpush1.bf16.msra.mxu0 %v3944
    %5888 = vmatprep.subr.bf16.mxu0 %v3949
    %5889 = vmatpush1.bf16.msra.mxu0 %v3948
    %5890 = vmatprep.mubr.bf16.mxu0 %v949
    %5891 = vmatmul.mubr.bf16.gmra.mrb[0].mxu0 %v947
    %v5892 = vpop.f32.mrb[0].mxu0
    %v5893 = vadd.f32 %v5852, %v5892
    %v5894 = vpop.f32.mrb[0].mxu0
    %v5895 = vadd.f32 %v5854, %v5894
    %v5896 = vpop.f32.mrb[0].mxu0
    %v5897 = vpop.f32.mrb[0].mxu0
    %5898 = vdwg.mxu0
    %5899 = vmatprep.subr.bf16.mxu0 %v3953
    %5900 = vmatpush1.bf16.msra.mxu0 %v3952
    %5901 = vmatprep.subr.bf16.mxu0 %v3957
    %5902 = vmatpush1.bf16.msra.mxu0 %v3956
    %5903 = vmatprep.subr.bf16.mxu0 %v3961
    %5904 = vmatpush1.bf16.msra.mxu0 %v3960
    %5905 = vmatprep.subr.bf16.mxu0 %v3965
    %5906 = vmatpush1.bf16.msra.mxu0 %v3964
    %5907 = vmatprep.subr.bf16.mxu0 %v3969
    %5908 = vmatpush1.bf16.msra.mxu0 %v3968
    %5909 = vmatprep.subr.bf16.mxu0 %v3973
    %5910 = vmatpush1.bf16.msra.mxu0 %v3972
    %5911 = vmatprep.subr.bf16.mxu0 %v3977
    %5912 = vmatpush1.bf16.msra.mxu0 %v3976
    %5913 = vmatprep.subr.bf16.mxu0 %v3981
    %5914 = vmatpush1.bf16.msra.mxu0 %v3980
    %5915 = vmatprep.subr.bf16.mxu0 %v3985
    %5916 = vmatpush1.bf16.msra.mxu0 %v3984
    %5917 = vmatprep.subr.bf16.mxu0 %v3989
    %5918 = vmatpush1.bf16.msra.mxu0 %v3988
    %5919 = vmatprep.subr.bf16.mxu0 %v3993
    %5920 = vmatpush1.bf16.msra.mxu0 %v3992
    %5921 = vmatprep.subr.bf16.mxu0 %v3997
    %5922 = vmatpush1.bf16.msra.mxu0 %v3996
    %5923 = vmatprep.subr.bf16.mxu0 %v4001
    %5924 = vmatpush1.bf16.msra.mxu0 %v4000
    %5925 = vmatprep.subr.bf16.mxu0 %v4005
    %5926 = vmatpush1.bf16.msra.mxu0 %v4004
    %5927 = vmatprep.subr.bf16.mxu0 %v4009
    %5928 = vmatpush1.bf16.msra.mxu0 %v4008
    %5929 = vmatprep.subr.bf16.mxu0 %v4013
    %5930 = vmatpush1.bf16.msra.mxu0 %v4012
    %5931 = vmatprep.mubr.bf16.mxu0 %v987
    %5932 = vmatmul.mubr.bf16.gmra.mrb[0].mxu0 %v973
    %v5933 = vpop.f32.mrb[0].mxu0
    %v5934 = vadd.f32 %v5893, %v5933
    %v5935 = vpop.f32.mrb[0].mxu0
    %v5936 = vadd.f32 %v5895, %v5935
    %v5937 = vpop.f32.mrb[0].mxu0
    %v5938 = vpop.f32.mrb[0].mxu0
    %5939 = vdwg.mxu0
    %5940 = vmatprep.subr.bf16.mxu0 %v4017
    %5941 = vmatpush1.bf16.msra.mxu0 %v4016
    %5942 = vmatprep.subr.bf16.mxu0 %v4021
    %5943 = vmatpush1.bf16.msra.mxu0 %v4020
    %5944 = vmatprep.subr.bf16.mxu0 %v4025
    %5945 = vmatpush1.bf16.msra.mxu0 %v4024
    %5946 = vmatprep.subr.bf16.mxu0 %v4029
    %5947 = vmatpush1.bf16.msra.mxu0 %v4028
    %5948 = vmatprep.subr.bf16.mxu0 %v4033
    %5949 = vmatpush1.bf16.msra.mxu0 %v4032
    %5950 = vmatprep.subr.bf16.mxu0 %v4037
    %5951 = vmatpush1.bf16.msra.mxu0 %v4036
    %5952 = vmatprep.subr.bf16.mxu0 %v4041
    %5953 = vmatpush1.bf16.msra.mxu0 %v4040
    %5954 = vmatprep.subr.bf16.mxu0 %v4045
    %5955 = vmatpush1.bf16.msra.mxu0 %v4044
    %5956 = vmatprep.subr.bf16.mxu0 %v4049
    %5957 = vmatpush1.bf16.msra.mxu0 %v4048
    %5958 = vmatprep.subr.bf16.mxu0 %v4053
    %5959 = vmatpush1.bf16.msra.mxu0 %v4052
    %5960 = vmatprep.subr.bf16.mxu0 %v4057
    %5961 = vmatpush1.bf16.msra.mxu0 %v4056
    %5962 = vmatprep.subr.bf16.mxu0 %v4061
    %5963 = vmatpush1.bf16.msra.mxu0 %v4060
    %5964 = vmatprep.subr.bf16.mxu0 %v4065
    %5965 = vmatpush1.bf16.msra.mxu0 %v4064
    %5966 = vmatprep.subr.bf16.mxu0 %v4069
    %5967 = vmatpush1.bf16.msra.mxu0 %v4068
    %5968 = vmatprep.subr.bf16.mxu0 %v4073
    %5969 = vmatpush1.bf16.msra.mxu0 %v4072
    %5970 = vmatprep.subr.bf16.mxu0 %v4077
    %5971 = vmatpush1.bf16.msra.mxu0 %v4076
    %5972 = vmatprep.mubr.bf16.mxu0 %v997
    %5973 = vmatmul.mubr.bf16.gmra.mrb[0].mxu0 %v995
    %v5974 = vpop.f32.mrb[0].mxu0
    %v5975 = vadd.f32 %v5934, %v5974
    %v5976 = vpop.f32.mrb[0].mxu0
    %v5977 = vadd.f32 %v5936, %v5976
    %v5978 = vpop.f32.mrb[0].mxu0
    %v5979 = vpop.f32.mrb[0].mxu0
    %5980 = vdwg.mxu0
    %5981 = vmatprep.subr.bf16.mxu0 %v4081
    %5982 = vmatpush1.bf16.msra.mxu0 %v4080
    %5983 = vmatprep.subr.bf16.mxu0 %v4085
    %5984 = vmatpush1.bf16.msra.mxu0 %v4084
    %5985 = vmatprep.subr.bf16.mxu0 %v4089
    %5986 = vmatpush1.bf16.msra.mxu0 %v4088
    %5987 = vmatprep.subr.bf16.mxu0 %v4093
    %5988 = vmatpush1.bf16.msra.mxu0 %v4092
    %5989 = vmatprep.subr.bf16.mxu0 %v4097
    %5990 = vmatpush1.bf16.msra.mxu0 %v4096
    %5991 = vmatprep.subr.bf16.mxu0 %v4101
    %5992 = vmatpush1.bf16.msra.mxu0 %v4100
    %5993 = vmatprep.subr.bf16.mxu0 %v4105
    %5994 = vmatpush1.bf16.msra.mxu0 %v4104
    %5995 = vmatprep.subr.bf16.mxu0 %v4109
    %5996 = vmatpush1.bf16.msra.mxu0 %v4108
    %5997 = vmatprep.subr.bf16.mxu0 %v4113
    %5998 = vmatpush1.bf16.msra.mxu0 %v4112
    %5999 = vmatprep.subr.bf16.mxu0 %v4117
    %6000 = vmatpush1.bf16.msra.mxu0 %v4116
    %6001 = vmatprep.subr.bf16.mxu0 %v4121
    %6002 = vmatpush1.bf16.msra.mxu0 %v4120
    %6003 = vmatprep.subr.bf16.mxu0 %v4125
    %6004 = vmatpush1.bf16.msra.mxu0 %v4124
    %6005 = vmatprep.subr.bf16.mxu0 %v4129
    %6006 = vmatpush1.bf16.msra.mxu0 %v4128
    %6007 = vmatprep.subr.bf16.mxu0 %v4133
    %6008 = vmatpush1.bf16.msra.mxu0 %v4132
    %6009 = vmatprep.subr.bf16.mxu0 %v4137
    %6010 = vmatpush1.bf16.msra.mxu0 %v4136
    %6011 = vmatprep.subr.bf16.mxu0 %v4141
    %6012 = vmatpush1.bf16.msra.mxu0 %v4140
    %6013 = vmatprep.mubr.bf16.mxu0 %v994
    %6014 = vmatmul.mubr.bf16.gmra.mrb[0].mxu0 %v980
    %v6015 = vpop.f32.mrb[0].mxu0
    %v6016 = vadd.f32 %v5975, %v6015
    %v6017 = vpop.f32.mrb[0].mxu0
    %v6018 = vadd.f32 %v5977, %v6017
    %v6019 = vpop.f32.mrb[0].mxu0
    %v6020 = vpop.f32.mrb[0].mxu0
    %6021 = vdwg.mxu0
    %6022 = vmatprep.subr.bf16.mxu0 %v4145
    %6023 = vmatpush1.bf16.msra.mxu0 %v4144
    %6024 = vmatprep.subr.bf16.mxu0 %v4149
    %6025 = vmatpush1.bf16.msra.mxu0 %v4148
    %6026 = vmatprep.subr.bf16.mxu0 %v4153
    %6027 = vmatpush1.bf16.msra.mxu0 %v4152
    %6028 = vmatprep.subr.bf16.mxu0 %v4157
    %6029 = vmatpush1.bf16.msra.mxu0 %v4156
    %6030 = vmatprep.subr.bf16.mxu0 %v4161
    %6031 = vmatpush1.bf16.msra.mxu0 %v4160
    %6032 = vmatprep.subr.bf16.mxu0 %v4165
    %6033 = vmatpush1.bf16.msra.mxu0 %v4164
    %6034 = vmatprep.subr.bf16.mxu0 %v4169
    %6035 = vmatpush1.bf16.msra.mxu0 %v4168
    %6036 = vmatprep.subr.bf16.mxu0 %v4173
    %6037 = vmatpush1.bf16.msra.mxu0 %v4172
    %6038 = vmatprep.subr.bf16.mxu0 %v4177
    %6039 = vmatpush1.bf16.msra.mxu0 %v4176
    %6040 = vmatprep.subr.bf16.mxu0 %v4181
    %6041 = vmatpush1.bf16.msra.mxu0 %v4180
    %6042 = vmatprep.subr.bf16.mxu0 %v4185
    %6043 = vmatpush1.bf16.msra.mxu0 %v4184
    %6044 = vmatprep.subr.bf16.mxu0 %v4189
    %6045 = vmatpush1.bf16.msra.mxu0 %v4188
    %6046 = vmatprep.subr.bf16.mxu0 %v4193
    %6047 = vmatpush1.bf16.msra.mxu0 %v4192
    %6048 = vmatprep.subr.bf16.mxu0 %v4197
    %6049 = vmatpush1.bf16.msra.mxu0 %v4196
    %6050 = vmatprep.subr.bf16.mxu0 %v4201
    %6051 = vmatpush1.bf16.msra.mxu0 %v4200
    %6052 = vmatprep.subr.bf16.mxu0 %v4205
    %6053 = vmatpush1.bf16.msra.mxu0 %v4204
    %6054 = vmatprep.mubr.bf16.mxu0 %v998
    %6055 = vmatmul.mubr.bf16.gmra.mrb[0].mxu0 %v996
    %v6056 = vpop.f32.mrb[0].mxu0
    %v6057 = vadd.f32 %v6016, %v6056
    %v6058 = vpop.f32.mrb[0].mxu0
    %v6059 = vadd.f32 %v6018, %v6058
    %v6060 = vpop.f32.mrb[0].mxu0
    %v6061 = vpop.f32.mrb[0].mxu0
    %6062 = vdwg.mxu0
    %6063 = vmatprep.subr.bf16.mxu0 %v4209
    %6064 = vmatpush1.bf16.msra.mxu0 %v4208
    %6065 = vmatprep.subr.bf16.mxu0 %v4213
    %6066 = vmatpush1.bf16.msra.mxu0 %v4212
    %6067 = vmatprep.subr.bf16.mxu0 %v4217
    %6068 = vmatpush1.bf16.msra.mxu0 %v4216
    %6069 = vmatprep.subr.bf16.mxu0 %v4221
    %6070 = vmatpush1.bf16.msra.mxu0 %v4220
    %6071 = vmatprep.subr.bf16.mxu0 %v4225
    %6072 = vmatpush1.bf16.msra.mxu0 %v4224
    %6073 = vmatprep.subr.bf16.mxu0 %v4229
    %6074 = vmatpush1.bf16.msra.mxu0 %v4228
    %6075 = vmatprep.subr.bf16.mxu0 %v4233
    %6076 = vmatpush1.bf16.msra.mxu0 %v4232
    %6077 = vmatprep.subr.bf16.mxu0 %v4237
    %6078 = vmatpush1.bf16.msra.mxu0 %v4236
    %6079 = vmatprep.subr.bf16.mxu0 0
    %6080 = vmatpush1.bf16.msra.mxu0 0
    %6081 = vmatprep.subr.bf16.mxu0 0
    %6082 = vmatpush1.bf16.msra.mxu0 0
    %6083 = vmatprep.subr.bf16.mxu0 0
    %6084 = vmatpush1.bf16.msra.mxu0 0
    %6085 = vmatprep.subr.bf16.mxu0 0
    %6086 = vmatpush1.bf16.msra.mxu0 0
    %6087 = vmatprep.subr.bf16.mxu0 0
    %6088 = vmatpush1.bf16.msra.mxu0 0
    %6089 = vmatprep.subr.bf16.mxu0 0
    %6090 = vmatpush1.bf16.msra.mxu0 0
    %6091 = vmatprep.subr.bf16.mxu0 0
    %6092 = vmatpush1.bf16.msra.mxu0 0
    %6093 = vmatprep.subr.bf16.mxu0 0
    %6094 = vmatpush1.bf16.msra.mxu0 0
    %6095 = vmatprep.mubr.bf16.mxu0 0
    %6096 = vmatmul.mubr.bf16.gmra.mrb[0].mxu0 %v1012
    %v6097 = vpop.f32.mrb[0].mxu0
    %v6098 = vadd.f32 %v6057, %v6097
    %v6099 = vpop.f32.mrb[0].mxu0
    %v6100 = vadd.f32 %v6059, %v6099
    %v6101 = vpop.f32.mrb[0].mxu0
    %v6102 = vpop.f32.mrb[0].mxu0
    %6103 = vdwg.mxu0
    %v6104 = vmax.f32 %v5565, 0.0
    %v6105 = vmax.f32 %v5567, 0.0
    %v6106 = vmax.f32 %v6098, 0.0
    %v6107 = vmax.f32 %v6100, 0.0
    %v6108 = vpack.c.bf16 %v6104, %v6104
    %v6109 = vpack.c.bf16 %v6105, %v6105
    %v6110 = vpack.c.bf16 %v6106, %v6106
    %v6111 = vpack.c.bf16 %v6107, %v6107
    %v6112 = vld [vmem:[%s3] sm:$0xf]
    %v6113 = vld [vmem:[%s3 + $0x4] sm:$0xf]
    %v6114 = vld [vmem:[%s3 + $0x8] sm:$0xf]
    %v6115 = vld [vmem:[%s3 + $0xc] sm:$0xf]
    %v6116 = vld [vmem:[%s3 + $0x10] sm:$0xf]
    %v6117 = vld [vmem:[%s3 + $0x14] sm:$0xf]
    %v6118 = vld [vmem:[%s3 + $0x18] sm:$0xf]
    %v6119 = vld [vmem:[%s3 + $0x1c] sm:$0xf]
    %v6120 = vld [vmem:[%s3 + $0x20] sm:$0xf]
    %v6121 = vld [vmem:[%s3 + $0x24] sm:$0xf]
    %v6122 = vld [vmem:[%s3 + $0x28] sm:$0xf]
    %v6123 = vld [vmem:[%s3 + $0x2c] sm:$0xf]
    %v6124 = vld [vmem:[%s3 + $0x30] sm:$0xf]
    %v6125 = vld [vmem:[%s3 + $0x34] sm:$0xf]
    %v6126 = vld [vmem:[%s3 + $0x38] sm:$0xf]
    %v6127 = vld [vmem:[%s3 + $0x3c] sm:$0xf]
    %v6128 = vld [vmem:[%s3 + $0x40] sm:$0xf]
    %v6129 = vld [vmem:[%s3 + $0x44] sm:$0xf]
    %v6130 = vld [vmem:[%s3 + $0x48] sm:$0xf]
    %v6131 = vld [vmem:[%s3 + $0x4c] sm:$0xf]
    %v6132 = vld [vmem:[%s3 + $0x50] sm:$0xf]
    %v6133 = vld [vmem:[%s3 + $0x54] sm:$0xf]
    %v6134 = vld [vmem:[%s3 + $0x58] sm:$0xf]
    %v6135 = vld [vmem:[%s3 + $0x5c] sm:$0xf]
    %v6136 = vld [vmem:[%s3 + $0x60] sm:$0xf]
    %v6137 = vld [vmem:[%s3 + $0x64] sm:$0xf]
    %v6138 = vld [vmem:[%s3 + $0x68] sm:$0xf]
    %v6139 = vld [vmem:[%s3 + $0x6c] sm:$0xf]
    %v6140 = vld [vmem:[%s3 + $0x70] sm:$0xf]
    %v6141 = vld [vmem:[%s3 + $0x74] sm:$0xf]
    %v6142 = vld [vmem:[%s3 + $0x78] sm:$0xf]
    %v6143 = vld [vmem:[%s3 + $0x7c] sm:$0xf]
    %v6144 = vld [vmem:[%s3 + $0x80] sm:$0xf]
    %v6145 = vld [vmem:[%s3 + $0x84] sm:$0xf]
    %v6146 = vld [vmem:[%s3 + $0x88] sm:$0xf]
    %v6147 = vld [vmem:[%s3 + $0x8c] sm:$0xf]
    %v6148 = vld [vmem:[%s3 + $0x90] sm:$0xf]
    %v6149 = vld [vmem:[%s3 + $0x94] sm:$0xf]
    %v6150 = vld [vmem:[%s3 + $0x98] sm:$0xf]
    %v6151 = vld [vmem:[%s3 + $0x9c] sm:$0xf]
    %v6152 = vld [vmem:[%s3 + $0xa0] sm:$0xf]
    %v6153 = vld [vmem:[%s3 + $0xa4] sm:$0xf]
    %v6154 = vld [vmem:[%s3 + $0xa8] sm:$0xf]
    %v6155 = vld [vmem:[%s3 + $0xac] sm:$0xf]
    %v6156 = vld [vmem:[%s3 + $0xb0] sm:$0xf]
    %v6157 = vld [vmem:[%s3 + $0xb4] sm:$0xf]
    %v6158 = vld [vmem:[%s3 + $0xb8] sm:$0xf]
    %v6159 = vld [vmem:[%s3 + $0xbc] sm:$0xf]
    %v6160 = vld [vmem:[%s3 + $0xc0] sm:$0xf]
    %v6161 = vld [vmem:[%s3 + $0xc4] sm:$0xf]
    %v6162 = vld [vmem:[%s3 + $0xc8] sm:$0xf]
    %v6163 = vld [vmem:[%s3 + $0xcc] sm:$0xf]
    %v6164 = vld [vmem:[%s3 + $0xd0] sm:$0xf]
    %v6165 = vld [vmem:[%s3 + $0xd4] sm:$0xf]
    %v6166 = vld [vmem:[%s3 + $0xd8] sm:$0xf]
    %v6167 = vld [vmem:[%s3 + $0xdc] sm:$0xf]
    %v6168 = vld [vmem:[%s3 + $0xe0] sm:$0xf]
    %v6169 = vld [vmem:[%s3 + $0xe4] sm:$0xf]
    %v6170 = vld [vmem:[%s3 + $0xe8] sm:$0xf]
    %v6171 = vld [vmem:[%s3 + $0xec] sm:$0xf]
    %v6172 = vld [vmem:[%s3 + $0xf0] sm:$0xf]
    %v6173 = vld [vmem:[%s3 + $0xf4] sm:$0xf]
    %v6174 = vld [vmem:[%s3 + $0xf8] sm:$0xf]
    %v6175 = vld [vmem:[%s3 + $0xfc] sm:$0xf]
    %v6176 = vld [vmem:[%s4] sm:$0x1]
    %v6178 = vlaneseq
    %v6179 = vshrl.u32 %v6178, 7
    %v6180 = vsub.s32 0, %v6179
    %v6181 = vrot.slane %v6176, %v6180
    %v6247 = vunpack.c.l.b16 %v6112
    %v6248 = vunpack.c.l.b16 %v6113
    %v6249 = vunpack.c.l.b16 %v6114
    %v6250 = vunpack.c.l.b16 %v6115
    %v6251 = vunpack.c.l.b16 %v6116
    %v6252 = vunpack.c.l.b16 %v6117
    %v6253 = vunpack.c.l.b16 %v6118
    %v6254 = vunpack.c.l.b16 %v6119
    %v6255 = vunpack.c.l.b16 %v6120
    %v6256 = vunpack.c.l.b16 %v6121
    %v6257 = vunpack.c.l.b16 %v6122
    %v6258 = vunpack.c.l.b16 %v6123
    %v6259 = vunpack.c.l.b16 %v6124
    %v6260 = vunpack.c.l.b16 %v6125
    %v6261 = vunpack.c.l.b16 %v6126
    %v6262 = vunpack.c.l.b16 %v6127
    %v6263 = vunpack.c.l.b16 %v6128
    %v6264 = vunpack.c.l.b16 %v6129
    %v6265 = vunpack.c.l.b16 %v6130
    %v6266 = vunpack.c.l.b16 %v6131
    %v6267 = vunpack.c.l.b16 %v6132
    %v6268 = vunpack.c.l.b16 %v6133
    %v6269 = vunpack.c.l.b16 %v6134
    %v6270 = vunpack.c.l.b16 %v6135
    %v6271 = vunpack.c.l.b16 %v6136
    %v6272 = vunpack.c.l.b16 %v6137
    %v6273 = vunpack.c.l.b16 %v6138
    %v6274 = vunpack.c.l.b16 %v6139
    %v6275 = vunpack.c.l.b16 %v6140
    %v6276 = vunpack.c.l.b16 %v6141
    %v6277 = vunpack.c.l.b16 %v6142
    %v6278 = vunpack.c.l.b16 %v6143
    %v6279 = vunpack.c.l.b16 %v6144
    %v6280 = vunpack.c.l.b16 %v6145
    %v6281 = vunpack.c.l.b16 %v6146
    %v6282 = vunpack.c.l.b16 %v6147
    %v6283 = vunpack.c.l.b16 %v6148
    %v6284 = vunpack.c.l.b16 %v6149
    %v6285 = vunpack.c.l.b16 %v6150
    %v6286 = vunpack.c.l.b16 %v6151
    %v6287 = vunpack.c.l.b16 %v6152
    %v6288 = vunpack.c.l.b16 %v6153
    %v6289 = vunpack.c.l.b16 %v6154
    %v6290 = vunpack.c.l.b16 %v6155
    %v6291 = vunpack.c.l.b16 %v6156
    %v6292 = vunpack.c.l.b16 %v6157
    %v6293 = vunpack.c.l.b16 %v6158
    %v6294 = vunpack.c.l.b16 %v6159
    %v6295 = vunpack.c.l.b16 %v6160
    %v6296 = vunpack.c.l.b16 %v6161
    %v6297 = vunpack.c.l.b16 %v6162
    %v6298 = vunpack.c.l.b16 %v6163
    %v6299 = vunpack.c.l.b16 %v6164
    %v6300 = vunpack.c.l.b16 %v6165
    %v6301 = vunpack.c.l.b16 %v6166
    %v6302 = vunpack.c.l.b16 %v6167
    %v6303 = vunpack.c.l.b16 %v6168
    %v6304 = vunpack.c.l.b16 %v6169
    %v6305 = vunpack.c.l.b16 %v6170
    %v6306 = vunpack.c.l.b16 %v6171
    %v6307 = vunpack.c.l.b16 %v6172
    %v6308 = vunpack.c.l.b16 %v6173
    %v6309 = vunpack.c.l.b16 %v6174
    %v6310 = vunpack.c.l.b16 %v6175
    %v6311 = vpack.c.b16 %v6248, %v6247
    %v6312 = vpack.c.b16 %v6250, %v6249
    %v6313 = vpack.c.b16 %v6252, %v6251
    %v6314 = vpack.c.b16 %v6254, %v6253
    %v6315 = vpack.c.b16 %v6256, %v6255
    %v6316 = vpack.c.b16 %v6258, %v6257
    %v6317 = vpack.c.b16 %v6260, %v6259
    %v6318 = vpack.c.b16 %v6262, %v6261
    %v6319 = vpack.c.b16 %v6264, %v6263
    %v6320 = vpack.c.b16 %v6266, %v6265
    %v6321 = vpack.c.b16 %v6268, %v6267
    %v6322 = vpack.c.b16 %v6270, %v6269
    %v6323 = vpack.c.b16 %v6272, %v6271
    %v6324 = vpack.c.b16 %v6274, %v6273
    %v6325 = vpack.c.b16 %v6276, %v6275
    %v6326 = vpack.c.b16 %v6278, %v6277
    %v6327 = vpack.c.b16 %v6280, %v6279
    %v6328 = vpack.c.b16 %v6282, %v6281
    %v6329 = vpack.c.b16 %v6284, %v6283
    %v6330 = vpack.c.b16 %v6286, %v6285
    %v6331 = vpack.c.b16 %v6288, %v6287
    %v6332 = vpack.c.b16 %v6290, %v6289
    %v6333 = vpack.c.b16 %v6292, %v6291
    %v6334 = vpack.c.b16 %v6294, %v6293
    %v6335 = vpack.c.b16 %v6296, %v6295
    %v6336 = vpack.c.b16 %v6298, %v6297
    %v6337 = vpack.c.b16 %v6300, %v6299
    %v6338 = vpack.c.b16 %v6302, %v6301
    %v6339 = vpack.c.b16 %v6304, %v6303
    %v6340 = vpack.c.b16 %v6306, %v6305
    %v6341 = vpack.c.b16 %v6308, %v6307
    %v6342 = vpack.c.b16 %v6310, %v6309
    %6375 = vmatprep.subr.bf16.mxu0 0
    %6376 = vmatpush1.bf16.msra.mxu0 %v6311
    %6377 = vmatprep.subr.bf16.mxu0 0
    %6378 = vmatpush1.bf16.msra.mxu0 %v6312
    %6379 = vmatprep.subr.bf16.mxu0 0
    %6380 = vmatpush1.bf16.msra.mxu0 %v6313
    %6381 = vmatprep.subr.bf16.mxu0 0
    %6382 = vmatpush1.bf16.msra.mxu0 %v6314
    %6383 = vmatprep.subr.bf16.mxu0 0
    %6384 = vmatpush1.bf16.msra.mxu0 %v6315
    %6385 = vmatprep.subr.bf16.mxu0 0
    %6386 = vmatpush1.bf16.msra.mxu0 %v6316
    %6387 = vmatprep.subr.bf16.mxu0 0
    %6388 = vmatpush1.bf16.msra.mxu0 %v6317
    %6389 = vmatprep.subr.bf16.mxu0 0
    %6390 = vmatpush1.bf16.msra.mxu0 %v6318
    %6391 = vmatprep.subr.bf16.mxu0 0
    %6392 = vmatpush1.bf16.msra.mxu0 %v6319
    %6393 = vmatprep.subr.bf16.mxu0 0
    %6394 = vmatpush1.bf16.msra.mxu0 %v6320
    %6395 = vmatprep.subr.bf16.mxu0 0
    %6396 = vmatpush1.bf16.msra.mxu0 %v6321
    %6397 = vmatprep.subr.bf16.mxu0 0
    %6398 = vmatpush1.bf16.msra.mxu0 %v6322
    %6399 = vmatprep.subr.bf16.mxu0 0
    %6400 = vmatpush1.bf16.msra.mxu0 %v6323
    %6401 = vmatprep.subr.bf16.mxu0 0
    %6402 = vmatpush1.bf16.msra.mxu0 %v6324
    %6403 = vmatprep.subr.bf16.mxu0 0
    %6404 = vmatpush1.bf16.msra.mxu0 %v6325
    %6405 = vmatprep.subr.bf16.mxu0 0
    %6406 = vmatpush1.bf16.msra.mxu0 %v6326
    %6407 = vmatprep.mubr.bf16.mxu0 %v6109
    %6408 = vmatmul.mubr.bf16.gmra.mrb[0].mxu0 %v6108
    %v6409 = vpop.f32.mrb[0].mxu0
    %v6410 = vadd.f32 %v6181, %v6409
    %v6411 = vpop.f32.mrb[0].mxu0
    %v6412 = vpop.f32.mrb[0].mxu0
    %v6413 = vpop.f32.mrb[0].mxu0
    %6414 = vdwg.mxu0
    %6415 = vmatprep.subr.bf16.mxu0 0
    %6416 = vmatpush1.bf16.msra.mxu0 %v6327
    %6417 = vmatprep.subr.bf16.mxu0 0
    %6418 = vmatpush1.bf16.msra.mxu0 %v6328
    %6419 = vmatprep.subr.bf16.mxu0 0
    %6420 = vmatpush1.bf16.msra.mxu0 %v6329
    %6421 = vmatprep.subr.bf16.mxu0 0
    %6422 = vmatpush1.bf16.msra.mxu0 %v6330
    %6423 = vmatprep.subr.bf16.mxu0 0
    %6424 = vmatpush1.bf16.msra.mxu0 %v6331
    %6425 = vmatprep.subr.bf16.mxu0 0
    %6426 = vmatpush1.bf16.msra.mxu0 %v6332
    %6427 = vmatprep.subr.bf16.mxu0 0
    %6428 = vmatpush1.bf16.msra.mxu0 %v6333
    %6429 = vmatprep.subr.bf16.mxu0 0
    %6430 = vmatpush1.bf16.msra.mxu0 %v6334
    %6431 = vmatprep.subr.bf16.mxu0 0
    %6432 = vmatpush1.bf16.msra.mxu0 %v6335
    %6433 = vmatprep.subr.bf16.mxu0 0
    %6434 = vmatpush1.bf16.msra.mxu0 %v6336
    %6435 = vmatprep.subr.bf16.mxu0 0
    %6436 = vmatpush1.bf16.msra.mxu0 %v6337
    %6437 = vmatprep.subr.bf16.mxu0 0
    %6438 = vmatpush1.bf16.msra.mxu0 %v6338
    %6439 = vmatprep.subr.bf16.mxu0 0
    %6440 = vmatpush1.bf16.msra.mxu0 %v6339
    %6441 = vmatprep.subr.bf16.mxu0 0
    %6442 = vmatpush1.bf16.msra.mxu0 %v6340
    %6443 = vmatprep.subr.bf16.mxu0 0
    %6444 = vmatpush1.bf16.msra.mxu0 %v6341
    %6445 = vmatprep.subr.bf16.mxu0 0
    %6446 = vmatpush1.bf16.msra.mxu0 %v6342
    %6447 = vmatprep.mubr.bf16.mxu0 %v6111
    %6448 = vmatmul.mubr.bf16.gmra.mrb[0].mxu0 %v6110
    %v6449 = vpop.f32.mrb[0].mxu0
    %v6450 = vadd.f32 %v6410, %v6449
    %v6451 = vpop.f32.mrb[0].mxu0
    %v6452 = vpop.f32.mrb[0].mxu0
    %v6453 = vpop.f32.mrb[0].mxu0
    %6454 = vdwg.mxu0
    %6455 = vst [vmem:[#allocation2] sm:$0x3] %v6450
    // Predicated region
    $region22: #{net_forward.5} parent=1 // pred_check
      _
    $region23: #{net_forward.5} parent=1 // pred_check_branch
      %6457 = sbr.rel (0) target = $region25
    $region24: #{net_forward.5} parent=1 // pred_region
      %s6459 = ssub.s32 32, 32
      %6460 = vsyncadd [#allocation3], %s6459
      %s6462 = sshll.u32 [#allocation2], 4
      %s6463 = int_to_ptr.vmem [resolvable:$true] %s6462
      %6465 = dma.vmem_to_hbm [thread:$0]  %s6463, 32, %s5, [#allocation3]
    $region25: #{net_forward.5} parent=1 // pred_fallthru
      _
    // Predicated region
    $region26: #{net_forward.5} parent=1 // pred_check
      _
    $region27: #{net_forward.5} parent=1 // pred_check_branch
      %6467 = sbr.rel (0) target = $region29
    $region28: #{net_forward.5} parent=1 // pred_region
      %6468 = dma.done [#allocation3], 32
    $region29: #{net_forward.5} parent=1 // pred_fallthru
      _
    %6469 = vsyncpa [#allocation3], 1

</llo_original>
